<compile_context>
chip_gen: v7x
topology: tpu7x:2x2x1
jax: 0.10.0
libtpu: 0.0.40
codegen_flags: <defaults>
</compile_context>

<pallas_src>
import math

import jax
import jax.numpy as jnp
from jax.experimental import pallas as pl
from jax.experimental.pallas import tpu as pltpu

# ----- small synthetic BERT config (lane-dense hidden size) -----
B, S, H = 2, 8, 128         # batch, seq, hidden (H multiple of 128 -> lane dense)
NUM_HEADS = 4
HEAD_DIM = H // NUM_HEADS
INTERMEDIATE = 256
NUM_LAYERS = 2
VOCAB = 100
MAX_POS = 16
TYPE_VOCAB = 2
LN_EPS = 1e-12


def _gelu(x):
    # TODO(synk): HF BERT uses exact erf-based GELU; tanh approximation used here.
    c = math.sqrt(2.0 / math.pi)
    return 0.5 * x * (1.0 + jnp.tanh(c * (x + 0.044715 * x * x * x)))


def _layer_norm(x, g, b):
    # single-pass LN: var = E[x^2] - E[x]^2 (one fewer dependent XLU reduction)
    mu = jnp.mean(x, axis=-1, keepdims=True)
    ms = jnp.mean(x * x, axis=-1, keepdims=True)
    var = ms - mu * mu
    return (x - mu) * jax.lax.rsqrt(var + LN_EPS) * g + b


# ---------------- fused Pallas kernel ----------------

def _bert_fused_kernel(mask_ref, we_ref, pe_ref, te_ref, eg_ref, eb_ref,
                       wq_ref, bq_ref, wk_ref, bk_ref, wv_ref, bv_ref,
                       wo_ref, bo_ref, ln1g_ref, ln1b_ref,
                       w1_ref, b1_ref, w2_ref, b2_ref, ln2g_ref, ln2b_ref,
                       o_ref):
    """Whole BERT forward (emb LN + all encoder layers + CLS slice) for one
    batch element.  grid=(B,), 'parallel' -> sharded across TCs on v7x."""
    scale = 1.0 / math.sqrt(HEAD_DIM)

    # embeddings + embedding LayerNorm
    x = we_ref[0] + pe_ref[...] + te_ref[...]                   # (S, H) f32
    x = _layer_norm(x, eg_ref[...], eb_ref[...])

    # additive attention mask, hoisted once (reused by every layer & head)
    bias = (1.0 - mask_ref[0]) * -1e9                           # (1, S) key axis

    for li in range(NUM_LAYERS):                                # static, fully fused
        wq = wq_ref[li]; wk = wk_ref[li]; wv = wv_ref[li]; wo = wo_ref[li]
        bq = bq_ref[li]; bk = bk_ref[li]; bv = bv_ref[li]; bo = bo_ref[li]

        xb = x.astype(jnp.bfloat16)
        q = jnp.dot(xb, wq, preferred_element_type=jnp.float32) + bq   # (S, H)
        k = jnp.dot(xb, wk, preferred_element_type=jnp.float32) + bk
        v = jnp.dot(xb, wv, preferred_element_type=jnp.float32) + bv
        q = q * scale

        ctx_parts = []
        for h in range(NUM_HEADS):                              # static head loop
            sl = slice(h * HEAD_DIM, (h + 1) * HEAD_DIM)
            qh = q[:, sl].astype(jnp.bfloat16)
            kh = k[:, sl].astype(jnp.bfloat16)
            vh = v[:, sl].astype(jnp.bfloat16)
            # contract on the last axes of both operands (no explicit kh.T)
            scores = jax.lax.dot_general(
                qh, kh, (((1,), (1,)), ((), ())),
                preferred_element_type=jnp.float32)             # (S, S)
            scores = scores + bias
            scores = scores - jnp.max(scores, axis=-1, keepdims=True)
            p = jnp.exp(scores)
            p = p * pl.reciprocal(jnp.sum(p, axis=-1, keepdims=True), approx=True)
            ctx_parts.append(jnp.dot(p.astype(jnp.bfloat16), vh,
                                     preferred_element_type=jnp.float32))  # (S, HD)

        # one dense HxH output projection instead of per-head accumulation
        ctx = jnp.concatenate(ctx_parts, axis=-1)               # (S, H)
        attn = jnp.dot(ctx.astype(jnp.bfloat16), wo,
                       preferred_element_type=jnp.float32) + bo
        x = _layer_norm(x + attn, ln1g_ref[li], ln1b_ref[li])

        hmid = _gelu(jnp.dot(x.astype(jnp.bfloat16), w1_ref[li],
                             preferred_element_type=jnp.float32) + b1_ref[li])
        ff = jnp.dot(hmid.astype(jnp.bfloat16), w2_ref[li],
                     preferred_element_type=jnp.float32) + b2_ref[li]
        x = _layer_norm(x + ff, ln2g_ref[li], ln2b_ref[li])

    o_ref[0] = x[0:1, :]                      # CLS row == last_hidden_state[:, 0, :]


# ---------------- parameter init (deterministic, synthetic) ----------------

def init_params(key):
    def nrm(k, shape):
        return (0.02 * jax.random.normal(k, shape)).astype(jnp.float32)

    keys = jax.random.split(key, 3 + NUM_LAYERS)
    params = {
        "word_emb": nrm(keys[0], (VOCAB, H)),
        "pos_emb": nrm(keys[1], (MAX_POS, H)),
        "type_emb": nrm(keys[2], (TYPE_VOCAB, H)),
        "emb_ln_g": jnp.ones((1, H), jnp.float32),
        "emb_ln_b": jnp.zeros((1, H), jnp.float32),
    }

    def one_layer(k):
        lk = jax.random.split(k, 6)
        return {
            "wq": nrm(lk[0], (H, H)), "bq": jnp.zeros((1, H), jnp.float32),
            "wk": nrm(lk[1], (H, H)), "bk": jnp.zeros((1, H), jnp.float32),
            "wv": nrm(lk[2], (H, H)), "bv": jnp.zeros((1, H), jnp.float32),
            "wo": nrm(lk[3], (H, H)), "bo": jnp.zeros((1, H), jnp.float32),
            "ln1g": jnp.ones((1, H), jnp.float32), "ln1b": jnp.zeros((1, H), jnp.float32),
            "w1": nrm(lk[4], (H, INTERMEDIATE)),
            "b1": jnp.zeros((1, INTERMEDIATE), jnp.float32),
            "w2": nrm(lk[5], (INTERMEDIATE, H)),
            "b2": jnp.zeros((1, H), jnp.float32),
            "ln2g": jnp.ones((1, H), jnp.float32), "ln2b": jnp.zeros((1, H), jnp.float32),
        }

    layers = [one_layer(keys[3 + i]) for i in range(NUM_LAYERS)]
    # Stack per-layer params along a leading layer axis so the whole encoder is
    # one fused pallas_call; matmul weights pre-cast to bf16 (biases/LN stay f32).
    stacked = {}
    for name in layers[0]:
        arr = jnp.stack([lp[name] for lp in layers], axis=0)
        if name in ("wq", "wk", "wv", "wo", "w1", "w2"):
            arr = arr.astype(jnp.bfloat16)
        stacked[name] = arr
    params["layers"] = stacked
    return params


# ---------------- model forward (== BioClinicalBERT_FT.forward) ----------------

def bioclinical_bert_ft_forward(params, input_ids, attention_mask):
    Bsz, Ssz = input_ids.shape
    lp = params["layers"]

    # embedding gather is plain-JAX glue; everything else runs in the kernel
    we = jnp.take(params["word_emb"], input_ids, axis=0)        # (B, S, H)
    pe = params["pos_emb"][:Ssz]                                # (S, H)
    te = params["type_emb"][0:1]                                # (1, H) token_type==0
    mask3 = attention_mask.astype(jnp.float32).reshape(Bsz, 1, Ssz)

    L, I = NUM_LAYERS, INTERMEDIATE

    def full(shape):
        return pl.BlockSpec(shape, lambda b: (0,) * len(shape))

    in_specs = [
        pl.BlockSpec((1, 1, Ssz), lambda b: (b, 0, 0)),   # attention mask
        pl.BlockSpec((1, Ssz, H), lambda b: (b, 0, 0)),   # word embeddings
        full((Ssz, H)), full((1, H)),                     # pos / type embeddings
        full((1, H)), full((1, H)),                       # emb LN gamma / beta
        full((L, H, H)), full((L, 1, H)),                 # wq, bq
        full((L, H, H)), full((L, 1, H)),                 # wk, bk
        full((L, H, H)), full((L, 1, H)),                 # wv, bv
        full((L, H, H)), full((L, 1, H)),                 # wo, bo
        full((L, 1, H)), full((L, 1, H)),                 # ln1 gamma / beta
        full((L, H, I)), full((L, 1, I)),                 # w1, b1
        full((L, I, H)), full((L, 1, H)),                 # w2, b2
        full((L, 1, H)), full((L, 1, H)),                 # ln2 gamma / beta
    ]

    out = pl.pallas_call(
        _bert_fused_kernel,
        out_shape=jax.ShapeDtypeStruct((Bsz, 1, H), jnp.float32),
        grid=(Bsz,),
        in_specs=in_specs,
        out_specs=pl.BlockSpec((1, 1, H), lambda b: (b, 0, 0)),
        compiler_params=pltpu.CompilerParams(dimension_semantics=("parallel",)),
    )(mask3, we, pe, te, params["emb_ln_g"], params["emb_ln_b"],
      lp["wq"], lp["bq"], lp["wk"], lp["bk"], lp["wv"], lp["bv"],
      lp["wo"], lp["bo"], lp["ln1g"], lp["ln1b"],
      lp["w1"], lp["b1"], lp["w2"], lp["b2"], lp["ln2g"], lp["ln2b"])

    return out[:, 0, :]                                         # (B, H) CLS embedding


if __name__ == "__main__":
    key = jax.random.PRNGKey(0)
    k_ids, k_params = jax.random.split(key)

    input_ids = jax.random.randint(k_ids, (B, S), 0, VOCAB, dtype=jnp.int32)
    input_ids = input_ids.at[:, 0].set(1)                       # CLS-like token at pos 0
    attention_mask = jnp.ones((B, S), jnp.int32)
    attention_mask = attention_mask.at[1, S - 3:].set(0)        # pad tail of 2nd example

    params = init_params(k_params)

    fwd = jax.jit(bioclinical_bert_ft_forward)
    cls = fwd(params, input_ids, attention_mask)
    cls = jax.block_until_ready(cls)

    assert cls.shape == (B, H) and cls.dtype == jnp.float32
    assert bool(jnp.all(jnp.isfinite(cls)))
    print("KERNEL_OK")
</pallas_src>

<mosaic_0001>
module attributes {stable_mosaic.version = 11 : i64} {
  func.func @_bert_fused_kernel(%arg0: i32, %arg1: memref<1x1x8xf32, #tpu.memory_space<vmem>>, %arg2: memref<1x8x128xf32, #tpu.memory_space<vmem>>, %arg3: memref<8x128xf32, #tpu.memory_space<vmem>>, %arg4: memref<1x128xf32, #tpu.memory_space<vmem>>, %arg5: memref<1x128xf32, #tpu.memory_space<vmem>>, %arg6: memref<1x128xf32, #tpu.memory_space<vmem>>, %arg7: memref<2x128x128xbf16, #tpu.memory_space<vmem>>, %arg8: memref<2x1x128xf32, #tpu.memory_space<vmem>>, %arg9: memref<2x128x128xbf16, #tpu.memory_space<vmem>>, %arg10: memref<2x1x128xf32, #tpu.memory_space<vmem>>, %arg11: memref<2x128x128xbf16, #tpu.memory_space<vmem>>, %arg12: memref<2x1x128xf32, #tpu.memory_space<vmem>>, %arg13: memref<2x128x128xbf16, #tpu.memory_space<vmem>>, %arg14: memref<2x1x128xf32, #tpu.memory_space<vmem>>, %arg15: memref<2x1x128xf32, #tpu.memory_space<vmem>>, %arg16: memref<2x1x128xf32, #tpu.memory_space<vmem>>, %arg17: memref<2x128x256xbf16, #tpu.memory_space<vmem>>, %arg18: memref<2x1x256xf32, #tpu.memory_space<vmem>>, %arg19: memref<2x256x128xbf16, #tpu.memory_space<vmem>>, %arg20: memref<2x1x128xf32, #tpu.memory_space<vmem>>, %arg21: memref<2x1x128xf32, #tpu.memory_space<vmem>>, %arg22: memref<2x1x128xf32, #tpu.memory_space<vmem>>, %arg23: memref<1x1x128xf32, #tpu.memory_space<vmem>>) attributes {dimension_semantics = [#tpu.dimension_semantics<parallel>], iteration_bounds = array<i64: 2>, scalar_prefetch = 0 : i64, scratch_operands = 0 : i64, tpu.core_type = #tpu.core_type<tc>, window_params = [{transform_indices = @transform_0, window_bounds = array<i64: 1, 1, 8>}, {transform_indices = @transform_1, window_bounds = array<i64: 1, 8, 128>}, {pipeline_mode = #tpu.pipeline_mode<synchronous>, transform_indices = @transform_2, window_bounds = array<i64: 8, 128>}, {pipeline_mode = #tpu.pipeline_mode<synchronous>, transform_indices = @transform_3, window_bounds = array<i64: 1, 128>}, {pipeline_mode = #tpu.pipeline_mode<synchronous>, transform_indices = @transform_4, window_bounds = array<i64: 1, 128>}, {pipeline_mode = #tpu.pipeline_mode<synchronous>, transform_indices = @transform_5, window_bounds = array<i64: 1, 128>}, {pipeline_mode = #tpu.pipeline_mode<synchronous>, transform_indices = @transform_6, window_bounds = array<i64: 2, 128, 128>}, {pipeline_mode = #tpu.pipeline_mode<synchronous>, transform_indices = @transform_7, window_bounds = array<i64: 2, 1, 128>}, {pipeline_mode = #tpu.pipeline_mode<synchronous>, transform_indices = @transform_8, window_bounds = array<i64: 2, 128, 128>}, {pipeline_mode = #tpu.pipeline_mode<synchronous>, transform_indices = @transform_9, window_bounds = array<i64: 2, 1, 128>}, {pipeline_mode = #tpu.pipeline_mode<synchronous>, transform_indices = @transform_10, window_bounds = array<i64: 2, 128, 128>}, {pipeline_mode = #tpu.pipeline_mode<synchronous>, transform_indices = @transform_11, window_bounds = array<i64: 2, 1, 128>}, {pipeline_mode = #tpu.pipeline_mode<synchronous>, transform_indices = @transform_12, window_bounds = array<i64: 2, 128, 128>}, {pipeline_mode = #tpu.pipeline_mode<synchronous>, transform_indices = @transform_13, window_bounds = array<i64: 2, 1, 128>}, {pipeline_mode = #tpu.pipeline_mode<synchronous>, transform_indices = @transform_14, window_bounds = array<i64: 2, 1, 128>}, {pipeline_mode = #tpu.pipeline_mode<synchronous>, transform_indices = @transform_15, window_bounds = array<i64: 2, 1, 128>}, {pipeline_mode = #tpu.pipeline_mode<synchronous>, transform_indices = @transform_16, window_bounds = array<i64: 2, 128, 256>}, {pipeline_mode = #tpu.pipeline_mode<synchronous>, transform_indices = @transform_17, window_bounds = array<i64: 2, 1, 256>}, {pipeline_mode = #tpu.pipeline_mode<synchronous>, transform_indices = @transform_18, window_bounds = array<i64: 2, 256, 128>}, {pipeline_mode = #tpu.pipeline_mode<synchronous>, transform_indices = @transform_19, window_bounds = array<i64: 2, 1, 128>}, {pipeline_mode = #tpu.pipeline_mode<synchronous>, transform_indices = @transform_20, window_bounds = array<i64: 2, 1, 128>}, {pipeline_mode = #tpu.pipeline_mode<synchronous>, transform_indices = @transform_21, window_bounds = array<i64: 2, 1, 128>}, {transform_indices = @transform_22, window_bounds = array<i64: 1, 1, 128>}]} {
    %c0 = arith.constant 0 : index
    %c0_0 = arith.constant 0 : index
    %c0_1 = arith.constant 0 : index
    %0 = vector.load %arg2[%c0, %c0_0, %c0_1] : memref<1x8x128xf32, #tpu.memory_space<vmem>>, vector<1x8x128xf32>
    %1 = vector.shape_cast %0 : vector<1x8x128xf32> to vector<8x128xf32>
    %c0_2 = arith.constant 0 : index
    %c0_3 = arith.constant 0 : index
    %2 = vector.load %arg3[%c0_2, %c0_3] : memref<8x128xf32, #tpu.memory_space<vmem>>, vector<8x128xf32>
    %3 = arith.addf %1, %2 : vector<8x128xf32>
    %c0_4 = arith.constant 0 : index
    %c0_5 = arith.constant 0 : index
    %4 = vector.load %arg4[%c0_4, %c0_5] : memref<1x128xf32, #tpu.memory_space<vmem>>, vector<1x128xf32>
    %5 = vector.broadcast %4 : vector<1x128xf32> to vector<8x128xf32>
    %6 = arith.addf %3, %5 : vector<8x128xf32>
    %c0_6 = arith.constant 0 : index
    %c0_7 = arith.constant 0 : index
    %7 = vector.load %arg5[%c0_6, %c0_7] : memref<1x128xf32, #tpu.memory_space<vmem>>, vector<1x128xf32>
    %c0_8 = arith.constant 0 : index
    %c0_9 = arith.constant 0 : index
    %8 = vector.load %arg6[%c0_8, %c0_9] : memref<1x128xf32, #tpu.memory_space<vmem>>, vector<1x128xf32>
    %cst = arith.constant dense<0.000000e+00> : vector<8xf32>
    %9 = vector.multi_reduction <add>, %6, %cst [1] : vector<8x128xf32> to vector<8xf32>
    %10 = vector.shape_cast %9 : vector<8xf32> to vector<8x1xf32>
    %cst_10 = arith.constant 1.280000e+02 : f32
    %11 = vector.broadcast %cst_10 : f32 to vector<8x1xf32>
    %12 = arith.divf %10, %11 : vector<8x1xf32>
    %13 = arith.mulf %6, %6 : vector<8x128xf32>
    %cst_11 = arith.constant dense<0.000000e+00> : vector<8xf32>
    %14 = vector.multi_reduction <add>, %13, %cst_11 [1] : vector<8x128xf32> to vector<8xf32>
    %15 = vector.shape_cast %14 : vector<8xf32> to vector<8x1xf32>
    %cst_12 = arith.constant 1.280000e+02 : f32
    %16 = vector.broadcast %cst_12 : f32 to vector<8x1xf32>
    %17 = arith.divf %15, %16 : vector<8x1xf32>
    %18 = arith.mulf %12, %12 : vector<8x1xf32>
    %19 = arith.subf %17, %18 : vector<8x1xf32>
    %20 = vector.broadcast %12 : vector<8x1xf32> to vector<8x128xf32>
    %21 = arith.subf %6, %20 : vector<8x128xf32>
    %cst_13 = arith.constant 9.99999996E-13 : f32
    %22 = vector.broadcast %cst_13 : f32 to vector<8x1xf32>
    %23 = arith.addf %19, %22 : vector<8x1xf32>
    %24 = math.rsqrt %23 : vector<8x1xf32>
    %25 = vector.broadcast %24 : vector<8x1xf32> to vector<8x128xf32>
    %26 = arith.mulf %21, %25 : vector<8x128xf32>
    %27 = vector.broadcast %7 : vector<1x128xf32> to vector<8x128xf32>
    %28 = arith.mulf %26, %27 : vector<8x128xf32>
    %29 = vector.broadcast %8 : vector<1x128xf32> to vector<8x128xf32>
    %30 = arith.addf %28, %29 : vector<8x128xf32>
    %c0_14 = arith.constant 0 : index
    %c0_15 = arith.constant 0 : index
    %c0_16 = arith.constant 0 : index
    %31 = vector.load %arg1[%c0_14, %c0_15, %c0_16] : memref<1x1x8xf32, #tpu.memory_space<vmem>>, vector<1x1x8xf32>
    %32 = vector.shape_cast %31 : vector<1x1x8xf32> to vector<1x8xf32>
    %cst_17 = arith.constant 1.000000e+00 : f32
    %33 = vector.broadcast %cst_17 : f32 to vector<1x8xf32>
    %34 = arith.subf %33, %32 : vector<1x8xf32>
    %cst_18 = arith.constant -1.000000e+09 : f32
    %35 = vector.broadcast %cst_18 : f32 to vector<1x8xf32>
    %36 = arith.mulf %34, %35 : vector<1x8xf32>
    %c0_19 = arith.constant 0 : index
    %c0_20 = arith.constant 0 : index
    %c0_21 = arith.constant 0 : index
    %37 = vector.load %arg7[%c0_19, %c0_20, %c0_21] : memref<2x128x128xbf16, #tpu.memory_space<vmem>>, vector<1x128x128xbf16>
    %38 = vector.shape_cast %37 : vector<1x128x128xbf16> to vector<128x128xbf16>
    %c0_22 = arith.constant 0 : index
    %c0_23 = arith.constant 0 : index
    %c0_24 = arith.constant 0 : index
    %39 = vector.load %arg9[%c0_22, %c0_23, %c0_24] : memref<2x128x128xbf16, #tpu.memory_space<vmem>>, vector<1x128x128xbf16>
    %40 = vector.shape_cast %39 : vector<1x128x128xbf16> to vector<128x128xbf16>
    %c0_25 = arith.constant 0 : index
    %c0_26 = arith.constant 0 : index
    %c0_27 = arith.constant 0 : index
    %41 = vector.load %arg11[%c0_25, %c0_26, %c0_27] : memref<2x128x128xbf16, #tpu.memory_space<vmem>>, vector<1x128x128xbf16>
    %42 = vector.shape_cast %41 : vector<1x128x128xbf16> to vector<128x128xbf16>
    %c0_28 = arith.constant 0 : index
    %c0_29 = arith.constant 0 : index
    %c0_30 = arith.constant 0 : index
    %43 = vector.load %arg13[%c0_28, %c0_29, %c0_30] : memref<2x128x128xbf16, #tpu.memory_space<vmem>>, vector<1x128x128xbf16>
    %44 = vector.shape_cast %43 : vector<1x128x128xbf16> to vector<128x128xbf16>
    %c0_31 = arith.constant 0 : index
    %c0_32 = arith.constant 0 : index
    %c0_33 = arith.constant 0 : index
    %45 = vector.load %arg8[%c0_31, %c0_32, %c0_33] : memref<2x1x128xf32, #tpu.memory_space<vmem>>, vector<1x1x128xf32>
    %46 = vector.shape_cast %45 : vector<1x1x128xf32> to vector<1x128xf32>
    %c0_34 = arith.constant 0 : index
    %c0_35 = arith.constant 0 : index
    %c0_36 = arith.constant 0 : index
    %47 = vector.load %arg10[%c0_34, %c0_35, %c0_36] : memref<2x1x128xf32, #tpu.memory_space<vmem>>, vector<1x1x128xf32>
    %48 = vector.shape_cast %47 : vector<1x1x128xf32> to vector<1x128xf32>
    %c0_37 = arith.constant 0 : index
    %c0_38 = arith.constant 0 : index
    %c0_39 = arith.constant 0 : index
    %49 = vector.load %arg12[%c0_37, %c0_38, %c0_39] : memref<2x1x128xf32, #tpu.memory_space<vmem>>, vector<1x1x128xf32>
    %50 = vector.shape_cast %49 : vector<1x1x128xf32> to vector<1x128xf32>
    %c0_40 = arith.constant 0 : index
    %c0_41 = arith.constant 0 : index
    %c0_42 = arith.constant 0 : index
    %51 = vector.load %arg14[%c0_40, %c0_41, %c0_42] : memref<2x1x128xf32, #tpu.memory_space<vmem>>, vector<1x1x128xf32>
    %52 = vector.shape_cast %51 : vector<1x1x128xf32> to vector<1x128xf32>
    %53 = arith.truncf %30 : vector<8x128xf32> to vector<8x128xbf16>
    %cst_43 = arith.constant dense<0.000000e+00> : vector<8x128xf32>
    %54 = tpu.matmul %53, %38, %cst_43 {dimension_numbers = #tpu.dot_dimension_numbers<[1], [0], [0], [1], [0, 0, 1, 1], [], []>} : vector<8x128xbf16>, vector<128x128xbf16>, vector<8x128xf32> -> vector<8x128xf32>
    %55 = vector.broadcast %46 : vector<1x128xf32> to vector<8x128xf32>
    %56 = arith.addf %54, %55 : vector<8x128xf32>
    %cst_44 = arith.constant dense<0.000000e+00> : vector<8x128xf32>
    %57 = tpu.matmul %53, %40, %cst_44 {dimension_numbers = #tpu.dot_dimension_numbers<[1], [0], [0], [1], [0, 0, 1, 1], [], []>} : vector<8x128xbf16>, vector<128x128xbf16>, vector<8x128xf32> -> vector<8x128xf32>
    %58 = vector.broadcast %48 : vector<1x128xf32> to vector<8x128xf32>
    %59 = arith.addf %57, %58 : vector<8x128xf32>
    %cst_45 = arith.constant dense<0.000000e+00> : vector<8x128xf32>
    %60 = tpu.matmul %53, %42, %cst_45 {dimension_numbers = #tpu.dot_dimension_numbers<[1], [0], [0], [1], [0, 0, 1, 1], [], []>} : vector<8x128xbf16>, vector<128x128xbf16>, vector<8x128xf32> -> vector<8x128xf32>
    %61 = vector.broadcast %50 : vector<1x128xf32> to vector<8x128xf32>
    %62 = arith.addf %60, %61 : vector<8x128xf32>
    %cst_46 = arith.constant 0.176776692 : f32
    %63 = vector.broadcast %cst_46 : f32 to vector<8x128xf32>
    %64 = arith.mulf %56, %63 : vector<8x128xf32>
    %65 = vector.extract_strided_slice %64 {offsets = [0, 0], sizes = [8, 32], strides = [1, 1]} : vector<8x128xf32> to vector<8x32xf32>
    %66 = arith.truncf %65 : vector<8x32xf32> to vector<8x32xbf16>
    %67 = vector.extract_strided_slice %59 {offsets = [0, 0], sizes = [8, 32], strides = [1, 1]} : vector<8x128xf32> to vector<8x32xf32>
    %68 = arith.truncf %67 : vector<8x32xf32> to vector<8x32xbf16>
    %69 = vector.extract_strided_slice %62 {offsets = [0, 0], sizes = [8, 32], strides = [1, 1]} : vector<8x128xf32> to vector<8x32xf32>
    %70 = arith.truncf %69 : vector<8x32xf32> to vector<8x32xbf16>
    %cst_47 = arith.constant dense<0.000000e+00> : vector<8x8xf32>
    %71 = tpu.matmul %66, %68, %cst_47 {dimension_numbers = #tpu.dot_dimension_numbers<[1], [1], [0], [0], [0, 0, 1, 0], [], []>} : vector<8x32xbf16>, vector<8x32xbf16>, vector<8x8xf32> -> vector<8x8xf32>
    %72 = vector.broadcast %36 : vector<1x8xf32> to vector<8x8xf32>
    %73 = arith.addf %71, %72 : vector<8x8xf32>
    %cst_48 = arith.constant dense<0xFF800000> : vector<8xf32>
    %74 = vector.multi_reduction <maximumf>, %73, %cst_48 [1] : vector<8x8xf32> to vector<8xf32>
    %75 = vector.shape_cast %74 : vector<8xf32> to vector<8x1xf32>
    %76 = vector.broadcast %75 : vector<8x1xf32> to vector<8x8xf32>
    %77 = arith.subf %73, %76 : vector<8x8xf32>
    %78 = math.exp %77 : vector<8x8xf32>
    %cst_49 = arith.constant dense<0.000000e+00> : vector<8xf32>
    %79 = vector.multi_reduction <add>, %78, %cst_49 [1] : vector<8x8xf32> to vector<8xf32>
    %80 = vector.shape_cast %79 : vector<8xf32> to vector<8x1xf32>
    %81 = tpu.reciprocal %80 {approx = true} : vector<8x1xf32> -> vector<8x1xf32>
    %82 = vector.broadcast %81 : vector<8x1xf32> to vector<8x8xf32>
    %83 = arith.mulf %78, %82 : vector<8x8xf32>
    %84 = arith.truncf %83 : vector<8x8xf32> to vector<8x8xbf16>
    %cst_50 = arith.constant dense<0.000000e+00> : vector<8x32xf32>
    %85 = tpu.matmul %84, %70, %cst_50 {dimension_numbers = #tpu.dot_dimension_numbers<[1], [0], [0], [1], [0, 0, 1, 1], [], []>} : vector<8x8xbf16>, vector<8x32xbf16>, vector<8x32xf32> -> vector<8x32xf32>
    %86 = vector.extract_strided_slice %64 {offsets = [0, 32], sizes = [8, 32], strides = [1, 1]} : vector<8x128xf32> to vector<8x32xf32>
    %87 = arith.truncf %86 : vector<8x32xf32> to vector<8x32xbf16>
    %88 = vector.extract_strided_slice %59 {offsets = [0, 32], sizes = [8, 32], strides = [1, 1]} : vector<8x128xf32> to vector<8x32xf32>
    %89 = arith.truncf %88 : vector<8x32xf32> to vector<8x32xbf16>
    %90 = vector.extract_strided_slice %62 {offsets = [0, 32], sizes = [8, 32], strides = [1, 1]} : vector<8x128xf32> to vector<8x32xf32>
    %91 = arith.truncf %90 : vector<8x32xf32> to vector<8x32xbf16>
    %cst_51 = arith.constant dense<0.000000e+00> : vector<8x8xf32>
    %92 = tpu.matmul %87, %89, %cst_51 {dimension_numbers = #tpu.dot_dimension_numbers<[1], [1], [0], [0], [0, 0, 1, 0], [], []>} : vector<8x32xbf16>, vector<8x32xbf16>, vector<8x8xf32> -> vector<8x8xf32>
    %93 = vector.broadcast %36 : vector<1x8xf32> to vector<8x8xf32>
    %94 = arith.addf %92, %93 : vector<8x8xf32>
    %cst_52 = arith.constant dense<0xFF800000> : vector<8xf32>
    %95 = vector.multi_reduction <maximumf>, %94, %cst_52 [1] : vector<8x8xf32> to vector<8xf32>
    %96 = vector.shape_cast %95 : vector<8xf32> to vector<8x1xf32>
    %97 = vector.broadcast %96 : vector<8x1xf32> to vector<8x8xf32>
    %98 = arith.subf %94, %97 : vector<8x8xf32>
    %99 = math.exp %98 : vector<8x8xf32>
    %cst_53 = arith.constant dense<0.000000e+00> : vector<8xf32>
    %100 = vector.multi_reduction <add>, %99, %cst_53 [1] : vector<8x8xf32> to vector<8xf32>
    %101 = vector.shape_cast %100 : vector<8xf32> to vector<8x1xf32>
    %102 = tpu.reciprocal %101 {approx = true} : vector<8x1xf32> -> vector<8x1xf32>
    %103 = vector.broadcast %102 : vector<8x1xf32> to vector<8x8xf32>
    %104 = arith.mulf %99, %103 : vector<8x8xf32>
    %105 = arith.truncf %104 : vector<8x8xf32> to vector<8x8xbf16>
    %cst_54 = arith.constant dense<0.000000e+00> : vector<8x32xf32>
    %106 = tpu.matmul %105, %91, %cst_54 {dimension_numbers = #tpu.dot_dimension_numbers<[1], [0], [0], [1], [0, 0, 1, 1], [], []>} : vector<8x8xbf16>, vector<8x32xbf16>, vector<8x32xf32> -> vector<8x32xf32>
    %107 = vector.extract_strided_slice %64 {offsets = [0, 64], sizes = [8, 32], strides = [1, 1]} : vector<8x128xf32> to vector<8x32xf32>
    %108 = arith.truncf %107 : vector<8x32xf32> to vector<8x32xbf16>
    %109 = vector.extract_strided_slice %59 {offsets = [0, 64], sizes = [8, 32], strides = [1, 1]} : vector<8x128xf32> to vector<8x32xf32>
    %110 = arith.truncf %109 : vector<8x32xf32> to vector<8x32xbf16>
    %111 = vector.extract_strided_slice %62 {offsets = [0, 64], sizes = [8, 32], strides = [1, 1]} : vector<8x128xf32> to vector<8x32xf32>
    %112 = arith.truncf %111 : vector<8x32xf32> to vector<8x32xbf16>
    %cst_55 = arith.constant dense<0.000000e+00> : vector<8x8xf32>
    %113 = tpu.matmul %108, %110, %cst_55 {dimension_numbers = #tpu.dot_dimension_numbers<[1], [1], [0], [0], [0, 0, 1, 0], [], []>} : vector<8x32xbf16>, vector<8x32xbf16>, vector<8x8xf32> -> vector<8x8xf32>
    %114 = vector.broadcast %36 : vector<1x8xf32> to vector<8x8xf32>
    %115 = arith.addf %113, %114 : vector<8x8xf32>
    %cst_56 = arith.constant dense<0xFF800000> : vector<8xf32>
    %116 = vector.multi_reduction <maximumf>, %115, %cst_56 [1] : vector<8x8xf32> to vector<8xf32>
    %117 = vector.shape_cast %116 : vector<8xf32> to vector<8x1xf32>
    %118 = vector.broadcast %117 : vector<8x1xf32> to vector<8x8xf32>
    %119 = arith.subf %115, %118 : vector<8x8xf32>
    %120 = math.exp %119 : vector<8x8xf32>
    %cst_57 = arith.constant dense<0.000000e+00> : vector<8xf32>
    %121 = vector.multi_reduction <add>, %120, %cst_57 [1] : vector<8x8xf32> to vector<8xf32>
    %122 = vector.shape_cast %121 : vector<8xf32> to vector<8x1xf32>
    %123 = tpu.reciprocal %122 {approx = true} : vector<8x1xf32> -> vector<8x1xf32>
    %124 = vector.broadcast %123 : vector<8x1xf32> to vector<8x8xf32>
    %125 = arith.mulf %120, %124 : vector<8x8xf32>
    %126 = arith.truncf %125 : vector<8x8xf32> to vector<8x8xbf16>
    %cst_58 = arith.constant dense<0.000000e+00> : vector<8x32xf32>
    %127 = tpu.matmul %126, %112, %cst_58 {dimension_numbers = #tpu.dot_dimension_numbers<[1], [0], [0], [1], [0, 0, 1, 1], [], []>} : vector<8x8xbf16>, vector<8x32xbf16>, vector<8x32xf32> -> vector<8x32xf32>
    %128 = vector.extract_strided_slice %64 {offsets = [0, 96], sizes = [8, 32], strides = [1, 1]} : vector<8x128xf32> to vector<8x32xf32>
    %129 = arith.truncf %128 : vector<8x32xf32> to vector<8x32xbf16>
    %130 = vector.extract_strided_slice %59 {offsets = [0, 96], sizes = [8, 32], strides = [1, 1]} : vector<8x128xf32> to vector<8x32xf32>
    %131 = arith.truncf %130 : vector<8x32xf32> to vector<8x32xbf16>
    %132 = vector.extract_strided_slice %62 {offsets = [0, 96], sizes = [8, 32], strides = [1, 1]} : vector<8x128xf32> to vector<8x32xf32>
    %133 = arith.truncf %132 : vector<8x32xf32> to vector<8x32xbf16>
    %cst_59 = arith.constant dense<0.000000e+00> : vector<8x8xf32>
    %134 = tpu.matmul %129, %131, %cst_59 {dimension_numbers = #tpu.dot_dimension_numbers<[1], [1], [0], [0], [0, 0, 1, 0], [], []>} : vector<8x32xbf16>, vector<8x32xbf16>, vector<8x8xf32> -> vector<8x8xf32>
    %135 = vector.broadcast %36 : vector<1x8xf32> to vector<8x8xf32>
    %136 = arith.addf %134, %135 : vector<8x8xf32>
    %cst_60 = arith.constant dense<0xFF800000> : vector<8xf32>
    %137 = vector.multi_reduction <maximumf>, %136, %cst_60 [1] : vector<8x8xf32> to vector<8xf32>
    %138 = vector.shape_cast %137 : vector<8xf32> to vector<8x1xf32>
    %139 = vector.broadcast %138 : vector<8x1xf32> to vector<8x8xf32>
    %140 = arith.subf %136, %139 : vector<8x8xf32>
    %141 = math.exp %140 : vector<8x8xf32>
    %cst_61 = arith.constant dense<0.000000e+00> : vector<8xf32>
    %142 = vector.multi_reduction <add>, %141, %cst_61 [1] : vector<8x8xf32> to vector<8xf32>
    %143 = vector.shape_cast %142 : vector<8xf32> to vector<8x1xf32>
    %144 = tpu.reciprocal %143 {approx = true} : vector<8x1xf32> -> vector<8x1xf32>
    %145 = vector.broadcast %144 : vector<8x1xf32> to vector<8x8xf32>
    %146 = arith.mulf %141, %145 : vector<8x8xf32>
    %147 = arith.truncf %146 : vector<8x8xf32> to vector<8x8xbf16>
    %cst_62 = arith.constant dense<0.000000e+00> : vector<8x32xf32>
    %148 = tpu.matmul %147, %133, %cst_62 {dimension_numbers = #tpu.dot_dimension_numbers<[1], [0], [0], [1], [0, 0, 1, 1], [], []>} : vector<8x8xbf16>, vector<8x32xbf16>, vector<8x32xf32> -> vector<8x32xf32>
    %149 = tpu.concatenate %85, %106, %127, %148 in 1 : vector<8x32xf32>, vector<8x32xf32>, vector<8x32xf32>, vector<8x32xf32> -> vector<8x128xf32>
    %150 = arith.truncf %149 : vector<8x128xf32> to vector<8x128xbf16>
    %cst_63 = arith.constant dense<0.000000e+00> : vector<8x128xf32>
    %151 = tpu.matmul %150, %44, %cst_63 {dimension_numbers = #tpu.dot_dimension_numbers<[1], [0], [0], [1], [0, 0, 1, 1], [], []>} : vector<8x128xbf16>, vector<128x128xbf16>, vector<8x128xf32> -> vector<8x128xf32>
    %152 = vector.broadcast %52 : vector<1x128xf32> to vector<8x128xf32>
    %153 = arith.addf %151, %152 : vector<8x128xf32>
    %154 = arith.addf %30, %153 : vector<8x128xf32>
    %c0_64 = arith.constant 0 : index
    %c0_65 = arith.constant 0 : index
    %c0_66 = arith.constant 0 : index
    %155 = vector.load %arg15[%c0_64, %c0_65, %c0_66] : memref<2x1x128xf32, #tpu.memory_space<vmem>>, vector<1x1x128xf32>
    %156 = vector.shape_cast %155 : vector<1x1x128xf32> to vector<1x128xf32>
    %c0_67 = arith.constant 0 : index
    %c0_68 = arith.constant 0 : index
    %c0_69 = arith.constant 0 : index
    %157 = vector.load %arg16[%c0_67, %c0_68, %c0_69] : memref<2x1x128xf32, #tpu.memory_space<vmem>>, vector<1x1x128xf32>
    %158 = vector.shape_cast %157 : vector<1x1x128xf32> to vector<1x128xf32>
    %cst_70 = arith.constant dense<0.000000e+00> : vector<8xf32>
    %159 = vector.multi_reduction <add>, %154, %cst_70 [1] : vector<8x128xf32> to vector<8xf32>
    %160 = vector.shape_cast %159 : vector<8xf32> to vector<8x1xf32>
    %cst_71 = arith.constant 1.280000e+02 : f32
    %161 = vector.broadcast %cst_71 : f32 to vector<8x1xf32>
    %162 = arith.divf %160, %161 : vector<8x1xf32>
    %163 = arith.mulf %154, %154 : vector<8x128xf32>
    %cst_72 = arith.constant dense<0.000000e+00> : vector<8xf32>
    %164 = vector.multi_reduction <add>, %163, %cst_72 [1] : vector<8x128xf32> to vector<8xf32>
    %165 = vector.shape_cast %164 : vector<8xf32> to vector<8x1xf32>
    %cst_73 = arith.constant 1.280000e+02 : f32
    %166 = vector.broadcast %cst_73 : f32 to vector<8x1xf32>
    %167 = arith.divf %165, %166 : vector<8x1xf32>
    %168 = arith.mulf %162, %162 : vector<8x1xf32>
    %169 = arith.subf %167, %168 : vector<8x1xf32>
    %170 = vector.broadcast %162 : vector<8x1xf32> to vector<8x128xf32>
    %171 = arith.subf %154, %170 : vector<8x128xf32>
    %cst_74 = arith.constant 9.99999996E-13 : f32
    %172 = vector.broadcast %cst_74 : f32 to vector<8x1xf32>
    %173 = arith.addf %169, %172 : vector<8x1xf32>
    %174 = math.rsqrt %173 : vector<8x1xf32>
    %175 = vector.broadcast %174 : vector<8x1xf32> to vector<8x128xf32>
    %176 = arith.mulf %171, %175 : vector<8x128xf32>
    %177 = vector.broadcast %156 : vector<1x128xf32> to vector<8x128xf32>
    %178 = arith.mulf %176, %177 : vector<8x128xf32>
    %179 = vector.broadcast %158 : vector<1x128xf32> to vector<8x128xf32>
    %180 = arith.addf %178, %179 : vector<8x128xf32>
    %181 = arith.truncf %180 : vector<8x128xf32> to vector<8x128xbf16>
    %c0_75 = arith.constant 0 : index
    %c0_76 = arith.constant 0 : index
    %c0_77 = arith.constant 0 : index
    %182 = vector.load %arg17[%c0_75, %c0_76, %c0_77] : memref<2x128x256xbf16, #tpu.memory_space<vmem>>, vector<1x128x256xbf16>
    %183 = vector.shape_cast %182 : vector<1x128x256xbf16> to vector<128x256xbf16>
    %cst_78 = arith.constant dense<0.000000e+00> : vector<8x256xf32>
    %184 = tpu.matmul %181, %183, %cst_78 {dimension_numbers = #tpu.dot_dimension_numbers<[1], [0], [0], [1], [0, 0, 1, 1], [], []>} : vector<8x128xbf16>, vector<128x256xbf16>, vector<8x256xf32> -> vector<8x256xf32>
    %c0_79 = arith.constant 0 : index
    %c0_80 = arith.constant 0 : index
    %c0_81 = arith.constant 0 : index
    %185 = vector.load %arg18[%c0_79, %c0_80, %c0_81] : memref<2x1x256xf32, #tpu.memory_space<vmem>>, vector<1x1x256xf32>
    %186 = vector.shape_cast %185 : vector<1x1x256xf32> to vector<1x256xf32>
    %187 = vector.broadcast %186 : vector<1x256xf32> to vector<8x256xf32>
    %188 = arith.addf %184, %187 : vector<8x256xf32>
    %cst_82 = arith.constant 5.000000e-01 : f32
    %189 = vector.broadcast %cst_82 : f32 to vector<8x256xf32>
    %190 = arith.mulf %189, %188 : vector<8x256xf32>
    %cst_83 = arith.constant 4.471500e-02 : f32
    %191 = vector.broadcast %cst_83 : f32 to vector<8x256xf32>
    %192 = arith.mulf %191, %188 : vector<8x256xf32>
    %193 = arith.mulf %192, %188 : vector<8x256xf32>
    %194 = arith.mulf %193, %188 : vector<8x256xf32>
    %195 = arith.addf %188, %194 : vector<8x256xf32>
    %cst_84 = arith.constant 0.797884583 : f32
    %196 = vector.broadcast %cst_84 : f32 to vector<8x256xf32>
    %197 = arith.mulf %196, %195 : vector<8x256xf32>
    %198 = math.tanh %197 : vector<8x256xf32>
    %cst_85 = arith.constant 1.000000e+00 : f32
    %199 = vector.broadcast %cst_85 : f32 to vector<8x256xf32>
    %200 = arith.addf %199, %198 : vector<8x256xf32>
    %201 = arith.mulf %190, %200 : vector<8x256xf32>
    %202 = arith.truncf %201 : vector<8x256xf32> to vector<8x256xbf16>
    %c0_86 = arith.constant 0 : index
    %c0_87 = arith.constant 0 : index
    %c0_88 = arith.constant 0 : index
    %203 = vector.load %arg19[%c0_86, %c0_87, %c0_88] : memref<2x256x128xbf16, #tpu.memory_space<vmem>>, vector<1x256x128xbf16>
    %204 = vector.shape_cast %203 : vector<1x256x128xbf16> to vector<256x128xbf16>
    %cst_89 = arith.constant dense<0.000000e+00> : vector<8x128xf32>
    %205 = tpu.matmul %202, %204, %cst_89 {dimension_numbers = #tpu.dot_dimension_numbers<[1], [0], [0], [1], [0, 0, 1, 1], [], []>} : vector<8x256xbf16>, vector<256x128xbf16>, vector<8x128xf32> -> vector<8x128xf32>
    %c0_90 = arith.constant 0 : index
    %c0_91 = arith.constant 0 : index
    %c0_92 = arith.constant 0 : index
    %206 = vector.load %arg20[%c0_90, %c0_91, %c0_92] : memref<2x1x128xf32, #tpu.memory_space<vmem>>, vector<1x1x128xf32>
    %207 = vector.shape_cast %206 : vector<1x1x128xf32> to vector<1x128xf32>
    %208 = vector.broadcast %207 : vector<1x128xf32> to vector<8x128xf32>
    %209 = arith.addf %205, %208 : vector<8x128xf32>
    %210 = arith.addf %180, %209 : vector<8x128xf32>
    %c0_93 = arith.constant 0 : index
    %c0_94 = arith.constant 0 : index
    %c0_95 = arith.constant 0 : index
    %211 = vector.load %arg21[%c0_93, %c0_94, %c0_95] : memref<2x1x128xf32, #tpu.memory_space<vmem>>, vector<1x1x128xf32>
    %212 = vector.shape_cast %211 : vector<1x1x128xf32> to vector<1x128xf32>
    %c0_96 = arith.constant 0 : index
    %c0_97 = arith.constant 0 : index
    %c0_98 = arith.constant 0 : index
    %213 = vector.load %arg22[%c0_96, %c0_97, %c0_98] : memref<2x1x128xf32, #tpu.memory_space<vmem>>, vector<1x1x128xf32>
    %214 = vector.shape_cast %213 : vector<1x1x128xf32> to vector<1x128xf32>
    %cst_99 = arith.constant dense<0.000000e+00> : vector<8xf32>
    %215 = vector.multi_reduction <add>, %210, %cst_99 [1] : vector<8x128xf32> to vector<8xf32>
    %216 = vector.shape_cast %215 : vector<8xf32> to vector<8x1xf32>
    %cst_100 = arith.constant 1.280000e+02 : f32
    %217 = vector.broadcast %cst_100 : f32 to vector<8x1xf32>
    %218 = arith.divf %216, %217 : vector<8x1xf32>
    %219 = arith.mulf %210, %210 : vector<8x128xf32>
    %cst_101 = arith.constant dense<0.000000e+00> : vector<8xf32>
    %220 = vector.multi_reduction <add>, %219, %cst_101 [1] : vector<8x128xf32> to vector<8xf32>
    %221 = vector.shape_cast %220 : vector<8xf32> to vector<8x1xf32>
    %cst_102 = arith.constant 1.280000e+02 : f32
    %222 = vector.broadcast %cst_102 : f32 to vector<8x1xf32>
    %223 = arith.divf %221, %222 : vector<8x1xf32>
    %224 = arith.mulf %218, %218 : vector<8x1xf32>
    %225 = arith.subf %223, %224 : vector<8x1xf32>
    %226 = vector.broadcast %218 : vector<8x1xf32> to vector<8x128xf32>
    %227 = arith.subf %210, %226 : vector<8x128xf32>
    %cst_103 = arith.constant 9.99999996E-13 : f32
    %228 = vector.broadcast %cst_103 : f32 to vector<8x1xf32>
    %229 = arith.addf %225, %228 : vector<8x1xf32>
    %230 = math.rsqrt %229 : vector<8x1xf32>
    %231 = vector.broadcast %230 : vector<8x1xf32> to vector<8x128xf32>
    %232 = arith.mulf %227, %231 : vector<8x128xf32>
    %233 = vector.broadcast %212 : vector<1x128xf32> to vector<8x128xf32>
    %234 = arith.mulf %232, %233 : vector<8x128xf32>
    %235 = vector.broadcast %214 : vector<1x128xf32> to vector<8x128xf32>
    %236 = arith.addf %234, %235 : vector<8x128xf32>
    %c1 = arith.constant 1 : index
    %c0_104 = arith.constant 0 : index
    %c0_105 = arith.constant 0 : index
    %237 = vector.load %arg7[%c1, %c0_104, %c0_105] : memref<2x128x128xbf16, #tpu.memory_space<vmem>>, vector<1x128x128xbf16>
    %238 = vector.shape_cast %237 : vector<1x128x128xbf16> to vector<128x128xbf16>
    %c1_106 = arith.constant 1 : index
    %c0_107 = arith.constant 0 : index
    %c0_108 = arith.constant 0 : index
    %239 = vector.load %arg9[%c1_106, %c0_107, %c0_108] : memref<2x128x128xbf16, #tpu.memory_space<vmem>>, vector<1x128x128xbf16>
    %240 = vector.shape_cast %239 : vector<1x128x128xbf16> to vector<128x128xbf16>
    %c1_109 = arith.constant 1 : index
    %c0_110 = arith.constant 0 : index
    %c0_111 = arith.constant 0 : index
    %241 = vector.load %arg11[%c1_109, %c0_110, %c0_111] : memref<2x128x128xbf16, #tpu.memory_space<vmem>>, vector<1x128x128xbf16>
    %242 = vector.shape_cast %241 : vector<1x128x128xbf16> to vector<128x128xbf16>
    %c1_112 = arith.constant 1 : index
    %c0_113 = arith.constant 0 : index
    %c0_114 = arith.constant 0 : index
    %243 = vector.load %arg13[%c1_112, %c0_113, %c0_114] : memref<2x128x128xbf16, #tpu.memory_space<vmem>>, vector<1x128x128xbf16>
    %244 = vector.shape_cast %243 : vector<1x128x128xbf16> to vector<128x128xbf16>
    %c1_115 = arith.constant 1 : index
    %c0_116 = arith.constant 0 : index
    %c0_117 = arith.constant 0 : index
    %245 = vector.load %arg8[%c1_115, %c0_116, %c0_117] : memref<2x1x128xf32, #tpu.memory_space<vmem>>, vector<1x1x128xf32>
    %246 = vector.shape_cast %245 : vector<1x1x128xf32> to vector<1x128xf32>
    %c1_118 = arith.constant 1 : index
    %c0_119 = arith.constant 0 : index
    %c0_120 = arith.constant 0 : index
    %247 = vector.load %arg10[%c1_118, %c0_119, %c0_120] : memref<2x1x128xf32, #tpu.memory_space<vmem>>, vector<1x1x128xf32>
    %248 = vector.shape_cast %247 : vector<1x1x128xf32> to vector<1x128xf32>
    %c1_121 = arith.constant 1 : index
    %c0_122 = arith.constant 0 : index
    %c0_123 = arith.constant 0 : index
    %249 = vector.load %arg12[%c1_121, %c0_122, %c0_123] : memref<2x1x128xf32, #tpu.memory_space<vmem>>, vector<1x1x128xf32>
    %250 = vector.shape_cast %249 : vector<1x1x128xf32> to vector<1x128xf32>
    %c1_124 = arith.constant 1 : index
    %c0_125 = arith.constant 0 : index
    %c0_126 = arith.constant 0 : index
    %251 = vector.load %arg14[%c1_124, %c0_125, %c0_126] : memref<2x1x128xf32, #tpu.memory_space<vmem>>, vector<1x1x128xf32>
    %252 = vector.shape_cast %251 : vector<1x1x128xf32> to vector<1x128xf32>
    %253 = arith.truncf %236 : vector<8x128xf32> to vector<8x128xbf16>
    %cst_127 = arith.constant dense<0.000000e+00> : vector<8x128xf32>
    %254 = tpu.matmul %253, %238, %cst_127 {dimension_numbers = #tpu.dot_dimension_numbers<[1], [0], [0], [1], [0, 0, 1, 1], [], []>} : vector<8x128xbf16>, vector<128x128xbf16>, vector<8x128xf32> -> vector<8x128xf32>
    %255 = vector.broadcast %246 : vector<1x128xf32> to vector<8x128xf32>
    %256 = arith.addf %254, %255 : vector<8x128xf32>
    %cst_128 = arith.constant dense<0.000000e+00> : vector<8x128xf32>
    %257 = tpu.matmul %253, %240, %cst_128 {dimension_numbers = #tpu.dot_dimension_numbers<[1], [0], [0], [1], [0, 0, 1, 1], [], []>} : vector<8x128xbf16>, vector<128x128xbf16>, vector<8x128xf32> -> vector<8x128xf32>
    %258 = vector.broadcast %248 : vector<1x128xf32> to vector<8x128xf32>
    %259 = arith.addf %257, %258 : vector<8x128xf32>
    %cst_129 = arith.constant dense<0.000000e+00> : vector<8x128xf32>
    %260 = tpu.matmul %253, %242, %cst_129 {dimension_numbers = #tpu.dot_dimension_numbers<[1], [0], [0], [1], [0, 0, 1, 1], [], []>} : vector<8x128xbf16>, vector<128x128xbf16>, vector<8x128xf32> -> vector<8x128xf32>
    %261 = vector.broadcast %250 : vector<1x128xf32> to vector<8x128xf32>
    %262 = arith.addf %260, %261 : vector<8x128xf32>
    %cst_130 = arith.constant 0.176776692 : f32
    %263 = vector.broadcast %cst_130 : f32 to vector<8x128xf32>
    %264 = arith.mulf %256, %263 : vector<8x128xf32>
    %265 = vector.extract_strided_slice %264 {offsets = [0, 0], sizes = [8, 32], strides = [1, 1]} : vector<8x128xf32> to vector<8x32xf32>
    %266 = arith.truncf %265 : vector<8x32xf32> to vector<8x32xbf16>
    %267 = vector.extract_strided_slice %259 {offsets = [0, 0], sizes = [8, 32], strides = [1, 1]} : vector<8x128xf32> to vector<8x32xf32>
    %268 = arith.truncf %267 : vector<8x32xf32> to vector<8x32xbf16>
    %269 = vector.extract_strided_slice %262 {offsets = [0, 0], sizes = [8, 32], strides = [1, 1]} : vector<8x128xf32> to vector<8x32xf32>
    %270 = arith.truncf %269 : vector<8x32xf32> to vector<8x32xbf16>
    %cst_131 = arith.constant dense<0.000000e+00> : vector<8x8xf32>
    %271 = tpu.matmul %266, %268, %cst_131 {dimension_numbers = #tpu.dot_dimension_numbers<[1], [1], [0], [0], [0, 0, 1, 0], [], []>} : vector<8x32xbf16>, vector<8x32xbf16>, vector<8x8xf32> -> vector<8x8xf32>
    %272 = vector.broadcast %36 : vector<1x8xf32> to vector<8x8xf32>
    %273 = arith.addf %271, %272 : vector<8x8xf32>
    %cst_132 = arith.constant dense<0xFF800000> : vector<8xf32>
    %274 = vector.multi_reduction <maximumf>, %273, %cst_132 [1] : vector<8x8xf32> to vector<8xf32>
    %275 = vector.shape_cast %274 : vector<8xf32> to vector<8x1xf32>
    %276 = vector.broadcast %275 : vector<8x1xf32> to vector<8x8xf32>
    %277 = arith.subf %273, %276 : vector<8x8xf32>
    %278 = math.exp %277 : vector<8x8xf32>
    %cst_133 = arith.constant dense<0.000000e+00> : vector<8xf32>
    %279 = vector.multi_reduction <add>, %278, %cst_133 [1] : vector<8x8xf32> to vector<8xf32>
    %280 = vector.shape_cast %279 : vector<8xf32> to vector<8x1xf32>
    %281 = tpu.reciprocal %280 {approx = true} : vector<8x1xf32> -> vector<8x1xf32>
    %282 = vector.broadcast %281 : vector<8x1xf32> to vector<8x8xf32>
    %283 = arith.mulf %278, %282 : vector<8x8xf32>
    %284 = arith.truncf %283 : vector<8x8xf32> to vector<8x8xbf16>
    %cst_134 = arith.constant dense<0.000000e+00> : vector<8x32xf32>
    %285 = tpu.matmul %284, %270, %cst_134 {dimension_numbers = #tpu.dot_dimension_numbers<[1], [0], [0], [1], [0, 0, 1, 1], [], []>} : vector<8x8xbf16>, vector<8x32xbf16>, vector<8x32xf32> -> vector<8x32xf32>
    %286 = vector.extract_strided_slice %264 {offsets = [0, 32], sizes = [8, 32], strides = [1, 1]} : vector<8x128xf32> to vector<8x32xf32>
    %287 = arith.truncf %286 : vector<8x32xf32> to vector<8x32xbf16>
    %288 = vector.extract_strided_slice %259 {offsets = [0, 32], sizes = [8, 32], strides = [1, 1]} : vector<8x128xf32> to vector<8x32xf32>
    %289 = arith.truncf %288 : vector<8x32xf32> to vector<8x32xbf16>
    %290 = vector.extract_strided_slice %262 {offsets = [0, 32], sizes = [8, 32], strides = [1, 1]} : vector<8x128xf32> to vector<8x32xf32>
    %291 = arith.truncf %290 : vector<8x32xf32> to vector<8x32xbf16>
    %cst_135 = arith.constant dense<0.000000e+00> : vector<8x8xf32>
    %292 = tpu.matmul %287, %289, %cst_135 {dimension_numbers = #tpu.dot_dimension_numbers<[1], [1], [0], [0], [0, 0, 1, 0], [], []>} : vector<8x32xbf16>, vector<8x32xbf16>, vector<8x8xf32> -> vector<8x8xf32>
    %293 = vector.broadcast %36 : vector<1x8xf32> to vector<8x8xf32>
    %294 = arith.addf %292, %293 : vector<8x8xf32>
    %cst_136 = arith.constant dense<0xFF800000> : vector<8xf32>
    %295 = vector.multi_reduction <maximumf>, %294, %cst_136 [1] : vector<8x8xf32> to vector<8xf32>
    %296 = vector.shape_cast %295 : vector<8xf32> to vector<8x1xf32>
    %297 = vector.broadcast %296 : vector<8x1xf32> to vector<8x8xf32>
    %298 = arith.subf %294, %297 : vector<8x8xf32>
    %299 = math.exp %298 : vector<8x8xf32>
    %cst_137 = arith.constant dense<0.000000e+00> : vector<8xf32>
    %300 = vector.multi_reduction <add>, %299, %cst_137 [1] : vector<8x8xf32> to vector<8xf32>
    %301 = vector.shape_cast %300 : vector<8xf32> to vector<8x1xf32>
    %302 = tpu.reciprocal %301 {approx = true} : vector<8x1xf32> -> vector<8x1xf32>
    %303 = vector.broadcast %302 : vector<8x1xf32> to vector<8x8xf32>
    %304 = arith.mulf %299, %303 : vector<8x8xf32>
    %305 = arith.truncf %304 : vector<8x8xf32> to vector<8x8xbf16>
    %cst_138 = arith.constant dense<0.000000e+00> : vector<8x32xf32>
    %306 = tpu.matmul %305, %291, %cst_138 {dimension_numbers = #tpu.dot_dimension_numbers<[1], [0], [0], [1], [0, 0, 1, 1], [], []>} : vector<8x8xbf16>, vector<8x32xbf16>, vector<8x32xf32> -> vector<8x32xf32>
    %307 = vector.extract_strided_slice %264 {offsets = [0, 64], sizes = [8, 32], strides = [1, 1]} : vector<8x128xf32> to vector<8x32xf32>
    %308 = arith.truncf %307 : vector<8x32xf32> to vector<8x32xbf16>
    %309 = vector.extract_strided_slice %259 {offsets = [0, 64], sizes = [8, 32], strides = [1, 1]} : vector<8x128xf32> to vector<8x32xf32>
    %310 = arith.truncf %309 : vector<8x32xf32> to vector<8x32xbf16>
    %311 = vector.extract_strided_slice %262 {offsets = [0, 64], sizes = [8, 32], strides = [1, 1]} : vector<8x128xf32> to vector<8x32xf32>
    %312 = arith.truncf %311 : vector<8x32xf32> to vector<8x32xbf16>
    %cst_139 = arith.constant dense<0.000000e+00> : vector<8x8xf32>
    %313 = tpu.matmul %308, %310, %cst_139 {dimension_numbers = #tpu.dot_dimension_numbers<[1], [1], [0], [0], [0, 0, 1, 0], [], []>} : vector<8x32xbf16>, vector<8x32xbf16>, vector<8x8xf32> -> vector<8x8xf32>
    %314 = vector.broadcast %36 : vector<1x8xf32> to vector<8x8xf32>
    %315 = arith.addf %313, %314 : vector<8x8xf32>
    %cst_140 = arith.constant dense<0xFF800000> : vector<8xf32>
    %316 = vector.multi_reduction <maximumf>, %315, %cst_140 [1] : vector<8x8xf32> to vector<8xf32>
    %317 = vector.shape_cast %316 : vector<8xf32> to vector<8x1xf32>
    %318 = vector.broadcast %317 : vector<8x1xf32> to vector<8x8xf32>
    %319 = arith.subf %315, %318 : vector<8x8xf32>
    %320 = math.exp %319 : vector<8x8xf32>
    %cst_141 = arith.constant dense<0.000000e+00> : vector<8xf32>
    %321 = vector.multi_reduction <add>, %320, %cst_141 [1] : vector<8x8xf32> to vector<8xf32>
    %322 = vector.shape_cast %321 : vector<8xf32> to vector<8x1xf32>
    %323 = tpu.reciprocal %322 {approx = true} : vector<8x1xf32> -> vector<8x1xf32>
    %324 = vector.broadcast %323 : vector<8x1xf32> to vector<8x8xf32>
    %325 = arith.mulf %320, %324 : vector<8x8xf32>
    %326 = arith.truncf %325 : vector<8x8xf32> to vector<8x8xbf16>
    %cst_142 = arith.constant dense<0.000000e+00> : vector<8x32xf32>
    %327 = tpu.matmul %326, %312, %cst_142 {dimension_numbers = #tpu.dot_dimension_numbers<[1], [0], [0], [1], [0, 0, 1, 1], [], []>} : vector<8x8xbf16>, vector<8x32xbf16>, vector<8x32xf32> -> vector<8x32xf32>
    %328 = vector.extract_strided_slice %264 {offsets = [0, 96], sizes = [8, 32], strides = [1, 1]} : vector<8x128xf32> to vector<8x32xf32>
    %329 = arith.truncf %328 : vector<8x32xf32> to vector<8x32xbf16>
    %330 = vector.extract_strided_slice %259 {offsets = [0, 96], sizes = [8, 32], strides = [1, 1]} : vector<8x128xf32> to vector<8x32xf32>
    %331 = arith.truncf %330 : vector<8x32xf32> to vector<8x32xbf16>
    %332 = vector.extract_strided_slice %262 {offsets = [0, 96], sizes = [8, 32], strides = [1, 1]} : vector<8x128xf32> to vector<8x32xf32>
    %333 = arith.truncf %332 : vector<8x32xf32> to vector<8x32xbf16>
    %cst_143 = arith.constant dense<0.000000e+00> : vector<8x8xf32>
    %334 = tpu.matmul %329, %331, %cst_143 {dimension_numbers = #tpu.dot_dimension_numbers<[1], [1], [0], [0], [0, 0, 1, 0], [], []>} : vector<8x32xbf16>, vector<8x32xbf16>, vector<8x8xf32> -> vector<8x8xf32>
    %335 = vector.broadcast %36 : vector<1x8xf32> to vector<8x8xf32>
    %336 = arith.addf %334, %335 : vector<8x8xf32>
    %cst_144 = arith.constant dense<0xFF800000> : vector<8xf32>
    %337 = vector.multi_reduction <maximumf>, %336, %cst_144 [1] : vector<8x8xf32> to vector<8xf32>
    %338 = vector.shape_cast %337 : vector<8xf32> to vector<8x1xf32>
    %339 = vector.broadcast %338 : vector<8x1xf32> to vector<8x8xf32>
    %340 = arith.subf %336, %339 : vector<8x8xf32>
    %341 = math.exp %340 : vector<8x8xf32>
    %cst_145 = arith.constant dense<0.000000e+00> : vector<8xf32>
    %342 = vector.multi_reduction <add>, %341, %cst_145 [1] : vector<8x8xf32> to vector<8xf32>
    %343 = vector.shape_cast %342 : vector<8xf32> to vector<8x1xf32>
    %344 = tpu.reciprocal %343 {approx = true} : vector<8x1xf32> -> vector<8x1xf32>
    %345 = vector.broadcast %344 : vector<8x1xf32> to vector<8x8xf32>
    %346 = arith.mulf %341, %345 : vector<8x8xf32>
    %347 = arith.truncf %346 : vector<8x8xf32> to vector<8x8xbf16>
    %cst_146 = arith.constant dense<0.000000e+00> : vector<8x32xf32>
    %348 = tpu.matmul %347, %333, %cst_146 {dimension_numbers = #tpu.dot_dimension_numbers<[1], [0], [0], [1], [0, 0, 1, 1], [], []>} : vector<8x8xbf16>, vector<8x32xbf16>, vector<8x32xf32> -> vector<8x32xf32>
    %349 = tpu.concatenate %285, %306, %327, %348 in 1 : vector<8x32xf32>, vector<8x32xf32>, vector<8x32xf32>, vector<8x32xf32> -> vector<8x128xf32>
    %350 = arith.truncf %349 : vector<8x128xf32> to vector<8x128xbf16>
    %cst_147 = arith.constant dense<0.000000e+00> : vector<8x128xf32>
    %351 = tpu.matmul %350, %244, %cst_147 {dimension_numbers = #tpu.dot_dimension_numbers<[1], [0], [0], [1], [0, 0, 1, 1], [], []>} : vector<8x128xbf16>, vector<128x128xbf16>, vector<8x128xf32> -> vector<8x128xf32>
    %352 = vector.broadcast %252 : vector<1x128xf32> to vector<8x128xf32>
    %353 = arith.addf %351, %352 : vector<8x128xf32>
    %354 = arith.addf %236, %353 : vector<8x128xf32>
    %c1_148 = arith.constant 1 : index
    %c0_149 = arith.constant 0 : index
    %c0_150 = arith.constant 0 : index
    %355 = vector.load %arg15[%c1_148, %c0_149, %c0_150] : memref<2x1x128xf32, #tpu.memory_space<vmem>>, vector<1x1x128xf32>
    %356 = vector.shape_cast %355 : vector<1x1x128xf32> to vector<1x128xf32>
    %c1_151 = arith.constant 1 : index
    %c0_152 = arith.constant 0 : index
    %c0_153 = arith.constant 0 : index
    %357 = vector.load %arg16[%c1_151, %c0_152, %c0_153] : memref<2x1x128xf32, #tpu.memory_space<vmem>>, vector<1x1x128xf32>
    %358 = vector.shape_cast %357 : vector<1x1x128xf32> to vector<1x128xf32>
    %cst_154 = arith.constant dense<0.000000e+00> : vector<8xf32>
    %359 = vector.multi_reduction <add>, %354, %cst_154 [1] : vector<8x128xf32> to vector<8xf32>
    %360 = vector.shape_cast %359 : vector<8xf32> to vector<8x1xf32>
    %cst_155 = arith.constant 1.280000e+02 : f32
    %361 = vector.broadcast %cst_155 : f32 to vector<8x1xf32>
    %362 = arith.divf %360, %361 : vector<8x1xf32>
    %363 = arith.mulf %354, %354 : vector<8x128xf32>
    %cst_156 = arith.constant dense<0.000000e+00> : vector<8xf32>
    %364 = vector.multi_reduction <add>, %363, %cst_156 [1] : vector<8x128xf32> to vector<8xf32>
    %365 = vector.shape_cast %364 : vector<8xf32> to vector<8x1xf32>
    %cst_157 = arith.constant 1.280000e+02 : f32
    %366 = vector.broadcast %cst_157 : f32 to vector<8x1xf32>
    %367 = arith.divf %365, %366 : vector<8x1xf32>
    %368 = arith.mulf %362, %362 : vector<8x1xf32>
    %369 = arith.subf %367, %368 : vector<8x1xf32>
    %370 = vector.broadcast %362 : vector<8x1xf32> to vector<8x128xf32>
    %371 = arith.subf %354, %370 : vector<8x128xf32>
    %cst_158 = arith.constant 9.99999996E-13 : f32
    %372 = vector.broadcast %cst_158 : f32 to vector<8x1xf32>
    %373 = arith.addf %369, %372 : vector<8x1xf32>
    %374 = math.rsqrt %373 : vector<8x1xf32>
    %375 = vector.broadcast %374 : vector<8x1xf32> to vector<8x128xf32>
    %376 = arith.mulf %371, %375 : vector<8x128xf32>
    %377 = vector.broadcast %356 : vector<1x128xf32> to vector<8x128xf32>
    %378 = arith.mulf %376, %377 : vector<8x128xf32>
    %379 = vector.broadcast %358 : vector<1x128xf32> to vector<8x128xf32>
    %380 = arith.addf %378, %379 : vector<8x128xf32>
    %381 = arith.truncf %380 : vector<8x128xf32> to vector<8x128xbf16>
    %c1_159 = arith.constant 1 : index
    %c0_160 = arith.constant 0 : index
    %c0_161 = arith.constant 0 : index
    %382 = vector.load %arg17[%c1_159, %c0_160, %c0_161] : memref<2x128x256xbf16, #tpu.memory_space<vmem>>, vector<1x128x256xbf16>
    %383 = vector.shape_cast %382 : vector<1x128x256xbf16> to vector<128x256xbf16>
    %cst_162 = arith.constant dense<0.000000e+00> : vector<8x256xf32>
    %384 = tpu.matmul %381, %383, %cst_162 {dimension_numbers = #tpu.dot_dimension_numbers<[1], [0], [0], [1], [0, 0, 1, 1], [], []>} : vector<8x128xbf16>, vector<128x256xbf16>, vector<8x256xf32> -> vector<8x256xf32>
    %c1_163 = arith.constant 1 : index
    %c0_164 = arith.constant 0 : index
    %c0_165 = arith.constant 0 : index
    %385 = vector.load %arg18[%c1_163, %c0_164, %c0_165] : memref<2x1x256xf32, #tpu.memory_space<vmem>>, vector<1x1x256xf32>
    %386 = vector.shape_cast %385 : vector<1x1x256xf32> to vector<1x256xf32>
    %387 = vector.broadcast %386 : vector<1x256xf32> to vector<8x256xf32>
    %388 = arith.addf %384, %387 : vector<8x256xf32>
    %cst_166 = arith.constant 5.000000e-01 : f32
    %389 = vector.broadcast %cst_166 : f32 to vector<8x256xf32>
    %390 = arith.mulf %389, %388 : vector<8x256xf32>
    %cst_167 = arith.constant 4.471500e-02 : f32
    %391 = vector.broadcast %cst_167 : f32 to vector<8x256xf32>
    %392 = arith.mulf %391, %388 : vector<8x256xf32>
    %393 = arith.mulf %392, %388 : vector<8x256xf32>
    %394 = arith.mulf %393, %388 : vector<8x256xf32>
    %395 = arith.addf %388, %394 : vector<8x256xf32>
    %cst_168 = arith.constant 0.797884583 : f32
    %396 = vector.broadcast %cst_168 : f32 to vector<8x256xf32>
    %397 = arith.mulf %396, %395 : vector<8x256xf32>
    %398 = math.tanh %397 : vector<8x256xf32>
    %cst_169 = arith.constant 1.000000e+00 : f32
    %399 = vector.broadcast %cst_169 : f32 to vector<8x256xf32>
    %400 = arith.addf %399, %398 : vector<8x256xf32>
    %401 = arith.mulf %390, %400 : vector<8x256xf32>
    %402 = arith.truncf %401 : vector<8x256xf32> to vector<8x256xbf16>
    %c1_170 = arith.constant 1 : index
    %c0_171 = arith.constant 0 : index
    %c0_172 = arith.constant 0 : index
    %403 = vector.load %arg19[%c1_170, %c0_171, %c0_172] : memref<2x256x128xbf16, #tpu.memory_space<vmem>>, vector<1x256x128xbf16>
    %404 = vector.shape_cast %403 : vector<1x256x128xbf16> to vector<256x128xbf16>
    %cst_173 = arith.constant dense<0.000000e+00> : vector<8x128xf32>
    %405 = tpu.matmul %402, %404, %cst_173 {dimension_numbers = #tpu.dot_dimension_numbers<[1], [0], [0], [1], [0, 0, 1, 1], [], []>} : vector<8x256xbf16>, vector<256x128xbf16>, vector<8x128xf32> -> vector<8x128xf32>
    %c1_174 = arith.constant 1 : index
    %c0_175 = arith.constant 0 : index
    %c0_176 = arith.constant 0 : index
    %406 = vector.load %arg20[%c1_174, %c0_175, %c0_176] : memref<2x1x128xf32, #tpu.memory_space<vmem>>, vector<1x1x128xf32>
    %407 = vector.shape_cast %406 : vector<1x1x128xf32> to vector<1x128xf32>
    %408 = vector.broadcast %407 : vector<1x128xf32> to vector<8x128xf32>
    %409 = arith.addf %405, %408 : vector<8x128xf32>
    %410 = arith.addf %380, %409 : vector<8x128xf32>
    %c1_177 = arith.constant 1 : index
    %c0_178 = arith.constant 0 : index
    %c0_179 = arith.constant 0 : index
    %411 = vector.load %arg21[%c1_177, %c0_178, %c0_179] : memref<2x1x128xf32, #tpu.memory_space<vmem>>, vector<1x1x128xf32>
    %412 = vector.shape_cast %411 : vector<1x1x128xf32> to vector<1x128xf32>
    %c1_180 = arith.constant 1 : index
    %c0_181 = arith.constant 0 : index
    %c0_182 = arith.constant 0 : index
    %413 = vector.load %arg22[%c1_180, %c0_181, %c0_182] : memref<2x1x128xf32, #tpu.memory_space<vmem>>, vector<1x1x128xf32>
    %414 = vector.shape_cast %413 : vector<1x1x128xf32> to vector<1x128xf32>
    %cst_183 = arith.constant dense<0.000000e+00> : vector<8xf32>
    %415 = vector.multi_reduction <add>, %410, %cst_183 [1] : vector<8x128xf32> to vector<8xf32>
    %416 = vector.shape_cast %415 : vector<8xf32> to vector<8x1xf32>
    %cst_184 = arith.constant 1.280000e+02 : f32
    %417 = vector.broadcast %cst_184 : f32 to vector<8x1xf32>
    %418 = arith.divf %416, %417 : vector<8x1xf32>
    %419 = arith.mulf %410, %410 : vector<8x128xf32>
    %cst_185 = arith.constant dense<0.000000e+00> : vector<8xf32>
    %420 = vector.multi_reduction <add>, %419, %cst_185 [1] : vector<8x128xf32> to vector<8xf32>
    %421 = vector.shape_cast %420 : vector<8xf32> to vector<8x1xf32>
    %cst_186 = arith.constant 1.280000e+02 : f32
    %422 = vector.broadcast %cst_186 : f32 to vector<8x1xf32>
    %423 = arith.divf %421, %422 : vector<8x1xf32>
    %424 = arith.mulf %418, %418 : vector<8x1xf32>
    %425 = arith.subf %423, %424 : vector<8x1xf32>
    %426 = vector.broadcast %418 : vector<8x1xf32> to vector<8x128xf32>
    %427 = arith.subf %410, %426 : vector<8x128xf32>
    %cst_187 = arith.constant 9.99999996E-13 : f32
    %428 = vector.broadcast %cst_187 : f32 to vector<8x1xf32>
    %429 = arith.addf %425, %428 : vector<8x1xf32>
    %430 = math.rsqrt %429 : vector<8x1xf32>
    %431 = vector.broadcast %430 : vector<8x1xf32> to vector<8x128xf32>
    %432 = arith.mulf %427, %431 : vector<8x128xf32>
    %433 = vector.broadcast %412 : vector<1x128xf32> to vector<8x128xf32>
    %434 = arith.mulf %432, %433 : vector<8x128xf32>
    %435 = vector.broadcast %414 : vector<1x128xf32> to vector<8x128xf32>
    %436 = arith.addf %434, %435 : vector<8x128xf32>
    %437 = vector.extract_strided_slice %436 {offsets = [0, 0], sizes = [1, 128], strides = [1, 1]} : vector<8x128xf32> to vector<1x128xf32>
    %c0_188 = arith.constant 0 : index
    %c0_189 = arith.constant 0 : index
    %c0_190 = arith.constant 0 : index
    %438 = vector.load %arg23[%c0_188, %c0_189, %c0_190] : memref<1x1x128xf32, #tpu.memory_space<vmem>>, vector<1x1x128xf32>
    %439 = vector.shape_cast %438 : vector<1x1x128xf32> to vector<1x128xf32>
    %440 = vector.shape_cast %437 : vector<1x128xf32> to vector<1x1x128xf32>
    tpu.vector_store %arg23[%c0_188, %c0_189, %c0_190], %440 {strides = array<i32>} : memref<1x1x128xf32, #tpu.memory_space<vmem>>, vector<1x1x128xf32>,
    return
  }
  func.func @transform_0(%arg0: i32) -> (i32, i32, i32) {
    %c0_i32 = arith.constant 0 : i32
    %c0_i32_0 = arith.constant 0 : i32
    %c0_i32_1 = arith.constant 0 : i32
    return %arg0, %c0_i32, %c0_i32_0 : i32, i32, i32
  }
  func.func @transform_1(%arg0: i32) -> (i32, i32, i32) {
    %c0_i32 = arith.constant 0 : i32
    %c0_i32_0 = arith.constant 0 : i32
    %c0_i32_1 = arith.constant 0 : i32
    return %arg0, %c0_i32, %c0_i32_0 : i32, i32, i32
  }
  func.func @transform_2(%arg0: i32) -> (i32, i32) {
    %c0_i32 = arith.constant 0 : i32
    %c0_i32_0 = arith.constant 0 : i32
    %c0_i32_1 = arith.constant 0 : i32
    return %c0_i32, %c0_i32_0 : i32, i32
  }
  func.func @transform_3(%arg0: i32) -> (i32, i32) {
    %c0_i32 = arith.constant 0 : i32
    %c0_i32_0 = arith.constant 0 : i32
    %c0_i32_1 = arith.constant 0 : i32
    return %c0_i32, %c0_i32_0 : i32, i32
  }
  func.func @transform_4(%arg0: i32) -> (i32, i32) {
    %c0_i32 = arith.constant 0 : i32
    %c0_i32_0 = arith.constant 0 : i32
    %c0_i32_1 = arith.constant 0 : i32
    return %c0_i32, %c0_i32_0 : i32, i32
  }
  func.func @transform_5(%arg0: i32) -> (i32, i32) {
    %c0_i32 = arith.constant 0 : i32
    %c0_i32_0 = arith.constant 0 : i32
    %c0_i32_1 = arith.constant 0 : i32
    return %c0_i32, %c0_i32_0 : i32, i32
  }
  func.func @transform_6(%arg0: i32) -> (i32, i32, i32) {
    %c0_i32 = arith.constant 0 : i32
    %c0_i32_0 = arith.constant 0 : i32
    %c0_i32_1 = arith.constant 0 : i32
    %c0_i32_2 = arith.constant 0 : i32
    return %c0_i32, %c0_i32_0, %c0_i32_1 : i32, i32, i32
  }
  func.func @transform_7(%arg0: i32) -> (i32, i32, i32) {
    %c0_i32 = arith.constant 0 : i32
    %c0_i32_0 = arith.constant 0 : i32
    %c0_i32_1 = arith.constant 0 : i32
    %c0_i32_2 = arith.constant 0 : i32
    return %c0_i32, %c0_i32_0, %c0_i32_1 : i32, i32, i32
  }
  func.func @transform_8(%arg0: i32) -> (i32, i32, i32) {
    %c0_i32 = arith.constant 0 : i32
    %c0_i32_0 = arith.constant 0 : i32
    %c0_i32_1 = arith.constant 0 : i32
    %c0_i32_2 = arith.constant 0 : i32
    return %c0_i32, %c0_i32_0, %c0_i32_1 : i32, i32, i32
  }
  func.func @transform_9(%arg0: i32) -> (i32, i32, i32) {
    %c0_i32 = arith.constant 0 : i32
    %c0_i32_0 = arith.constant 0 : i32
    %c0_i32_1 = arith.constant 0 : i32
    %c0_i32_2 = arith.constant 0 : i32
    return %c0_i32, %c0_i32_0, %c0_i32_1 : i32, i32, i32
  }
  func.func @transform_10(%arg0: i32) -> (i32, i32, i32) {
    %c0_i32 = arith.constant 0 : i32
    %c0_i32_0 = arith.constant 0 : i32
    %c0_i32_1 = arith.constant 0 : i32
    %c0_i32_2 = arith.constant 0 : i32
    return %c0_i32, %c0_i32_0, %c0_i32_1 : i32, i32, i32
  }
  func.func @transform_11(%arg0: i32) -> (i32, i32, i32) {
    %c0_i32 = arith.constant 0 : i32
    %c0_i32_0 = arith.constant 0 : i32
    %c0_i32_1 = arith.constant 0 : i32
    %c0_i32_2 = arith.constant 0 : i32
    return %c0_i32, %c0_i32_0, %c0_i32_1 : i32, i32, i32
  }
  func.func @transform_12(%arg0: i32) -> (i32, i32, i32) {
    %c0_i32 = arith.constant 0 : i32
    %c0_i32_0 = arith.constant 0 : i32
    %c0_i32_1 = arith.constant 0 : i32
    %c0_i32_2 = arith.constant 0 : i32
    return %c0_i32, %c0_i32_0, %c0_i32_1 : i32, i32, i32
  }
  func.func @transform_13(%arg0: i32) -> (i32, i32, i32) {
    %c0_i32 = arith.constant 0 : i32
    %c0_i32_0 = arith.constant 0 : i32
    %c0_i32_1 = arith.constant 0 : i32
    %c0_i32_2 = arith.constant 0 : i32
    return %c0_i32, %c0_i32_0, %c0_i32_1 : i32, i32, i32
  }
  func.func @transform_14(%arg0: i32) -> (i32, i32, i32) {
    %c0_i32 = arith.constant 0 : i32
    %c0_i32_0 = arith.constant 0 : i32
    %c0_i32_1 = arith.constant 0 : i32
    %c0_i32_2 = arith.constant 0 : i32
    return %c0_i32, %c0_i32_0, %c0_i32_1 : i32, i32, i32
  }
  func.func @transform_15(%arg0: i32) -> (i32, i32, i32) {
    %c0_i32 = arith.constant 0 : i32
    %c0_i32_0 = arith.constant 0 : i32
    %c0_i32_1 = arith.constant 0 : i32
    %c0_i32_2 = arith.constant 0 : i32
    return %c0_i32, %c0_i32_0, %c0_i32_1 : i32, i32, i32
  }
  func.func @transform_16(%arg0: i32) -> (i32, i32, i32) {
    %c0_i32 = arith.constant 0 : i32
    %c0_i32_0 = arith.constant 0 : i32
    %c0_i32_1 = arith.constant 0 : i32
    %c0_i32_2 = arith.constant 0 : i32
    return %c0_i32, %c0_i32_0, %c0_i32_1 : i32, i32, i32
  }
  func.func @transform_17(%arg0: i32) -> (i32, i32, i32) {
    %c0_i32 = arith.constant 0 : i32
    %c0_i32_0 = arith.constant 0 : i32
    %c0_i32_1 = arith.constant 0 : i32
    %c0_i32_2 = arith.constant 0 : i32
    return %c0_i32, %c0_i32_0, %c0_i32_1 : i32, i32, i32
  }
  func.func @transform_18(%arg0: i32) -> (i32, i32, i32) {
    %c0_i32 = arith.constant 0 : i32
    %c0_i32_0 = arith.constant 0 : i32
    %c0_i32_1 = arith.constant 0 : i32
    %c0_i32_2 = arith.constant 0 : i32
    return %c0_i32, %c0_i32_0, %c0_i32_1 : i32, i32, i32
  }
  func.func @transform_19(%arg0: i32) -> (i32, i32, i32) {
    %c0_i32 = arith.constant 0 : i32
    %c0_i32_0 = arith.constant 0 : i32
    %c0_i32_1 = arith.constant 0 : i32
    %c0_i32_2 = arith.constant 0 : i32
    return %c0_i32, %c0_i32_0, %c0_i32_1 : i32, i32, i32
  }
  func.func @transform_20(%arg0: i32) -> (i32, i32, i32) {
    %c0_i32 = arith.constant 0 : i32
    %c0_i32_0 = arith.constant 0 : i32
    %c0_i32_1 = arith.constant 0 : i32
    %c0_i32_2 = arith.constant 0 : i32
    return %c0_i32, %c0_i32_0, %c0_i32_1 : i32, i32, i32
  }
  func.func @transform_21(%arg0: i32) -> (i32, i32, i32) {
    %c0_i32 = arith.constant 0 : i32
    %c0_i32_0 = arith.constant 0 : i32
    %c0_i32_1 = arith.constant 0 : i32
    %c0_i32_2 = arith.constant 0 : i32
    return %c0_i32, %c0_i32_0, %c0_i32_1 : i32, i32, i32
  }
  func.func @transform_22(%arg0: i32) -> (i32, i32, i32) {
    %c0_i32 = arith.constant 0 : i32
    %c0_i32_0 = arith.constant 0 : i32
    %c0_i32_1 = arith.constant 0 : i32
    return %arg0, %c0_i32, %c0_i32_0 : i32, i32, i32
  }
}

</mosaic_0001>

<llo_original>
// kernel: bioclinical_bert_ft_forward.1
$region0: #{bioclinical_bert_ft_forward.1}
  #allocation0 [shape = 'u32[]', space=smem, size = 0x4, offset = 0x4, fixed_abs, tag = 'smem constant byte address 0x4 - core index']
  #allocation1 [shape = 'u32[144,128]{1,0:T(1,128)}', space=vmem, size = 0x12000, scoped, tag = 'internal scratch']
  %s0 = inlined_call_operand.vmem [shape: f32[2,1,8], index: 0, kind: input, shape index: {}]
  %s1 = inlined_call_operand.vmem [shape: f32[2,8,128], index: 1, kind: input, shape index: {}]
  %s2 = inlined_call_operand.vmem [shape: f32[8,128], index: 2, kind: input, shape index: {}]
  %s3 = inlined_call_operand.vmem [shape: f32[1,128], index: 3, kind: input, shape index: {}]
  %s4 = inlined_call_operand.vmem [shape: f32[1,128], index: 4, kind: input, shape index: {}]
  %s5 = inlined_call_operand.vmem [shape: f32[1,128], index: 5, kind: input, shape index: {}]
  %s6 = inlined_call_operand.vmem [shape: bf16[2,128,128], index: 6, kind: input, shape index: {}]
  %s7 = inlined_call_operand.vmem [shape: f32[2,1,128], index: 7, kind: input, shape index: {}]
  %s8 = inlined_call_operand.hbm [shape: bf16[2,128,128], index: 8, kind: input, shape index: {}]
  %s9 = inlined_call_operand.vmem [shape: f32[2,1,128], index: 9, kind: input, shape index: {}]
  %s10 = inlined_call_operand.hbm [shape: bf16[2,128,128], index: 10, kind: input, shape index: {}]
  %s11 = inlined_call_operand.vmem [shape: f32[2,1,128], index: 11, kind: input, shape index: {}]
  %s12 = inlined_call_operand.hbm [shape: bf16[2,128,128], index: 12, kind: input, shape index: {}]
  %s13 = inlined_call_operand.vmem [shape: f32[2,1,128], index: 13, kind: input, shape index: {}]
  %s14 = inlined_call_operand.vmem [shape: f32[2,1,128], index: 14, kind: input, shape index: {}]
  %s15 = inlined_call_operand.vmem [shape: f32[2,1,128], index: 15, kind: input, shape index: {}]
  %s16 = inlined_call_operand.hbm [shape: bf16[2,128,256], index: 16, kind: input, shape index: {}]
  %s17 = inlined_call_operand.vmem [shape: f32[2,1,256], index: 17, kind: input, shape index: {}]
  %s18 = inlined_call_operand.hbm [shape: bf16[2,256,128], index: 18, kind: input, shape index: {}]
  %s19 = inlined_call_operand.vmem [shape: f32[2,1,128], index: 19, kind: input, shape index: {}]
  %s20 = inlined_call_operand.vmem [shape: f32[2,1,128], index: 20, kind: input, shape index: {}]
  %s21 = inlined_call_operand.vmem [shape: f32[2,1,128], index: 21, kind: input, shape index: {}]
  %s22 = inlined_call_operand.hbm [shape: f32[2,1,128], index: 22, kind: output, shape index: {}]
  %s23 = sld [smem:[#allocation0]]
  $region141: #{bioclinical_bert_ft_forward.1} parent=0
    _
  %s25 = ssub.s32 1, %s23
  %s26 = scalar_select 0, %s25, %s23
  $region1: #{bioclinical_bert_ft_forward.1} parent=0
    #allocation2 [shape = 'u8[65536]{0}', space=vmem, size = 0x10000, scoped, tag = 'input window, operand 8, single buffered']
    #allocation3 [shape = 's32[2]{0}', space=sflag, size = 0x8, scoped, tag = 'scoped memory for bioclinical_bert_ft_forward.1']
    #allocation4 [shape = 's32[2]{0}', space=sflag, size = 0x8, scoped, tag = 'scoped memory for bioclinical_bert_ft_forward.1']
    #allocation5 [shape = 'u8[65536]{0}', space=vmem, size = 0x10000, scoped, tag = 'input window, operand 10, single buffered']
    #allocation6 [shape = 's32[1]{0}', space=sflag, size = 0x4, scoped, tag = 'scoped memory for bioclinical_bert_ft_forward.1']
    #allocation7 [shape = 'u8[65536]{0}', space=vmem, size = 0x10000, scoped, tag = 'input window, operand 12, single buffered']
    #allocation8 [shape = 'u8[131072]{0}', space=vmem, size = 0x20000, scoped, tag = 'input window, operand 16, single buffered']
    #allocation9 [shape = 's32[1]{0}', space=sflag, size = 0x4, scoped, tag = 'scoped memory for bioclinical_bert_ft_forward.1']
    #allocation10 [shape = 'u8[131072]{0}', space=vmem, size = 0x20000, scoped, tag = 'input window, operand 18, single buffered']
    #allocation11 [shape = 'u8[1024]{0}', space=vmem, size = 0x400, scoped, tag = 'output window, operand 0']
    %27 = vsyncpa [#allocation3], 0
    %28 = vsyncpa [#allocation6], 0
    %29 = vsyncpa [#allocation9], 0
    %30 = vsyncpa [#allocation4], 0
    %s31 = scalar_lea.sflag [#allocation4], 1
    %32 = vsyncpa %s31, 0
    loop: start=0, step=1, limit=4
    $region2: #{bioclinical_bert_ft_forward.1} parent=1 // loop_pre_header
      _
    $region3: #{bioclinical_bert_ft_forward.1} parent=1 // loop_header
      %s34 = sphi 0, %s38
      %p35 = scmp.ge.s32.totalorder %s34, 4
      %s44 = sphi 0, %s46
      %s47 = sphi 0, %s44
      %s48 = sphi 0, %s47
      %s64 = sphi 0, %s48
      %s70 = sphi 0, %s72
      %s73 = sphi 0, %s70
      %s74 = sphi 0, %s73
      %s90 = sphi 0, %s74
      %s94 = sphi 0, %s94
      %s96 = sphi 0, %s94
      %s97 = sphi 0, %s96
      %s111 = sphi 0, %s97
      %s115 = sphi 0, %s115
      %s117 = sphi 0, %s115
      %s118 = sphi 0, %s117
      %s132 = sphi 0, %s118
      %s136 = sphi 0, %s136
      %s138 = sphi 0, %s136
      %s139 = sphi 0, %s138
      %s153 = sphi 0, %s139
      %s157 = sphi 0, %s157
      %s159 = sphi 0, %s157
      %s160 = sphi 0, %s159
      %s174 = sphi 0, %s160
      %s178 = sphi 0, %s178
      %s180 = sphi 0, %s178
      %s181 = sphi 0, %s180
      %s195 = sphi 0, %s181
      %s199 = sphi 0, %s199
      %s201 = sphi 0, %s199
      %s202 = sphi 0, %s201
      %s216 = sphi 0, %s202
      %s220 = sphi 0, %s220
      %s222 = sphi 0, %s220
      %s223 = sphi 0, %s222
      %s237 = sphi 0, %s223
      %s241 = sphi 0, %s241
      %s243 = sphi 0, %s241
      %s244 = sphi 0, %s243
      %s258 = sphi 0, %s244
      %s262 = sphi 0, %s262
      %s264 = sphi 0, %s262
      %s265 = sphi 0, %s264
      %s279 = sphi 0, %s265
      %s283 = sphi 0, %s283
      %s285 = sphi 0, %s283
      %s286 = sphi 0, %s285
      %s300 = sphi 0, %s286
      %s304 = sphi 0, %s304
      %s306 = sphi 0, %s304
      %s307 = sphi 0, %s306
      %s321 = sphi 0, %s307
      %s325 = sphi 0, %s325
      %s327 = sphi 0, %s325
      %s328 = sphi 0, %s327
      %s342 = sphi 0, %s328
      %s346 = sphi 0, %s346
      %s348 = sphi 0, %s346
      %s349 = sphi 0, %s348
      %s363 = sphi 0, %s349
      %s367 = sphi 0, %s367
      %s369 = sphi 0, %s367
      %s370 = sphi 0, %s369
      %s384 = sphi 0, %s370
      %s388 = sphi 0, %s388
      %s390 = sphi 0, %s388
      %s391 = sphi 0, %s390
      %s405 = sphi 0, %s391
      %s409 = sphi 0, %s409
      %s411 = sphi 0, %s409
      %s412 = sphi 0, %s411
      %s426 = sphi 0, %s412
      %s430 = sphi 0, %s430
      %s432 = sphi 0, %s430
      %s433 = sphi 0, %s432
      %s447 = sphi 0, %s433
      %s451 = sphi 0, %s451
      %s453 = sphi 0, %s451
      %s454 = sphi 0, %s453
      %s468 = sphi 0, %s454
      %s472 = sphi 0, %s472
      %s474 = sphi 0, %s472
      %s475 = sphi 0, %s474
      %s489 = sphi 0, %s475
      %s493 = sphi 0, %s493
      %s495 = sphi 0, %s493
      %s496 = sphi 0, %s495
      %s510 = sphi 0, %s496
      %s516 = sphi 0, %s518
      %s519 = sphi 0, %s516
      %s520 = sphi 0, %s519
      %s536 = sphi 0, %s520
    $region4: #{bioclinical_bert_ft_forward.1} parent=1 // loop_header_branch
      %37 = sbr.rel (%p35) target = $region8
    $region5: #{bioclinical_bert_ft_forward.1} parent=1 // loop_body
      %s39 = ssub.s32 %s34, 1
      %s40 = ssub.s32 %s34, 2
      %s41 = sadd.s32 %s34, 1
      %s42 = ssub.s32 %s34, %s41
      %p43 = scmp.eq.s32.totalorder %s42, 0
      %s45 = sadd.s32 %s44, 1
      %s46 = scalar_select %p43, %s44, %s45
      %p49 = pneg %p43
      %p50 = scmp.eq.s32.totalorder %s34, 1
      %p51 = por %p49, %p50
      %p52 = scmp.ne.s32.totalorder %s44, %s47
      %p53 = scmp.eq.s32.totalorder %s34, 0
      %p54 = por %p52, %p53
      %p55 = scmp.ne.s32.totalorder %s44, %s47
      %p56 = scmp.eq.s32.totalorder %s39, 1
      %p57 = por %p55, %p56
      %p58 = scmp.ne.s32.totalorder %s47, %s48
      %p59 = scmp.eq.s32.totalorder %s39, 0
      %p60 = por %p58, %p59
      %p61 = scmp.ne.s32.totalorder %s47, %s48
      %p62 = scmp.eq.s32.totalorder %s40, 1
      %p63 = por %p61, %p62
      %p65 = scmp.ne.s32.totalorder %s48, %s64
      %p66 = scmp.eq.s32.totalorder %s40, 0
      %p67 = por %p65, %p66
      %s68 = ssub.s32 %s34, %s41
      %p69 = scmp.eq.s32.totalorder %s68, 0
      %s71 = sadd.s32 %s70, 1
      %s72 = scalar_select %p69, %s70, %s71
      %p75 = pneg %p69
      %p76 = scmp.eq.s32.totalorder %s34, 1
      %p77 = por %p75, %p76
      %p78 = scmp.ne.s32.totalorder %s70, %s73
      %p79 = scmp.eq.s32.totalorder %s34, 0
      %p80 = por %p78, %p79
      %p81 = scmp.ne.s32.totalorder %s70, %s73
      %p82 = scmp.eq.s32.totalorder %s39, 1
      %p83 = por %p81, %p82
      %p84 = scmp.ne.s32.totalorder %s73, %s74
      %p85 = scmp.eq.s32.totalorder %s39, 0
      %p86 = por %p84, %p85
      %p87 = scmp.ne.s32.totalorder %s73, %s74
      %p88 = scmp.eq.s32.totalorder %s40, 1
      %p89 = por %p87, %p88
      %p91 = scmp.ne.s32.totalorder %s74, %s90
      %p92 = scmp.eq.s32.totalorder %s40, 0
      %p93 = por %p91, %p92
      %s95 = sadd.s32 %s94, 1
      %p98 = scmp.eq.s32.totalorder %s34, 1
      %p99 = scmp.ne.s32.totalorder %s94, %s96
      %p100 = scmp.eq.s32.totalorder %s34, 0
      %p101 = por %p99, %p100
      %p102 = scmp.ne.s32.totalorder %s94, %s96
      %p103 = scmp.eq.s32.totalorder %s39, 1
      %p104 = por %p102, %p103
      %p105 = scmp.ne.s32.totalorder %s96, %s97
      %p106 = scmp.eq.s32.totalorder %s39, 0
      %p107 = por %p105, %p106
      %p108 = scmp.ne.s32.totalorder %s96, %s97
      %p109 = scmp.eq.s32.totalorder %s40, 1
      %p110 = por %p108, %p109
      %p112 = scmp.ne.s32.totalorder %s97, %s111
      %p113 = scmp.eq.s32.totalorder %s40, 0
      %p114 = por %p112, %p113
      %s116 = sadd.s32 %s115, 1
      %p119 = scmp.eq.s32.totalorder %s34, 1
      %p120 = scmp.ne.s32.totalorder %s115, %s117
      %p121 = scmp.eq.s32.totalorder %s34, 0
      %p122 = por %p120, %p121
      %p123 = scmp.ne.s32.totalorder %s115, %s117
      %p124 = scmp.eq.s32.totalorder %s39, 1
      %p125 = por %p123, %p124
      %p126 = scmp.ne.s32.totalorder %s117, %s118
      %p127 = scmp.eq.s32.totalorder %s39, 0
      %p128 = por %p126, %p127
      %p129 = scmp.ne.s32.totalorder %s117, %s118
      %p130 = scmp.eq.s32.totalorder %s40, 1
      %p131 = por %p129, %p130
      %p133 = scmp.ne.s32.totalorder %s118, %s132
      %p134 = scmp.eq.s32.totalorder %s40, 0
      %p135 = por %p133, %p134
      %s137 = sadd.s32 %s136, 1
      %p140 = scmp.eq.s32.totalorder %s34, 1
      %p141 = scmp.ne.s32.totalorder %s136, %s138
      %p142 = scmp.eq.s32.totalorder %s34, 0
      %p143 = por %p141, %p142
      %p144 = scmp.ne.s32.totalorder %s136, %s138
      %p145 = scmp.eq.s32.totalorder %s39, 1
      %p146 = por %p144, %p145
      %p147 = scmp.ne.s32.totalorder %s138, %s139
      %p148 = scmp.eq.s32.totalorder %s39, 0
      %p149 = por %p147, %p148
      %p150 = scmp.ne.s32.totalorder %s138, %s139
      %p151 = scmp.eq.s32.totalorder %s40, 1
      %p152 = por %p150, %p151
      %p154 = scmp.ne.s32.totalorder %s139, %s153
      %p155 = scmp.eq.s32.totalorder %s40, 0
      %p156 = por %p154, %p155
      %s158 = sadd.s32 %s157, 1
      %p161 = scmp.eq.s32.totalorder %s34, 1
      %p162 = scmp.ne.s32.totalorder %s157, %s159
      %p163 = scmp.eq.s32.totalorder %s34, 0
      %p164 = por %p162, %p163
      %p165 = scmp.ne.s32.totalorder %s157, %s159
      %p166 = scmp.eq.s32.totalorder %s39, 1
      %p167 = por %p165, %p166
      %p168 = scmp.ne.s32.totalorder %s159, %s160
      %p169 = scmp.eq.s32.totalorder %s39, 0
      %p170 = por %p168, %p169
      %p171 = scmp.ne.s32.totalorder %s159, %s160
      %p172 = scmp.eq.s32.totalorder %s40, 1
      %p173 = por %p171, %p172
      %p175 = scmp.ne.s32.totalorder %s160, %s174
      %p176 = scmp.eq.s32.totalorder %s40, 0
      %p177 = por %p175, %p176
      %s179 = sadd.s32 %s178, 1
      %p182 = scmp.eq.s32.totalorder %s34, 1
      %p183 = scmp.ne.s32.totalorder %s178, %s180
      %p184 = scmp.eq.s32.totalorder %s34, 0
      %p185 = por %p183, %p184
      %p186 = scmp.ne.s32.totalorder %s178, %s180
      %p187 = scmp.eq.s32.totalorder %s39, 1
      %p188 = por %p186, %p187
      %p189 = scmp.ne.s32.totalorder %s180, %s181
      %p190 = scmp.eq.s32.totalorder %s39, 0
      %p191 = por %p189, %p190
      %p192 = scmp.ne.s32.totalorder %s180, %s181
      %p193 = scmp.eq.s32.totalorder %s40, 1
      %p194 = por %p192, %p193
      %p196 = scmp.ne.s32.totalorder %s181, %s195
      %p197 = scmp.eq.s32.totalorder %s40, 0
      %p198 = por %p196, %p197
      %s200 = sadd.s32 %s199, 1
      %p203 = scmp.eq.s32.totalorder %s34, 1
      %p204 = scmp.ne.s32.totalorder %s199, %s201
      %p205 = scmp.eq.s32.totalorder %s34, 0
      %p206 = por %p204, %p205
      %p207 = scmp.ne.s32.totalorder %s199, %s201
      %p208 = scmp.eq.s32.totalorder %s39, 1
      %p209 = por %p207, %p208
      %p210 = scmp.ne.s32.totalorder %s201, %s202
      %p211 = scmp.eq.s32.totalorder %s39, 0
      %p212 = por %p210, %p211
      %p213 = scmp.ne.s32.totalorder %s201, %s202
      %p214 = scmp.eq.s32.totalorder %s40, 1
      %p215 = por %p213, %p214
      %p217 = scmp.ne.s32.totalorder %s202, %s216
      %p218 = scmp.eq.s32.totalorder %s40, 0
      %p219 = por %p217, %p218
      %s221 = sadd.s32 %s220, 1
      %p224 = scmp.eq.s32.totalorder %s34, 1
      %p225 = scmp.ne.s32.totalorder %s220, %s222
      %p226 = scmp.eq.s32.totalorder %s34, 0
      %p227 = por %p225, %p226
      %p228 = scmp.ne.s32.totalorder %s220, %s222
      %p229 = scmp.eq.s32.totalorder %s39, 1
      %p230 = por %p228, %p229
      %p231 = scmp.ne.s32.totalorder %s222, %s223
      %p232 = scmp.eq.s32.totalorder %s39, 0
      %p233 = por %p231, %p232
      %p234 = scmp.ne.s32.totalorder %s222, %s223
      %p235 = scmp.eq.s32.totalorder %s40, 1
      %p236 = por %p234, %p235
      %p238 = scmp.ne.s32.totalorder %s223, %s237
      %p239 = scmp.eq.s32.totalorder %s40, 0
      %p240 = por %p238, %p239
      %s242 = sadd.s32 %s241, 1
      %p245 = scmp.eq.s32.totalorder %s34, 1
      %p246 = scmp.ne.s32.totalorder %s241, %s243
      %p247 = scmp.eq.s32.totalorder %s34, 0
      %p248 = por %p246, %p247
      %p249 = scmp.ne.s32.totalorder %s241, %s243
      %p250 = scmp.eq.s32.totalorder %s39, 1
      %p251 = por %p249, %p250
      %p252 = scmp.ne.s32.totalorder %s243, %s244
      %p253 = scmp.eq.s32.totalorder %s39, 0
      %p254 = por %p252, %p253
      %p255 = scmp.ne.s32.totalorder %s243, %s244
      %p256 = scmp.eq.s32.totalorder %s40, 1
      %p257 = por %p255, %p256
      %p259 = scmp.ne.s32.totalorder %s244, %s258
      %p260 = scmp.eq.s32.totalorder %s40, 0
      %p261 = por %p259, %p260
      %s263 = sadd.s32 %s262, 1
      %p266 = scmp.eq.s32.totalorder %s34, 1
      %p267 = scmp.ne.s32.totalorder %s262, %s264
      %p268 = scmp.eq.s32.totalorder %s34, 0
      %p269 = por %p267, %p268
      %p270 = scmp.ne.s32.totalorder %s262, %s264
      %p271 = scmp.eq.s32.totalorder %s39, 1
      %p272 = por %p270, %p271
      %p273 = scmp.ne.s32.totalorder %s264, %s265
      %p274 = scmp.eq.s32.totalorder %s39, 0
      %p275 = por %p273, %p274
      %p276 = scmp.ne.s32.totalorder %s264, %s265
      %p277 = scmp.eq.s32.totalorder %s40, 1
      %p278 = por %p276, %p277
      %p280 = scmp.ne.s32.totalorder %s265, %s279
      %p281 = scmp.eq.s32.totalorder %s40, 0
      %p282 = por %p280, %p281
      %s284 = sadd.s32 %s283, 1
      %p287 = scmp.eq.s32.totalorder %s34, 1
      %p288 = scmp.ne.s32.totalorder %s283, %s285
      %p289 = scmp.eq.s32.totalorder %s34, 0
      %p290 = por %p288, %p289
      %p291 = scmp.ne.s32.totalorder %s283, %s285
      %p292 = scmp.eq.s32.totalorder %s39, 1
      %p293 = por %p291, %p292
      %p294 = scmp.ne.s32.totalorder %s285, %s286
      %p295 = scmp.eq.s32.totalorder %s39, 0
      %p296 = por %p294, %p295
      %p297 = scmp.ne.s32.totalorder %s285, %s286
      %p298 = scmp.eq.s32.totalorder %s40, 1
      %p299 = por %p297, %p298
      %p301 = scmp.ne.s32.totalorder %s286, %s300
      %p302 = scmp.eq.s32.totalorder %s40, 0
      %p303 = por %p301, %p302
      %s305 = sadd.s32 %s304, 1
      %p308 = scmp.eq.s32.totalorder %s34, 1
      %p309 = scmp.ne.s32.totalorder %s304, %s306
      %p310 = scmp.eq.s32.totalorder %s34, 0
      %p311 = por %p309, %p310
      %p312 = scmp.ne.s32.totalorder %s304, %s306
      %p313 = scmp.eq.s32.totalorder %s39, 1
      %p314 = por %p312, %p313
      %p315 = scmp.ne.s32.totalorder %s306, %s307
      %p316 = scmp.eq.s32.totalorder %s39, 0
      %p317 = por %p315, %p316
      %p318 = scmp.ne.s32.totalorder %s306, %s307
      %p319 = scmp.eq.s32.totalorder %s40, 1
      %p320 = por %p318, %p319
      %p322 = scmp.ne.s32.totalorder %s307, %s321
      %p323 = scmp.eq.s32.totalorder %s40, 0
      %p324 = por %p322, %p323
      %s326 = sadd.s32 %s325, 1
      %p329 = scmp.eq.s32.totalorder %s34, 1
      %p330 = scmp.ne.s32.totalorder %s325, %s327
      %p331 = scmp.eq.s32.totalorder %s34, 0
      %p332 = por %p330, %p331
      %p333 = scmp.ne.s32.totalorder %s325, %s327
      %p334 = scmp.eq.s32.totalorder %s39, 1
      %p335 = por %p333, %p334
      %p336 = scmp.ne.s32.totalorder %s327, %s328
      %p337 = scmp.eq.s32.totalorder %s39, 0
      %p338 = por %p336, %p337
      %p339 = scmp.ne.s32.totalorder %s327, %s328
      %p340 = scmp.eq.s32.totalorder %s40, 1
      %p341 = por %p339, %p340
      %p343 = scmp.ne.s32.totalorder %s328, %s342
      %p344 = scmp.eq.s32.totalorder %s40, 0
      %p345 = por %p343, %p344
      %s347 = sadd.s32 %s346, 1
      %p350 = scmp.eq.s32.totalorder %s34, 1
      %p351 = scmp.ne.s32.totalorder %s346, %s348
      %p352 = scmp.eq.s32.totalorder %s34, 0
      %p353 = por %p351, %p352
      %p354 = scmp.ne.s32.totalorder %s346, %s348
      %p355 = scmp.eq.s32.totalorder %s39, 1
      %p356 = por %p354, %p355
      %p357 = scmp.ne.s32.totalorder %s348, %s349
      %p358 = scmp.eq.s32.totalorder %s39, 0
      %p359 = por %p357, %p358
      %p360 = scmp.ne.s32.totalorder %s348, %s349
      %p361 = scmp.eq.s32.totalorder %s40, 1
      %p362 = por %p360, %p361
      %p364 = scmp.ne.s32.totalorder %s349, %s363
      %p365 = scmp.eq.s32.totalorder %s40, 0
      %p366 = por %p364, %p365
      %s368 = sadd.s32 %s367, 1
      %p371 = scmp.eq.s32.totalorder %s34, 1
      %p372 = scmp.ne.s32.totalorder %s367, %s369
      %p373 = scmp.eq.s32.totalorder %s34, 0
      %p374 = por %p372, %p373
      %p375 = scmp.ne.s32.totalorder %s367, %s369
      %p376 = scmp.eq.s32.totalorder %s39, 1
      %p377 = por %p375, %p376
      %p378 = scmp.ne.s32.totalorder %s369, %s370
      %p379 = scmp.eq.s32.totalorder %s39, 0
      %p380 = por %p378, %p379
      %p381 = scmp.ne.s32.totalorder %s369, %s370
      %p382 = scmp.eq.s32.totalorder %s40, 1
      %p383 = por %p381, %p382
      %p385 = scmp.ne.s32.totalorder %s370, %s384
      %p386 = scmp.eq.s32.totalorder %s40, 0
      %p387 = por %p385, %p386
      %s389 = sadd.s32 %s388, 1
      %p392 = scmp.eq.s32.totalorder %s34, 1
      %p393 = scmp.ne.s32.totalorder %s388, %s390
      %p394 = scmp.eq.s32.totalorder %s34, 0
      %p395 = por %p393, %p394
      %p396 = scmp.ne.s32.totalorder %s388, %s390
      %p397 = scmp.eq.s32.totalorder %s39, 1
      %p398 = por %p396, %p397
      %p399 = scmp.ne.s32.totalorder %s390, %s391
      %p400 = scmp.eq.s32.totalorder %s39, 0
      %p401 = por %p399, %p400
      %p402 = scmp.ne.s32.totalorder %s390, %s391
      %p403 = scmp.eq.s32.totalorder %s40, 1
      %p404 = por %p402, %p403
      %p406 = scmp.ne.s32.totalorder %s391, %s405
      %p407 = scmp.eq.s32.totalorder %s40, 0
      %p408 = por %p406, %p407
      %s410 = sadd.s32 %s409, 1
      %p413 = scmp.eq.s32.totalorder %s34, 1
      %p414 = scmp.ne.s32.totalorder %s409, %s411
      %p415 = scmp.eq.s32.totalorder %s34, 0
      %p416 = por %p414, %p415
      %p417 = scmp.ne.s32.totalorder %s409, %s411
      %p418 = scmp.eq.s32.totalorder %s39, 1
      %p419 = por %p417, %p418
      %p420 = scmp.ne.s32.totalorder %s411, %s412
      %p421 = scmp.eq.s32.totalorder %s39, 0
      %p422 = por %p420, %p421
      %p423 = scmp.ne.s32.totalorder %s411, %s412
      %p424 = scmp.eq.s32.totalorder %s40, 1
      %p425 = por %p423, %p424
      %p427 = scmp.ne.s32.totalorder %s412, %s426
      %p428 = scmp.eq.s32.totalorder %s40, 0
      %p429 = por %p427, %p428
      %s431 = sadd.s32 %s430, 1
      %p434 = scmp.eq.s32.totalorder %s34, 1
      %p435 = scmp.ne.s32.totalorder %s430, %s432
      %p436 = scmp.eq.s32.totalorder %s34, 0
      %p437 = por %p435, %p436
      %p438 = scmp.ne.s32.totalorder %s430, %s432
      %p439 = scmp.eq.s32.totalorder %s39, 1
      %p440 = por %p438, %p439
      %p441 = scmp.ne.s32.totalorder %s432, %s433
      %p442 = scmp.eq.s32.totalorder %s39, 0
      %p443 = por %p441, %p442
      %p444 = scmp.ne.s32.totalorder %s432, %s433
      %p445 = scmp.eq.s32.totalorder %s40, 1
      %p446 = por %p444, %p445
      %p448 = scmp.ne.s32.totalorder %s433, %s447
      %p449 = scmp.eq.s32.totalorder %s40, 0
      %p450 = por %p448, %p449
      %s452 = sadd.s32 %s451, 1
      %p455 = scmp.eq.s32.totalorder %s34, 1
      %p456 = scmp.ne.s32.totalorder %s451, %s453
      %p457 = scmp.eq.s32.totalorder %s34, 0
      %p458 = por %p456, %p457
      %p459 = scmp.ne.s32.totalorder %s451, %s453
      %p460 = scmp.eq.s32.totalorder %s39, 1
      %p461 = por %p459, %p460
      %p462 = scmp.ne.s32.totalorder %s453, %s454
      %p463 = scmp.eq.s32.totalorder %s39, 0
      %p464 = por %p462, %p463
      %p465 = scmp.ne.s32.totalorder %s453, %s454
      %p466 = scmp.eq.s32.totalorder %s40, 1
      %p467 = por %p465, %p466
      %p469 = scmp.ne.s32.totalorder %s454, %s468
      %p470 = scmp.eq.s32.totalorder %s40, 0
      %p471 = por %p469, %p470
      %s473 = sadd.s32 %s472, 1
      %p476 = scmp.eq.s32.totalorder %s34, 1
      %p477 = scmp.ne.s32.totalorder %s472, %s474
      %p478 = scmp.eq.s32.totalorder %s34, 0
      %p479 = por %p477, %p478
      %p480 = scmp.ne.s32.totalorder %s472, %s474
      %p481 = scmp.eq.s32.totalorder %s39, 1
      %p482 = por %p480, %p481
      %p483 = scmp.ne.s32.totalorder %s474, %s475
      %p484 = scmp.eq.s32.totalorder %s39, 0
      %p485 = por %p483, %p484
      %p486 = scmp.ne.s32.totalorder %s474, %s475
      %p487 = scmp.eq.s32.totalorder %s40, 1
      %p488 = por %p486, %p487
      %p490 = scmp.ne.s32.totalorder %s475, %s489
      %p491 = scmp.eq.s32.totalorder %s40, 0
      %p492 = por %p490, %p491
      %s494 = sadd.s32 %s493, 1
      %p497 = scmp.eq.s32.totalorder %s34, 1
      %p498 = scmp.ne.s32.totalorder %s493, %s495
      %p499 = scmp.eq.s32.totalorder %s34, 0
      %p500 = por %p498, %p499
      %p501 = scmp.ne.s32.totalorder %s493, %s495
      %p502 = scmp.eq.s32.totalorder %s39, 1
      %p503 = por %p501, %p502
      %p504 = scmp.ne.s32.totalorder %s495, %s496
      %p505 = scmp.eq.s32.totalorder %s39, 0
      %p506 = por %p504, %p505
      %p507 = scmp.ne.s32.totalorder %s495, %s496
      %p508 = scmp.eq.s32.totalorder %s40, 1
      %p509 = por %p507, %p508
      %p511 = scmp.ne.s32.totalorder %s496, %s510
      %p512 = scmp.eq.s32.totalorder %s40, 0
      %p513 = por %p511, %p512
      %s514 = ssub.s32 %s34, %s41
      %p515 = scmp.eq.s32.totalorder %s514, 0
      %s517 = sadd.s32 %s516, 1
      %s518 = scalar_select %p515, %s516, %s517
      %p521 = pneg %p515
      %p522 = scmp.eq.s32.totalorder %s34, 1
      %p523 = por %p521, %p522
      %p524 = scmp.ne.s32.totalorder %s516, %s519
      %p525 = scmp.eq.s32.totalorder %s34, 0
      %p526 = por %p524, %p525
      %p527 = scmp.ne.s32.totalorder %s516, %s519
      %p528 = scmp.eq.s32.totalorder %s39, 1
      %p529 = por %p527, %p528
      %p530 = scmp.ne.s32.totalorder %s519, %s520
      %p531 = scmp.eq.s32.totalorder %s39, 0
      %p532 = por %p530, %p531
      %p533 = scmp.ne.s32.totalorder %s519, %s520
      %p534 = scmp.eq.s32.totalorder %s40, 1
      %p535 = por %p533, %p534
      %p537 = scmp.ne.s32.totalorder %s520, %s536
      %p538 = scmp.eq.s32.totalorder %s40, 0
      %p539 = por %p537, %p538
      %p540 = scmp.le.s32.totalorder 1, %s34
      %p541 = scmp.lt.s32.totalorder %s34, 3
      %p542 = pnand %p540, %p541
      %p543 = pneg %p542
      // Predicated region
      $region9: #{bioclinical_bert_ft_forward.1} parent=5 // pred_check
        _
      $region10: #{bioclinical_bert_ft_forward.1} parent=5 // pred_check_branch
        %545 = sbr.rel (%p542) target = $region12
      $region11: #{bioclinical_bert_ft_forward.1} parent=5 // pred_region
        %s546 = ssub.s32 %s34, 1
        // Predicated region
        $region13: #{bioclinical_bert_ft_forward.1} parent=11 // pred_check
          %p547 = pneg %p107
        $region14: #{bioclinical_bert_ft_forward.1} parent=11 // pred_check_branch
          %549 = sbr.rel (%p547) target = $region16
        $region15: #{bioclinical_bert_ft_forward.1} parent=11 // pred_region
          _
        $region16: #{bioclinical_bert_ft_forward.1} parent=11 // pred_fallthru
          _
        // Predicated region
        $region17: #{bioclinical_bert_ft_forward.1} parent=11 // pred_check
          %p550 = pneg %p128
        $region18: #{bioclinical_bert_ft_forward.1} parent=11 // pred_check_branch
          %552 = sbr.rel (%p550) target = $region20
        $region19: #{bioclinical_bert_ft_forward.1} parent=11 // pred_region
          _
        $region20: #{bioclinical_bert_ft_forward.1} parent=11 // pred_fallthru
          _
        // Predicated region
        $region21: #{bioclinical_bert_ft_forward.1} parent=11 // pred_check
          %p553 = pneg %p149
        $region22: #{bioclinical_bert_ft_forward.1} parent=11 // pred_check_branch
          %555 = sbr.rel (%p553) target = $region24
        $region23: #{bioclinical_bert_ft_forward.1} parent=11 // pred_region
          _
        $region24: #{bioclinical_bert_ft_forward.1} parent=11 // pred_fallthru
          _
        // Predicated region
        $region25: #{bioclinical_bert_ft_forward.1} parent=11 // pred_check
          %p556 = pneg %p170
        $region26: #{bioclinical_bert_ft_forward.1} parent=11 // pred_check_branch
          %558 = sbr.rel (%p556) target = $region28
        $region27: #{bioclinical_bert_ft_forward.1} parent=11 // pred_region
          _
        $region28: #{bioclinical_bert_ft_forward.1} parent=11 // pred_fallthru
          _
        // Predicated region
        $region29: #{bioclinical_bert_ft_forward.1} parent=11 // pred_check
          %p559 = pneg %p191
        $region30: #{bioclinical_bert_ft_forward.1} parent=11 // pred_check_branch
          %561 = sbr.rel (%p559) target = $region32
        $region31: #{bioclinical_bert_ft_forward.1} parent=11 // pred_region
          _
        $region32: #{bioclinical_bert_ft_forward.1} parent=11 // pred_fallthru
          _
        // Predicated region
        $region33: #{bioclinical_bert_ft_forward.1} parent=11 // pred_check
          %p562 = pneg %p212
        $region34: #{bioclinical_bert_ft_forward.1} parent=11 // pred_check_branch
          %564 = sbr.rel (%p562) target = $region36
        $region35: #{bioclinical_bert_ft_forward.1} parent=11 // pred_region
          _
        $region36: #{bioclinical_bert_ft_forward.1} parent=11 // pred_fallthru
          _
        // Predicated region
        $region37: #{bioclinical_bert_ft_forward.1} parent=11 // pred_check
          %p565 = pneg %p233
        $region38: #{bioclinical_bert_ft_forward.1} parent=11 // pred_check_branch
          %567 = sbr.rel (%p565) target = $region40
        $region39: #{bioclinical_bert_ft_forward.1} parent=11 // pred_region
          %s569 = ssub.s32 2048, 2048
          %570 = vsyncadd [#allocation3], %s569
          %s571 = sshll.u32 [#allocation2], 4
          %s572 = int_to_ptr.vmem [resolvable:$true] %s571
          %577 = dma.hbm_to_vmem [thread:$0]  %s8, 2048, %s572, [#allocation3], 64, 64, 4
        $region40: #{bioclinical_bert_ft_forward.1} parent=11 // pred_fallthru
          _
        // Predicated region
        $region41: #{bioclinical_bert_ft_forward.1} parent=11 // pred_check
          %p578 = pneg %p254
        $region42: #{bioclinical_bert_ft_forward.1} parent=11 // pred_check_branch
          %580 = sbr.rel (%p578) target = $region44
        $region43: #{bioclinical_bert_ft_forward.1} parent=11 // pred_region
          _
        $region44: #{bioclinical_bert_ft_forward.1} parent=11 // pred_fallthru
          _
        // Predicated region
        $region45: #{bioclinical_bert_ft_forward.1} parent=11 // pred_check
          %p581 = pneg %p275
        $region46: #{bioclinical_bert_ft_forward.1} parent=11 // pred_check_branch
          %583 = sbr.rel (%p581) target = $region48
        $region47: #{bioclinical_bert_ft_forward.1} parent=11 // pred_region
          %s585 = ssub.s32 2048, 2048
          %586 = vsyncadd [#allocation6], %s585
          %s587 = sshll.u32 [#allocation5], 4
          %s588 = int_to_ptr.vmem [resolvable:$true] %s587
          %593 = dma.hbm_to_vmem [thread:$0]  %s10, 2048, %s588, [#allocation6], 64, 64, 4
        $region48: #{bioclinical_bert_ft_forward.1} parent=11 // pred_fallthru
          _
        // Predicated region
        $region49: #{bioclinical_bert_ft_forward.1} parent=11 // pred_check
          %p594 = pneg %p296
        $region50: #{bioclinical_bert_ft_forward.1} parent=11 // pred_check_branch
          %596 = sbr.rel (%p594) target = $region52
        $region51: #{bioclinical_bert_ft_forward.1} parent=11 // pred_region
          _
        $region52: #{bioclinical_bert_ft_forward.1} parent=11 // pred_fallthru
          _
        // Predicated region
        $region53: #{bioclinical_bert_ft_forward.1} parent=11 // pred_check
          %p597 = pneg %p317
        $region54: #{bioclinical_bert_ft_forward.1} parent=11 // pred_check_branch
          %599 = sbr.rel (%p597) target = $region56
        $region55: #{bioclinical_bert_ft_forward.1} parent=11 // pred_region
          %s601 = ssub.s32 2048, 2048
          %602 = vsyncadd [#allocation6], %s601
          %s603 = sshll.u32 [#allocation7], 4
          %s604 = int_to_ptr.vmem [resolvable:$true] %s603
          %609 = dma.hbm_to_vmem [thread:$0]  %s12, 2048, %s604, [#allocation6], 64, 64, 4
        $region56: #{bioclinical_bert_ft_forward.1} parent=11 // pred_fallthru
          _
        // Predicated region
        $region57: #{bioclinical_bert_ft_forward.1} parent=11 // pred_check
          %p610 = pneg %p338
        $region58: #{bioclinical_bert_ft_forward.1} parent=11 // pred_check_branch
          %612 = sbr.rel (%p610) target = $region60
        $region59: #{bioclinical_bert_ft_forward.1} parent=11 // pred_region
          _
        $region60: #{bioclinical_bert_ft_forward.1} parent=11 // pred_fallthru
          _
        // Predicated region
        $region61: #{bioclinical_bert_ft_forward.1} parent=11 // pred_check
          %p613 = pneg %p359
        $region62: #{bioclinical_bert_ft_forward.1} parent=11 // pred_check_branch
          %615 = sbr.rel (%p613) target = $region64
        $region63: #{bioclinical_bert_ft_forward.1} parent=11 // pred_region
          _
        $region64: #{bioclinical_bert_ft_forward.1} parent=11 // pred_fallthru
          _
        // Predicated region
        $region65: #{bioclinical_bert_ft_forward.1} parent=11 // pred_check
          %p616 = pneg %p380
        $region66: #{bioclinical_bert_ft_forward.1} parent=11 // pred_check_branch
          %618 = sbr.rel (%p616) target = $region68
        $region67: #{bioclinical_bert_ft_forward.1} parent=11 // pred_region
          _
        $region68: #{bioclinical_bert_ft_forward.1} parent=11 // pred_fallthru
          _
        // Predicated region
        $region69: #{bioclinical_bert_ft_forward.1} parent=11 // pred_check
          %p619 = pneg %p401
        $region70: #{bioclinical_bert_ft_forward.1} parent=11 // pred_check_branch
          %621 = sbr.rel (%p619) target = $region72
        $region71: #{bioclinical_bert_ft_forward.1} parent=11 // pred_region
          %s623 = ssub.s32 4096, 4096
          %624 = vsyncadd [#allocation9], %s623
          %s625 = sshll.u32 [#allocation8], 4
          %s626 = int_to_ptr.vmem [resolvable:$true] %s625
          %631 = dma.hbm_to_vmem [thread:$0]  %s16, 4096, %s626, [#allocation9], 128, 128, 8
        $region72: #{bioclinical_bert_ft_forward.1} parent=11 // pred_fallthru
          _
        // Predicated region
        $region73: #{bioclinical_bert_ft_forward.1} parent=11 // pred_check
          %p632 = pneg %p422
        $region74: #{bioclinical_bert_ft_forward.1} parent=11 // pred_check_branch
          %634 = sbr.rel (%p632) target = $region76
        $region75: #{bioclinical_bert_ft_forward.1} parent=11 // pred_region
          _
        $region76: #{bioclinical_bert_ft_forward.1} parent=11 // pred_fallthru
          _
        // Predicated region
        $region77: #{bioclinical_bert_ft_forward.1} parent=11 // pred_check
          %p635 = pneg %p443
        $region78: #{bioclinical_bert_ft_forward.1} parent=11 // pred_check_branch
          %637 = sbr.rel (%p635) target = $region80
        $region79: #{bioclinical_bert_ft_forward.1} parent=11 // pred_region
          %s639 = ssub.s32 4096, 4096
          %640 = vsyncadd [#allocation9], %s639
          %s641 = sshll.u32 [#allocation10], 4
          %s642 = int_to_ptr.vmem [resolvable:$true] %s641
          %647 = dma.hbm_to_vmem [thread:$0]  %s18, 4096, %s642, [#allocation9], 64, 64, 4
        $region80: #{bioclinical_bert_ft_forward.1} parent=11 // pred_fallthru
          _
        // Predicated region
        $region81: #{bioclinical_bert_ft_forward.1} parent=11 // pred_check
          %p648 = pneg %p464
        $region82: #{bioclinical_bert_ft_forward.1} parent=11 // pred_check_branch
          %650 = sbr.rel (%p648) target = $region84
        $region83: #{bioclinical_bert_ft_forward.1} parent=11 // pred_region
          _
        $region84: #{bioclinical_bert_ft_forward.1} parent=11 // pred_fallthru
          _
        // Predicated region
        $region85: #{bioclinical_bert_ft_forward.1} parent=11 // pred_check
          %p651 = pneg %p485
        $region86: #{bioclinical_bert_ft_forward.1} parent=11 // pred_check_branch
          %653 = sbr.rel (%p651) target = $region88
        $region87: #{bioclinical_bert_ft_forward.1} parent=11 // pred_region
          _
        $region88: #{bioclinical_bert_ft_forward.1} parent=11 // pred_fallthru
          _
        // Predicated region
        $region89: #{bioclinical_bert_ft_forward.1} parent=11 // pred_check
          %p654 = pneg %p506
        $region90: #{bioclinical_bert_ft_forward.1} parent=11 // pred_check_branch
          %656 = sbr.rel (%p654) target = $region92
        $region91: #{bioclinical_bert_ft_forward.1} parent=11 // pred_region
          _
        $region92: #{bioclinical_bert_ft_forward.1} parent=11 // pred_fallthru
          _
      $region12: #{bioclinical_bert_ft_forward.1} parent=5 // pred_fallthru
        _
      %p657 = scmp.lt.s32.totalorder %s34, 2
      // Predicated region
      $region93: #{bioclinical_bert_ft_forward.1} parent=5 // pred_check
        %p658 = pneg %p657
      $region94: #{bioclinical_bert_ft_forward.1} parent=5 // pred_check_branch
        %660 = sbr.rel (%p658) target = $region96
      $region95: #{bioclinical_bert_ft_forward.1} parent=5 // pred_region
        // Predicated region
        $region97: #{bioclinical_bert_ft_forward.1} parent=95 // pred_check
          %p661 = pneg %p54
        $region98: #{bioclinical_bert_ft_forward.1} parent=95 // pred_check_branch
          %663 = sbr.rel (%p661) target = $region100
        $region99: #{bioclinical_bert_ft_forward.1} parent=95 // pred_region
          %p664 = scmp.lt.s32.totalorder %s34, 1
          %s665 = scalar_select %p664, %s34, 1
          %s666 = scalar_lea.vmem %s0, %s665
        $region100: #{bioclinical_bert_ft_forward.1} parent=95 // pred_fallthru
          _
        // Predicated region
        $region101: #{bioclinical_bert_ft_forward.1} parent=95 // pred_check
          %p667 = pneg %p80
        $region102: #{bioclinical_bert_ft_forward.1} parent=95 // pred_check_branch
          %669 = sbr.rel (%p667) target = $region104
        $region103: #{bioclinical_bert_ft_forward.1} parent=95 // pred_region
          %p670 = scmp.lt.s32.totalorder %s34, 1
          %s671 = scalar_select %p670, %s34, 1
          %s672 = smul.addr %s671, 8
          %s673 = scalar_lea.vmem %s1, %s672
        $region104: #{bioclinical_bert_ft_forward.1} parent=95 // pred_fallthru
          _
      $region96: #{bioclinical_bert_ft_forward.1} parent=5 // pred_fallthru
        _
      %p674 = scmp.le.s32.totalorder 1, %s34
      %p675 = scmp.lt.s32.totalorder %s34, 3
      %p676 = pnand %p674, %p675
      %p677 = pneg %p676
      // Predicated region
      $region105: #{bioclinical_bert_ft_forward.1} parent=5 // pred_check
        _
      $region106: #{bioclinical_bert_ft_forward.1} parent=5 // pred_check_branch
        %679 = sbr.rel (%p676) target = $region108
      $region107: #{bioclinical_bert_ft_forward.1} parent=5 // pred_region
        %s680 = ssub.s32 %s34, 1
        // Predicated region
        $region109: #{bioclinical_bert_ft_forward.1} parent=107 // pred_check
          %p681 = pneg %p233
        $region110: #{bioclinical_bert_ft_forward.1} parent=107 // pred_check_branch
          %683 = sbr.rel (%p681) target = $region112
        $region111: #{bioclinical_bert_ft_forward.1} parent=107 // pred_region
          %684 = dma.done [#allocation3], 2048
        $region112: #{bioclinical_bert_ft_forward.1} parent=107 // pred_fallthru
          _
        // Predicated region
        $region113: #{bioclinical_bert_ft_forward.1} parent=107 // pred_check
          %p685 = pneg %p275
        $region114: #{bioclinical_bert_ft_forward.1} parent=107 // pred_check_branch
          %687 = sbr.rel (%p685) target = $region116
        $region115: #{bioclinical_bert_ft_forward.1} parent=107 // pred_region
          %688 = dma.done [#allocation6], 2048
        $region116: #{bioclinical_bert_ft_forward.1} parent=107 // pred_fallthru
          _
        // Predicated region
        $region117: #{bioclinical_bert_ft_forward.1} parent=107 // pred_check
          %p689 = pneg %p317
        $region118: #{bioclinical_bert_ft_forward.1} parent=107 // pred_check_branch
          %691 = sbr.rel (%p689) target = $region120
        $region119: #{bioclinical_bert_ft_forward.1} parent=107 // pred_region
          %692 = dma.done [#allocation6], 2048
        $region120: #{bioclinical_bert_ft_forward.1} parent=107 // pred_fallthru
          _
        // Predicated region
        $region121: #{bioclinical_bert_ft_forward.1} parent=107 // pred_check
          %p693 = pneg %p401
        $region122: #{bioclinical_bert_ft_forward.1} parent=107 // pred_check_branch
          %695 = sbr.rel (%p693) target = $region124
        $region123: #{bioclinical_bert_ft_forward.1} parent=107 // pred_region
          %696 = dma.done [#allocation9], 4096
        $region124: #{bioclinical_bert_ft_forward.1} parent=107 // pred_fallthru
          _
        // Predicated region
        $region125: #{bioclinical_bert_ft_forward.1} parent=107 // pred_check
          %p697 = pneg %p443
        $region126: #{bioclinical_bert_ft_forward.1} parent=107 // pred_check_branch
          %699 = sbr.rel (%p697) target = $region128
        $region127: #{bioclinical_bert_ft_forward.1} parent=107 // pred_region
          %700 = dma.done [#allocation9], 4096
        $region128: #{bioclinical_bert_ft_forward.1} parent=107 // pred_fallthru
          _
        %p701 = scmp.lt.s32.totalorder %s39, 1
        %s702 = scalar_select %p701, %s39, 1
        %s703 = scalar_lea.vmem %s0, %s702
        %p704 = pneg %p60
        %p705 = pneg %p57
        %p706 = scmp.lt.s32.totalorder %s39, 1
        %s707 = scalar_select %p706, %s39, 1
        %s708 = smul.addr %s707, 8
        %s709 = scalar_lea.vmem %s1, %s708
        %p710 = pneg %p86
        %p711 = pneg %p83
        %p712 = pneg %p107
        %p713 = pneg %p104
        %p714 = pneg %p128
        %p715 = pneg %p125
        %p716 = pneg %p149
        %p717 = pneg %p146
        %p718 = pneg %p170
        %p719 = pneg %p167
        %p720 = pneg %p191
        %p721 = pneg %p188
        %p722 = pneg %p212
        %p723 = pneg %p209
        %p724 = pneg %p233
        %p725 = pneg %p230
        %p726 = pneg %p254
        %p727 = pneg %p251
        %p728 = pneg %p275
        %p729 = pneg %p272
        %p730 = pneg %p296
        %p731 = pneg %p293
        %p732 = pneg %p317
        %p733 = pneg %p314
        %p734 = pneg %p338
        %p735 = pneg %p335
        %p736 = pneg %p359
        %p737 = pneg %p356
        %p738 = pneg %p380
        %p739 = pneg %p377
        %p740 = pneg %p401
        %p741 = pneg %p398
        %p742 = pneg %p422
        %p743 = pneg %p419
        %p744 = pneg %p443
        %p745 = pneg %p440
        %p746 = pneg %p464
        %p747 = pneg %p461
        %p748 = pneg %p485
        %p749 = pneg %p482
        %p750 = pneg %p506
        %p751 = pneg %p503
        %p752 = pneg %p532
        %p753 = pneg %p529
        %s754 = sand.u32 %s519, 1
        %s755 = scalar_lea.sflag [#allocation4], %s754
        %s756 = sand.u32 %s519, 1
        %s757 = scalar_lea.vmem [#allocation11], %s756
        %p758 = scmp.lt.s32.totalorder %s39, 1
        %s759 = scalar_select %p758, %s39, 1
        %s760 = scalar_lea.vmem %s0, %s759
        %p761 = scmp.lt.s32.totalorder %s39, 1
        %s762 = scalar_select %p761, %s39, 1
        %s763 = smul.addr %s762, 8
        %s764 = scalar_lea.vmem %s1, %s763
        %v766 = vld [vmem:[%s764] sm:$0xff]
        %v767 = vld [vmem:[%s2] sm:$0xff]
        %v768 = vadd.f32 %v766, %v767
        %v769 = vld [vmem:[%s3] sm:$0x1]
        %v771 = vlaneseq
        %v772 = vshrl.u32 %v771, 7
        %v773 = vsub.s32 0, %v772
        %v774 = vrot.slane %v769, %v773
        %v776 = vadd.f32 %v768, %v774
        %v777 = vld [vmem:[%s4] sm:$0x1]
        %v778 = vld [vmem:[%s5] sm:$0x1]
        %779 = vadd.xlane.f32.xlu0 %v776
        %v780 = vpop.xlane.xlu0 %779
        %v781 = vrcp.pop 128.0
        %v782 = vmul.f32 %v780, %v781
        %v783 = vmul.f32 %v776, %v776
        %784 = vadd.xlane.f32.xlu0 %v783
        %v785 = vpop.xlane.xlu0 %784
        %v786 = vmul.f32 %v785, %v781
        %v787 = vmul.f32 %v782, %v782
        %v788 = vsub.f32 %v786, %v787
        %v789 = vsub.f32 %v776, %v782
        %v790 = vadd.f32 %v788, 1e-12
        %v791 = vrsqrt.pop %v790
        %v792 = vmul.f32 %v789, %v791
        %v794 = vlaneseq
        %v795 = vshrl.u32 %v794, 7
        %v796 = vsub.s32 0, %v795
        %v797 = vrot.slane %v777, %v796
        %v799 = vmul.f32 %v792, %v797
        %v801 = vlaneseq
        %v802 = vshrl.u32 %v801, 7
        %v803 = vsub.s32 0, %v802
        %v804 = vrot.slane %v778, %v803
        %v806 = vadd.f32 %v799, %v804
        %v807 = vld [vmem:[%s760] sm:$0x1]
        %v808 = vsub.f32 1.0, %v807
        %v809 = vmul.f32 %v808, -1e+09
        %v810 = vld [vmem:[%s6] sm:$0xf]
        %v811 = vld [vmem:[%s6 + $0x4] sm:$0xf]
        %v812 = vld [vmem:[%s6 + $0x8] sm:$0xf]
        %v813 = vld [vmem:[%s6 + $0xc] sm:$0xf]
        %v814 = vld [vmem:[%s6 + $0x10] sm:$0xf]
        %v815 = vld [vmem:[%s6 + $0x14] sm:$0xf]
        %v816 = vld [vmem:[%s6 + $0x18] sm:$0xf]
        %v817 = vld [vmem:[%s6 + $0x1c] sm:$0xf]
        %v818 = vld [vmem:[%s6 + $0x20] sm:$0xf]
        %v819 = vld [vmem:[%s6 + $0x24] sm:$0xf]
        %v820 = vld [vmem:[%s6 + $0x28] sm:$0xf]
        %v821 = vld [vmem:[%s6 + $0x2c] sm:$0xf]
        %v822 = vld [vmem:[%s6 + $0x30] sm:$0xf]
        %v823 = vld [vmem:[%s6 + $0x34] sm:$0xf]
        %v824 = vld [vmem:[%s6 + $0x38] sm:$0xf]
        %v825 = vld [vmem:[%s6 + $0x3c] sm:$0xf]
        %v826 = vld [vmem:[#allocation2] sm:$0xf]
        %v827 = vld [vmem:[#allocation2 + $0x4] sm:$0xf]
        %v828 = vld [vmem:[#allocation2 + $0x8] sm:$0xf]
        %v829 = vld [vmem:[#allocation2 + $0xc] sm:$0xf]
        %v830 = vld [vmem:[#allocation2 + $0x10] sm:$0xf]
        %v831 = vld [vmem:[#allocation2 + $0x14] sm:$0xf]
        %v832 = vld [vmem:[#allocation2 + $0x18] sm:$0xf]
        %v833 = vld [vmem:[#allocation2 + $0x1c] sm:$0xf]
        %v834 = vld [vmem:[#allocation2 + $0x20] sm:$0xf]
        %v835 = vld [vmem:[#allocation2 + $0x24] sm:$0xf]
        %v836 = vld [vmem:[#allocation2 + $0x28] sm:$0xf]
        %v837 = vld [vmem:[#allocation2 + $0x2c] sm:$0xf]
        %v838 = vld [vmem:[#allocation2 + $0x30] sm:$0xf]
        %v839 = vld [vmem:[#allocation2 + $0x34] sm:$0xf]
        %v840 = vld [vmem:[#allocation2 + $0x38] sm:$0xf]
        %v841 = vld [vmem:[#allocation2 + $0x3c] sm:$0xf]
        %v842 = vld [vmem:[#allocation5] sm:$0xf]
        %v843 = vld [vmem:[#allocation5 + $0x4] sm:$0xf]
        %v844 = vld [vmem:[#allocation5 + $0x8] sm:$0xf]
        %v845 = vld [vmem:[#allocation5 + $0xc] sm:$0xf]
        %v846 = vld [vmem:[#allocation5 + $0x10] sm:$0xf]
        %v847 = vld [vmem:[#allocation5 + $0x14] sm:$0xf]
        %v848 = vld [vmem:[#allocation5 + $0x18] sm:$0xf]
        %v849 = vld [vmem:[#allocation5 + $0x1c] sm:$0xf]
        %v850 = vld [vmem:[#allocation5 + $0x20] sm:$0xf]
        %v851 = vld [vmem:[#allocation5 + $0x24] sm:$0xf]
        %v852 = vld [vmem:[#allocation5 + $0x28] sm:$0xf]
        %v853 = vld [vmem:[#allocation5 + $0x2c] sm:$0xf]
        %v854 = vld [vmem:[#allocation5 + $0x30] sm:$0xf]
        %v855 = vld [vmem:[#allocation5 + $0x34] sm:$0xf]
        %v856 = vld [vmem:[#allocation5 + $0x38] sm:$0xf]
        %v857 = vld [vmem:[#allocation5 + $0x3c] sm:$0xf]
        %v858 = vld [vmem:[#allocation7] sm:$0xf]
        %v859 = vld [vmem:[#allocation7 + $0x4] sm:$0xf]
        %v860 = vld [vmem:[#allocation7 + $0x8] sm:$0xf]
        %v861 = vld [vmem:[#allocation7 + $0xc] sm:$0xf]
        %v862 = vld [vmem:[#allocation7 + $0x10] sm:$0xf]
        %v863 = vld [vmem:[#allocation7 + $0x14] sm:$0xf]
        %v864 = vld [vmem:[#allocation7 + $0x18] sm:$0xf]
        %v865 = vld [vmem:[#allocation7 + $0x1c] sm:$0xf]
        %v866 = vld [vmem:[#allocation7 + $0x20] sm:$0xf]
        %v867 = vld [vmem:[#allocation7 + $0x24] sm:$0xf]
        %v868 = vld [vmem:[#allocation7 + $0x28] sm:$0xf]
        %v869 = vld [vmem:[#allocation7 + $0x2c] sm:$0xf]
        %v870 = vld [vmem:[#allocation7 + $0x30] sm:$0xf]
        %v871 = vld [vmem:[#allocation7 + $0x34] sm:$0xf]
        %v872 = vld [vmem:[#allocation7 + $0x38] sm:$0xf]
        %v873 = vld [vmem:[#allocation7 + $0x3c] sm:$0xf]
        %v874 = vld [vmem:[%s7] sm:$0x1]
        %v875 = vld [vmem:[%s9] sm:$0x1]
        %v876 = vld [vmem:[%s11] sm:$0x1]
        %v877 = vld [vmem:[%s13] sm:$0x1]
        %v878 = vpack.c.bf16 %v806, %v806
        %v880 = vlaneseq
        %v881 = vshrl.u32 %v880, 7
        %v882 = vsub.s32 0, %v881
        %v883 = vrot.slane %v874, %v882
        %v901 = vunpack.c.l.b16 %v810
        %v902 = vunpack.c.l.b16 %v811
        %v903 = vunpack.c.l.b16 %v812
        %v904 = vunpack.c.l.b16 %v813
        %v905 = vunpack.c.l.b16 %v814
        %v906 = vunpack.c.l.b16 %v815
        %v907 = vunpack.c.l.b16 %v816
        %v908 = vunpack.c.l.b16 %v817
        %v909 = vunpack.c.l.b16 %v818
        %v910 = vunpack.c.l.b16 %v819
        %v911 = vunpack.c.l.b16 %v820
        %v912 = vunpack.c.l.b16 %v821
        %v913 = vunpack.c.l.b16 %v822
        %v914 = vunpack.c.l.b16 %v823
        %v915 = vunpack.c.l.b16 %v824
        %v916 = vunpack.c.l.b16 %v825
        %v917 = vpack.c.b16 %v902, %v901
        %v918 = vpack.c.b16 %v904, %v903
        %v919 = vpack.c.b16 %v906, %v905
        %v920 = vpack.c.b16 %v908, %v907
        %v921 = vpack.c.b16 %v910, %v909
        %v922 = vpack.c.b16 %v912, %v911
        %v923 = vpack.c.b16 %v914, %v913
        %v924 = vpack.c.b16 %v916, %v915
        %933 = vmatprep.subr.bf16.mxu0 0
        %934 = vmatpush1.bf16.msra.mxu0 %v917
        %935 = vmatprep.subr.bf16.mxu0 0
        %936 = vmatpush1.bf16.msra.mxu0 %v918
        %937 = vmatprep.subr.bf16.mxu0 0
        %938 = vmatpush1.bf16.msra.mxu0 %v919
        %939 = vmatprep.subr.bf16.mxu0 0
        %940 = vmatpush1.bf16.msra.mxu0 %v920
        %941 = vmatprep.subr.bf16.mxu0 0
        %942 = vmatpush1.bf16.msra.mxu0 %v921
        %943 = vmatprep.subr.bf16.mxu0 0
        %944 = vmatpush1.bf16.msra.mxu0 %v922
        %945 = vmatprep.subr.bf16.mxu0 0
        %946 = vmatpush1.bf16.msra.mxu0 %v923
        %947 = vmatprep.subr.bf16.mxu0 0
        %948 = vmatpush1.bf16.msra.mxu0 %v924
        %949 = vmatprep.subr.bf16.mxu0 0
        %950 = vmatpush1.bf16.msra.mxu0 0
        %951 = vmatprep.subr.bf16.mxu0 0
        %952 = vmatpush1.bf16.msra.mxu0 0
        %953 = vmatprep.subr.bf16.mxu0 0
        %954 = vmatpush1.bf16.msra.mxu0 0
        %955 = vmatprep.subr.bf16.mxu0 0
        %956 = vmatpush1.bf16.msra.mxu0 0
        %957 = vmatprep.subr.bf16.mxu0 0
        %958 = vmatpush1.bf16.msra.mxu0 0
        %959 = vmatprep.subr.bf16.mxu0 0
        %960 = vmatpush1.bf16.msra.mxu0 0
        %961 = vmatprep.subr.bf16.mxu0 0
        %962 = vmatpush1.bf16.msra.mxu0 0
        %963 = vmatprep.subr.bf16.mxu0 0
        %964 = vmatpush1.bf16.msra.mxu0 0
        %965 = vmatprep.mubr.bf16.mxu0 0
        %966 = vmatmul.mubr.bf16.gmra.mrb[0].mxu0 %v878
        %v967 = vpop.f32.mrb[0].mxu0
        %v968 = vadd.f32 %v883, %v967
        %v969 = vpop.f32.mrb[0].mxu0
        %v970 = vpop.f32.mrb[0].mxu0
        %v971 = vpop.f32.mrb[0].mxu0
        %972 = vdwg.mxu0
        %v974 = vlaneseq
        %v975 = vshrl.u32 %v974, 7
        %v976 = vsub.s32 0, %v975
        %v977 = vrot.slane %v875, %v976
        %v995 = vunpack.c.l.b16 %v826
        %v996 = vunpack.c.l.b16 %v827
        %v997 = vunpack.c.l.b16 %v828
        %v998 = vunpack.c.l.b16 %v829
        %v999 = vunpack.c.l.b16 %v830
        %v1000 = vunpack.c.l.b16 %v831
        %v1001 = vunpack.c.l.b16 %v832
        %v1002 = vunpack.c.l.b16 %v833
        %v1003 = vunpack.c.l.b16 %v834
        %v1004 = vunpack.c.l.b16 %v835
        %v1005 = vunpack.c.l.b16 %v836
        %v1006 = vunpack.c.l.b16 %v837
        %v1007 = vunpack.c.l.b16 %v838
        %v1008 = vunpack.c.l.b16 %v839
        %v1009 = vunpack.c.l.b16 %v840
        %v1010 = vunpack.c.l.b16 %v841
        %v1011 = vpack.c.b16 %v996, %v995
        %v1012 = vpack.c.b16 %v998, %v997
        %v1013 = vpack.c.b16 %v1000, %v999
        %v1014 = vpack.c.b16 %v1002, %v1001
        %v1015 = vpack.c.b16 %v1004, %v1003
        %v1016 = vpack.c.b16 %v1006, %v1005
        %v1017 = vpack.c.b16 %v1008, %v1007
        %v1018 = vpack.c.b16 %v1010, %v1009
        %1027 = vmatprep.subr.bf16.mxu0 0
        %1028 = vmatpush1.bf16.msra.mxu0 %v1011
        %1029 = vmatprep.subr.bf16.mxu0 0
        %1030 = vmatpush1.bf16.msra.mxu0 %v1012
        %1031 = vmatprep.subr.bf16.mxu0 0
        %1032 = vmatpush1.bf16.msra.mxu0 %v1013
        %1033 = vmatprep.subr.bf16.mxu0 0
        %1034 = vmatpush1.bf16.msra.mxu0 %v1014
        %1035 = vmatprep.subr.bf16.mxu0 0
        %1036 = vmatpush1.bf16.msra.mxu0 %v1015
        %1037 = vmatprep.subr.bf16.mxu0 0
        %1038 = vmatpush1.bf16.msra.mxu0 %v1016
        %1039 = vmatprep.subr.bf16.mxu0 0
        %1040 = vmatpush1.bf16.msra.mxu0 %v1017
        %1041 = vmatprep.subr.bf16.mxu0 0
        %1042 = vmatpush1.bf16.msra.mxu0 %v1018
        %1043 = vmatprep.subr.bf16.mxu0 0
        %1044 = vmatpush1.bf16.msra.mxu0 0
        %1045 = vmatprep.subr.bf16.mxu0 0
        %1046 = vmatpush1.bf16.msra.mxu0 0
        %1047 = vmatprep.subr.bf16.mxu0 0
        %1048 = vmatpush1.bf16.msra.mxu0 0
        %1049 = vmatprep.subr.bf16.mxu0 0
        %1050 = vmatpush1.bf16.msra.mxu0 0
        %1051 = vmatprep.subr.bf16.mxu0 0
        %1052 = vmatpush1.bf16.msra.mxu0 0
        %1053 = vmatprep.subr.bf16.mxu0 0
        %1054 = vmatpush1.bf16.msra.mxu0 0
        %1055 = vmatprep.subr.bf16.mxu0 0
        %1056 = vmatpush1.bf16.msra.mxu0 0
        %1057 = vmatprep.subr.bf16.mxu0 0
        %1058 = vmatpush1.bf16.msra.mxu0 0
        %1059 = vmatprep.mubr.bf16.mxu0 0
        %1060 = vmatmul.mubr.bf16.gmra.mrb[0].mxu0 %v878
        %v1061 = vpop.f32.mrb[0].mxu0
        %v1062 = vadd.f32 %v977, %v1061
        %v1063 = vpop.f32.mrb[0].mxu0
        %v1064 = vpop.f32.mrb[0].mxu0
        %v1065 = vpop.f32.mrb[0].mxu0
        %1066 = vdwg.mxu0
        %v1068 = vlaneseq
        %v1069 = vshrl.u32 %v1068, 7
        %v1070 = vsub.s32 0, %v1069
        %v1071 = vrot.slane %v876, %v1070
        %v1089 = vunpack.c.l.b16 %v842
        %v1090 = vunpack.c.l.b16 %v843
        %v1091 = vunpack.c.l.b16 %v844
        %v1092 = vunpack.c.l.b16 %v845
        %v1093 = vunpack.c.l.b16 %v846
        %v1094 = vunpack.c.l.b16 %v847
        %v1095 = vunpack.c.l.b16 %v848
        %v1096 = vunpack.c.l.b16 %v849
        %v1097 = vunpack.c.l.b16 %v850
        %v1098 = vunpack.c.l.b16 %v851
        %v1099 = vunpack.c.l.b16 %v852
        %v1100 = vunpack.c.l.b16 %v853
        %v1101 = vunpack.c.l.b16 %v854
        %v1102 = vunpack.c.l.b16 %v855
        %v1103 = vunpack.c.l.b16 %v856
        %v1104 = vunpack.c.l.b16 %v857
        %v1105 = vpack.c.b16 %v1090, %v1089
        %v1106 = vpack.c.b16 %v1092, %v1091
        %v1107 = vpack.c.b16 %v1094, %v1093
        %v1108 = vpack.c.b16 %v1096, %v1095
        %v1109 = vpack.c.b16 %v1098, %v1097
        %v1110 = vpack.c.b16 %v1100, %v1099
        %v1111 = vpack.c.b16 %v1102, %v1101
        %v1112 = vpack.c.b16 %v1104, %v1103
        %1121 = vmatprep.subr.bf16.mxu0 0
        %1122 = vmatpush1.bf16.msra.mxu0 %v1105
        %1123 = vmatprep.subr.bf16.mxu0 0
        %1124 = vmatpush1.bf16.msra.mxu0 %v1106
        %1125 = vmatprep.subr.bf16.mxu0 0
        %1126 = vmatpush1.bf16.msra.mxu0 %v1107
        %1127 = vmatprep.subr.bf16.mxu0 0
        %1128 = vmatpush1.bf16.msra.mxu0 %v1108
        %1129 = vmatprep.subr.bf16.mxu0 0
        %1130 = vmatpush1.bf16.msra.mxu0 %v1109
        %1131 = vmatprep.subr.bf16.mxu0 0
        %1132 = vmatpush1.bf16.msra.mxu0 %v1110
        %1133 = vmatprep.subr.bf16.mxu0 0
        %1134 = vmatpush1.bf16.msra.mxu0 %v1111
        %1135 = vmatprep.subr.bf16.mxu0 0
        %1136 = vmatpush1.bf16.msra.mxu0 %v1112
        %1137 = vmatprep.subr.bf16.mxu0 0
        %1138 = vmatpush1.bf16.msra.mxu0 0
        %1139 = vmatprep.subr.bf16.mxu0 0
        %1140 = vmatpush1.bf16.msra.mxu0 0
        %1141 = vmatprep.subr.bf16.mxu0 0
        %1142 = vmatpush1.bf16.msra.mxu0 0
        %1143 = vmatprep.subr.bf16.mxu0 0
        %1144 = vmatpush1.bf16.msra.mxu0 0
        %1145 = vmatprep.subr.bf16.mxu0 0
        %1146 = vmatpush1.bf16.msra.mxu0 0
        %1147 = vmatprep.subr.bf16.mxu0 0
        %1148 = vmatpush1.bf16.msra.mxu0 0
        %1149 = vmatprep.subr.bf16.mxu0 0
        %1150 = vmatpush1.bf16.msra.mxu0 0
        %1151 = vmatprep.subr.bf16.mxu0 0
        %1152 = vmatpush1.bf16.msra.mxu0 0
        %1153 = vmatprep.mubr.bf16.mxu0 0
        %1154 = vmatmul.mubr.bf16.gmra.mrb[0].mxu0 %v878
        %v1155 = vpop.f32.mrb[0].mxu0
        %v1156 = vadd.f32 %v1071, %v1155
        %v1157 = vpop.f32.mrb[0].mxu0
        %v1158 = vpop.f32.mrb[0].mxu0
        %v1159 = vpop.f32.mrb[0].mxu0
        %1160 = vdwg.mxu0
        %v1161 = vmul.f32 %v968, 0.17677669
        %v1162 = vpack.c.bf16 %v1161, %v1161
        %v1163 = vpack.c.bf16 %v1062, %v1062
        %v1164 = vpack.c.bf16 %v1156, %v1156
        %v1166 = vlaneseq
        %v1167 = vshrl.u32 %v1166, 7
        %v1168 = vsub.s32 0, %v1167
        %v1169 = vrot.slane %v809, %v1168
        %vm1171 = vcmask 261120
        %v1173 = vsel %vm1171, %v1162, 0
        %v1176 = vsel %vm1171, %v1163, 0
        %1178 = vmatprep.subr.bf16.mxu0 0
        %1179 = vmatpush1.bf16.xpose.msra.mxu0 %v1176
        %1180 = vmatprep.subr.bf16.mxu0 0
        %1181 = vmatpush1.bf16.xpose.msra.mxu0 0
        %1182 = vmatprep.subr.bf16.mxu0 0
        %1183 = vmatpush1.bf16.xpose.msra.mxu0 0
        %1184 = vmatprep.subr.bf16.mxu0 0
        %1185 = vmatpush1.bf16.xpose.msra.mxu0 0
        %1186 = vmatprep.subr.bf16.mxu0 0
        %1187 = vmatpush1.bf16.xpose.msra.mxu0 0
        %1188 = vmatprep.subr.bf16.mxu0 0
        %1189 = vmatpush1.bf16.xpose.msra.mxu0 0
        %1190 = vmatprep.subr.bf16.mxu0 0
        %1191 = vmatpush1.bf16.xpose.msra.mxu0 0
        %1192 = vmatprep.subr.bf16.mxu0 0
        %1193 = vmatpush1.bf16.xpose.msra.mxu0 0
        %1194 = vmatprep.subr.bf16.mxu0 0
        %1195 = vmatpush1.bf16.xpose.msra.mxu0 0
        %1196 = vmatprep.subr.bf16.mxu0 0
        %1197 = vmatpush1.bf16.xpose.msra.mxu0 0
        %1198 = vmatprep.subr.bf16.mxu0 0
        %1199 = vmatpush1.bf16.xpose.msra.mxu0 0
        %1200 = vmatprep.subr.bf16.mxu0 0
        %1201 = vmatpush1.bf16.xpose.msra.mxu0 0
        %1202 = vmatprep.subr.bf16.mxu0 0
        %1203 = vmatpush1.bf16.xpose.msra.mxu0 0
        %1204 = vmatprep.subr.bf16.mxu0 0
        %1205 = vmatpush1.bf16.xpose.msra.mxu0 0
        %1206 = vmatprep.subr.bf16.mxu0 0
        %1207 = vmatpush1.bf16.xpose.msra.mxu0 0
        %1208 = vmatprep.subr.bf16.mxu0 0
        %1209 = vmatpush1.bf16.xpose.msra.mxu0 0
        %1210 = vmatprep.mubr.bf16.mxu0 0
        %1211 = vmatmul.mubr.bf16.gmra.mrb[0].mxu0 %v1173
        %v1212 = vpop.f32.mrb[0].mxu0
        %v1213 = vadd.f32 %v1169, %v1212
        %v1214 = vpop.f32.mrb[0].mxu0
        %v1215 = vpop.f32.mrb[0].mxu0
        %v1216 = vpop.f32.mrb[0].mxu0
        %1217 = vdwg.mxu0
        %vm1218 = vcmask 64512
        %v1219 = vsel %vm1218, %v1213, -inf
        %1220 = vmax.xlane.f32.xlu0 %v1219
        %v1221 = vpop.xlane.xlu0 %1220
        %v1222 = vsub.f32 %v1213, %v1221
        %v1223 = vmul.f32 %v1222, 1.442695
        %v1224 = vpow.pop %v1223
        %v1225 = vsel %vm1218, %v1224, 0.0
        %1226 = vadd.xlane.f32.xlu0 %v1225
        %v1227 = vpop.xlane.xlu0 %1226
        %v1228 = vrcp.pop %v1227
        %v1229 = vmul.f32 %v1224, %v1228
        %v1230 = vpack.c.bf16 %v1229, %v1229
        %v1232 = vsel %vm1218, %v1230, 0
        %vm1234 = vcmask 1043456
        %v1236 = vsel %vm1234, %v1164, 0
        %1238 = vmatprep.subr.bf16.mxu0 0
        %1239 = vmatpush1.bf16.msra.mxu0 %v1236
        %1240 = vmatprep.subr.bf16.mxu0 0
        %1241 = vmatpush1.bf16.msra.mxu0 0
        %1242 = vmatprep.subr.bf16.mxu0 0
        %1243 = vmatpush1.bf16.msra.mxu0 0
        %1244 = vmatprep.subr.bf16.mxu0 0
        %1245 = vmatpush1.bf16.msra.mxu0 0
        %1246 = vmatprep.subr.bf16.mxu0 0
        %1247 = vmatpush1.bf16.msra.mxu0 0
        %1248 = vmatprep.subr.bf16.mxu0 0
        %1249 = vmatpush1.bf16.msra.mxu0 0
        %1250 = vmatprep.subr.bf16.mxu0 0
        %1251 = vmatpush1.bf16.msra.mxu0 0
        %1252 = vmatprep.subr.bf16.mxu0 0
        %1253 = vmatpush1.bf16.msra.mxu0 0
        %1254 = vmatprep.subr.bf16.mxu0 0
        %1255 = vmatpush1.bf16.msra.mxu0 0
        %1256 = vmatprep.subr.bf16.mxu0 0
        %1257 = vmatpush1.bf16.msra.mxu0 0
        %1258 = vmatprep.subr.bf16.mxu0 0
        %1259 = vmatpush1.bf16.msra.mxu0 0
        %1260 = vmatprep.subr.bf16.mxu0 0
        %1261 = vmatpush1.bf16.msra.mxu0 0
        %1262 = vmatprep.subr.bf16.mxu0 0
        %1263 = vmatpush1.bf16.msra.mxu0 0
        %1264 = vmatprep.subr.bf16.mxu0 0
        %1265 = vmatpush1.bf16.msra.mxu0 0
        %1266 = vmatprep.subr.bf16.mxu0 0
        %1267 = vmatpush1.bf16.msra.mxu0 0
        %1268 = vmatprep.subr.bf16.mxu0 0
        %1269 = vmatpush1.bf16.msra.mxu0 0
        %1270 = vmatprep.mubr.bf16.mxu0 0
        %1271 = vmatmul.mubr.bf16.gmra.mrb[0].mxu0 %v1232
        %v1272 = vpop.f32.mrb[0].mxu0
        %v1273 = vadd.f32 0.0, %v1272
        %v1274 = vpop.f32.mrb[0].mxu0
        %v1275 = vpop.f32.mrb[0].mxu0
        %v1276 = vpop.f32.mrb[0].mxu0
        %1277 = vdwg.mxu0
        %1279 = vrot.lane.b32.xlu0 %v1162, 96
        %v1280 = vpop.permute.xlu0 %1279
        %1282 = vrot.lane.b32.xlu0 %v1163, 96
        %v1283 = vpop.permute.xlu0 %1282
        %v1285 = vsel %vm1171, %v1280, 0
        %v1288 = vsel %vm1171, %v1283, 0
        %1290 = vmatprep.subr.bf16.mxu0 0
        %1291 = vmatpush1.bf16.xpose.msra.mxu0 %v1288
        %1292 = vmatprep.subr.bf16.mxu0 0
        %1293 = vmatpush1.bf16.xpose.msra.mxu0 0
        %1294 = vmatprep.subr.bf16.mxu0 0
        %1295 = vmatpush1.bf16.xpose.msra.mxu0 0
        %1296 = vmatprep.subr.bf16.mxu0 0
        %1297 = vmatpush1.bf16.xpose.msra.mxu0 0
        %1298 = vmatprep.subr.bf16.mxu0 0
        %1299 = vmatpush1.bf16.xpose.msra.mxu0 0
        %1300 = vmatprep.subr.bf16.mxu0 0
        %1301 = vmatpush1.bf16.xpose.msra.mxu0 0
        %1302 = vmatprep.subr.bf16.mxu0 0
        %1303 = vmatpush1.bf16.xpose.msra.mxu0 0
        %1304 = vmatprep.subr.bf16.mxu0 0
        %1305 = vmatpush1.bf16.xpose.msra.mxu0 0
        %1306 = vmatprep.subr.bf16.mxu0 0
        %1307 = vmatpush1.bf16.xpose.msra.mxu0 0
        %1308 = vmatprep.subr.bf16.mxu0 0
        %1309 = vmatpush1.bf16.xpose.msra.mxu0 0
        %1310 = vmatprep.subr.bf16.mxu0 0
        %1311 = vmatpush1.bf16.xpose.msra.mxu0 0
        %1312 = vmatprep.subr.bf16.mxu0 0
        %1313 = vmatpush1.bf16.xpose.msra.mxu0 0
        %1314 = vmatprep.subr.bf16.mxu0 0
        %1315 = vmatpush1.bf16.xpose.msra.mxu0 0
        %1316 = vmatprep.subr.bf16.mxu0 0
        %1317 = vmatpush1.bf16.xpose.msra.mxu0 0
        %1318 = vmatprep.subr.bf16.mxu0 0
        %1319 = vmatpush1.bf16.xpose.msra.mxu0 0
        %1320 = vmatprep.subr.bf16.mxu0 0
        %1321 = vmatpush1.bf16.xpose.msra.mxu0 0
        %1322 = vmatprep.mubr.bf16.mxu0 0
        %1323 = vmatmul.mubr.bf16.gmra.mrb[0].mxu0 %v1285
        %v1324 = vpop.f32.mrb[0].mxu0
        %v1325 = vadd.f32 %v1169, %v1324
        %v1326 = vpop.f32.mrb[0].mxu0
        %v1327 = vpop.f32.mrb[0].mxu0
        %v1328 = vpop.f32.mrb[0].mxu0
        %1329 = vdwg.mxu0
        %v1330 = vsel %vm1218, %v1325, -inf
        %1331 = vmax.xlane.f32.xlu0 %v1330
        %v1332 = vpop.xlane.xlu0 %1331
        %v1333 = vsub.f32 %v1325, %v1332
        %v1334 = vmul.f32 %v1333, 1.442695
        %v1335 = vpow.pop %v1334
        %v1336 = vsel %vm1218, %v1335, 0.0
        %1337 = vadd.xlane.f32.xlu0 %v1336
        %v1338 = vpop.xlane.xlu0 %1337
        %v1339 = vrcp.pop %v1338
        %v1340 = vmul.f32 %v1335, %v1339
        %v1341 = vpack.c.bf16 %v1340, %v1340
        %1343 = vrot.lane.b32.xlu0 %v1164, 96
        %v1344 = vpop.permute.xlu0 %1343
        %v1346 = vsel %vm1218, %v1341, 0
        %v1349 = vsel %vm1234, %v1344, 0
        %1351 = vmatprep.subr.bf16.mxu0 0
        %1352 = vmatpush1.bf16.msra.mxu0 %v1349
        %1353 = vmatprep.subr.bf16.mxu0 0
        %1354 = vmatpush1.bf16.msra.mxu0 0
        %1355 = vmatprep.subr.bf16.mxu0 0
        %1356 = vmatpush1.bf16.msra.mxu0 0
        %1357 = vmatprep.subr.bf16.mxu0 0
        %1358 = vmatpush1.bf16.msra.mxu0 0
        %1359 = vmatprep.subr.bf16.mxu0 0
        %1360 = vmatpush1.bf16.msra.mxu0 0
        %1361 = vmatprep.subr.bf16.mxu0 0
        %1362 = vmatpush1.bf16.msra.mxu0 0
        %1363 = vmatprep.subr.bf16.mxu0 0
        %1364 = vmatpush1.bf16.msra.mxu0 0
        %1365 = vmatprep.subr.bf16.mxu0 0
        %1366 = vmatpush1.bf16.msra.mxu0 0
        %1367 = vmatprep.subr.bf16.mxu0 0
        %1368 = vmatpush1.bf16.msra.mxu0 0
        %1369 = vmatprep.subr.bf16.mxu0 0
        %1370 = vmatpush1.bf16.msra.mxu0 0
        %1371 = vmatprep.subr.bf16.mxu0 0
        %1372 = vmatpush1.bf16.msra.mxu0 0
        %1373 = vmatprep.subr.bf16.mxu0 0
        %1374 = vmatpush1.bf16.msra.mxu0 0
        %1375 = vmatprep.subr.bf16.mxu0 0
        %1376 = vmatpush1.bf16.msra.mxu0 0
        %1377 = vmatprep.subr.bf16.mxu0 0
        %1378 = vmatpush1.bf16.msra.mxu0 0
        %1379 = vmatprep.subr.bf16.mxu0 0
        %1380 = vmatpush1.bf16.msra.mxu0 0
        %1381 = vmatprep.subr.bf16.mxu0 0
        %1382 = vmatpush1.bf16.msra.mxu0 0
        %1383 = vmatprep.mubr.bf16.mxu0 0
        %1384 = vmatmul.mubr.bf16.gmra.mrb[0].mxu0 %v1346
        %v1385 = vpop.f32.mrb[0].mxu0
        %v1386 = vadd.f32 0.0, %v1385
        %v1387 = vpop.f32.mrb[0].mxu0
        %v1388 = vpop.f32.mrb[0].mxu0
        %v1389 = vpop.f32.mrb[0].mxu0
        %1390 = vdwg.mxu0
        %1391 = vrot.lane.b32.xlu0 %v1162, 64
        %v1392 = vpop.permute.xlu0 %1391
        %1393 = vrot.lane.b32.xlu0 %v1163, 64
        %v1394 = vpop.permute.xlu0 %1393
        %v1396 = vsel %vm1171, %v1392, 0
        %v1399 = vsel %vm1171, %v1394, 0
        %1401 = vmatprep.subr.bf16.mxu0 0
        %1402 = vmatpush1.bf16.xpose.msra.mxu0 %v1399
        %1403 = vmatprep.subr.bf16.mxu0 0
        %1404 = vmatpush1.bf16.xpose.msra.mxu0 0
        %1405 = vmatprep.subr.bf16.mxu0 0
        %1406 = vmatpush1.bf16.xpose.msra.mxu0 0
        %1407 = vmatprep.subr.bf16.mxu0 0
        %1408 = vmatpush1.bf16.xpose.msra.mxu0 0
        %1409 = vmatprep.subr.bf16.mxu0 0
        %1410 = vmatpush1.bf16.xpose.msra.mxu0 0
        %1411 = vmatprep.subr.bf16.mxu0 0
        %1412 = vmatpush1.bf16.xpose.msra.mxu0 0
        %1413 = vmatprep.subr.bf16.mxu0 0
        %1414 = vmatpush1.bf16.xpose.msra.mxu0 0
        %1415 = vmatprep.subr.bf16.mxu0 0
        %1416 = vmatpush1.bf16.xpose.msra.mxu0 0
        %1417 = vmatprep.subr.bf16.mxu0 0
        %1418 = vmatpush1.bf16.xpose.msra.mxu0 0
        %1419 = vmatprep.subr.bf16.mxu0 0
        %1420 = vmatpush1.bf16.xpose.msra.mxu0 0
        %1421 = vmatprep.subr.bf16.mxu0 0
        %1422 = vmatpush1.bf16.xpose.msra.mxu0 0
        %1423 = vmatprep.subr.bf16.mxu0 0
        %1424 = vmatpush1.bf16.xpose.msra.mxu0 0
        %1425 = vmatprep.subr.bf16.mxu0 0
        %1426 = vmatpush1.bf16.xpose.msra.mxu0 0
        %1427 = vmatprep.subr.bf16.mxu0 0
        %1428 = vmatpush1.bf16.xpose.msra.mxu0 0
        %1429 = vmatprep.subr.bf16.mxu0 0
        %1430 = vmatpush1.bf16.xpose.msra.mxu0 0
        %1431 = vmatprep.subr.bf16.mxu0 0
        %1432 = vmatpush1.bf16.xpose.msra.mxu0 0
        %1433 = vmatprep.mubr.bf16.mxu0 0
        %1434 = vmatmul.mubr.bf16.gmra.mrb[0].mxu0 %v1396
        %v1435 = vpop.f32.mrb[0].mxu0
        %v1436 = vadd.f32 %v1169, %v1435
        %v1437 = vpop.f32.mrb[0].mxu0
        %v1438 = vpop.f32.mrb[0].mxu0
        %v1439 = vpop.f32.mrb[0].mxu0
        %1440 = vdwg.mxu0
        %v1441 = vsel %vm1218, %v1436, -inf
        %1442 = vmax.xlane.f32.xlu0 %v1441
        %v1443 = vpop.xlane.xlu0 %1442
        %v1444 = vsub.f32 %v1436, %v1443
        %v1445 = vmul.f32 %v1444, 1.442695
        %v1446 = vpow.pop %v1445
        %v1447 = vsel %vm1218, %v1446, 0.0
        %1448 = vadd.xlane.f32.xlu0 %v1447
        %v1449 = vpop.xlane.xlu0 %1448
        %v1450 = vrcp.pop %v1449
        %v1451 = vmul.f32 %v1446, %v1450
        %v1452 = vpack.c.bf16 %v1451, %v1451
        %1453 = vrot.lane.b32.xlu0 %v1164, 64
        %v1454 = vpop.permute.xlu0 %1453
        %v1456 = vsel %vm1218, %v1452, 0
        %v1459 = vsel %vm1234, %v1454, 0
        %1461 = vmatprep.subr.bf16.mxu0 0
        %1462 = vmatpush1.bf16.msra.mxu0 %v1459
        %1463 = vmatprep.subr.bf16.mxu0 0
        %1464 = vmatpush1.bf16.msra.mxu0 0
        %1465 = vmatprep.subr.bf16.mxu0 0
        %1466 = vmatpush1.bf16.msra.mxu0 0
        %1467 = vmatprep.subr.bf16.mxu0 0
        %1468 = vmatpush1.bf16.msra.mxu0 0
        %1469 = vmatprep.subr.bf16.mxu0 0
        %1470 = vmatpush1.bf16.msra.mxu0 0
        %1471 = vmatprep.subr.bf16.mxu0 0
        %1472 = vmatpush1.bf16.msra.mxu0 0
        %1473 = vmatprep.subr.bf16.mxu0 0
        %1474 = vmatpush1.bf16.msra.mxu0 0
        %1475 = vmatprep.subr.bf16.mxu0 0
        %1476 = vmatpush1.bf16.msra.mxu0 0
        %1477 = vmatprep.subr.bf16.mxu0 0
        %1478 = vmatpush1.bf16.msra.mxu0 0
        %1479 = vmatprep.subr.bf16.mxu0 0
        %1480 = vmatpush1.bf16.msra.mxu0 0
        %1481 = vmatprep.subr.bf16.mxu0 0
        %1482 = vmatpush1.bf16.msra.mxu0 0
        %1483 = vmatprep.subr.bf16.mxu0 0
        %1484 = vmatpush1.bf16.msra.mxu0 0
        %1485 = vmatprep.subr.bf16.mxu0 0
        %1486 = vmatpush1.bf16.msra.mxu0 0
        %1487 = vmatprep.subr.bf16.mxu0 0
        %1488 = vmatpush1.bf16.msra.mxu0 0
        %1489 = vmatprep.subr.bf16.mxu0 0
        %1490 = vmatpush1.bf16.msra.mxu0 0
        %1491 = vmatprep.subr.bf16.mxu0 0
        %1492 = vmatpush1.bf16.msra.mxu0 0
        %1493 = vmatprep.mubr.bf16.mxu0 0
        %1494 = vmatmul.mubr.bf16.gmra.mrb[0].mxu0 %v1456
        %v1495 = vpop.f32.mrb[0].mxu0
        %v1496 = vadd.f32 0.0, %v1495
        %v1497 = vpop.f32.mrb[0].mxu0
        %v1498 = vpop.f32.mrb[0].mxu0
        %v1499 = vpop.f32.mrb[0].mxu0
        %1500 = vdwg.mxu0
        %1501 = vrot.lane.b32.xlu0 %v1162, 32
        %v1502 = vpop.permute.xlu0 %1501
        %1503 = vrot.lane.b32.xlu0 %v1163, 32
        %v1504 = vpop.permute.xlu0 %1503
        %v1506 = vsel %vm1171, %v1502, 0
        %v1509 = vsel %vm1171, %v1504, 0
        %1511 = vmatprep.subr.bf16.mxu0 0
        %1512 = vmatpush1.bf16.xpose.msra.mxu0 %v1509
        %1513 = vmatprep.subr.bf16.mxu0 0
        %1514 = vmatpush1.bf16.xpose.msra.mxu0 0
        %1515 = vmatprep.subr.bf16.mxu0 0
        %1516 = vmatpush1.bf16.xpose.msra.mxu0 0
        %1517 = vmatprep.subr.bf16.mxu0 0
        %1518 = vmatpush1.bf16.xpose.msra.mxu0 0
        %1519 = vmatprep.subr.bf16.mxu0 0
        %1520 = vmatpush1.bf16.xpose.msra.mxu0 0
        %1521 = vmatprep.subr.bf16.mxu0 0
        %1522 = vmatpush1.bf16.xpose.msra.mxu0 0
        %1523 = vmatprep.subr.bf16.mxu0 0
        %1524 = vmatpush1.bf16.xpose.msra.mxu0 0
        %1525 = vmatprep.subr.bf16.mxu0 0
        %1526 = vmatpush1.bf16.xpose.msra.mxu0 0
        %1527 = vmatprep.subr.bf16.mxu0 0
        %1528 = vmatpush1.bf16.xpose.msra.mxu0 0
        %1529 = vmatprep.subr.bf16.mxu0 0
        %1530 = vmatpush1.bf16.xpose.msra.mxu0 0
        %1531 = vmatprep.subr.bf16.mxu0 0
        %1532 = vmatpush1.bf16.xpose.msra.mxu0 0
        %1533 = vmatprep.subr.bf16.mxu0 0
        %1534 = vmatpush1.bf16.xpose.msra.mxu0 0
        %1535 = vmatprep.subr.bf16.mxu0 0
        %1536 = vmatpush1.bf16.xpose.msra.mxu0 0
        %1537 = vmatprep.subr.bf16.mxu0 0
        %1538 = vmatpush1.bf16.xpose.msra.mxu0 0
        %1539 = vmatprep.subr.bf16.mxu0 0
        %1540 = vmatpush1.bf16.xpose.msra.mxu0 0
        %1541 = vmatprep.subr.bf16.mxu0 0
        %1542 = vmatpush1.bf16.xpose.msra.mxu0 0
        %1543 = vmatprep.mubr.bf16.mxu0 0
        %1544 = vmatmul.mubr.bf16.gmra.mrb[0].mxu0 %v1506
        %v1545 = vpop.f32.mrb[0].mxu0
        %v1546 = vadd.f32 %v1169, %v1545
        %v1547 = vpop.f32.mrb[0].mxu0
        %v1548 = vpop.f32.mrb[0].mxu0
        %v1549 = vpop.f32.mrb[0].mxu0
        %1550 = vdwg.mxu0
        %v1551 = vsel %vm1218, %v1546, -inf
        %1552 = vmax.xlane.f32.xlu0 %v1551
        %v1553 = vpop.xlane.xlu0 %1552
        %v1554 = vsub.f32 %v1546, %v1553
        %v1555 = vmul.f32 %v1554, 1.442695
        %v1556 = vpow.pop %v1555
        %v1557 = vsel %vm1218, %v1556, 0.0
        %1558 = vadd.xlane.f32.xlu0 %v1557
        %v1559 = vpop.xlane.xlu0 %1558
        %v1560 = vrcp.pop %v1559
        %v1561 = vmul.f32 %v1556, %v1560
        %v1562 = vpack.c.bf16 %v1561, %v1561
        %1563 = vrot.lane.b32.xlu0 %v1164, 32
        %v1564 = vpop.permute.xlu0 %1563
        %v1566 = vsel %vm1218, %v1562, 0
        %v1569 = vsel %vm1234, %v1564, 0
        %1571 = vmatprep.subr.bf16.mxu0 0
        %1572 = vmatpush1.bf16.msra.mxu0 %v1569
        %1573 = vmatprep.subr.bf16.mxu0 0
        %1574 = vmatpush1.bf16.msra.mxu0 0
        %1575 = vmatprep.subr.bf16.mxu0 0
        %1576 = vmatpush1.bf16.msra.mxu0 0
        %1577 = vmatprep.subr.bf16.mxu0 0
        %1578 = vmatpush1.bf16.msra.mxu0 0
        %1579 = vmatprep.subr.bf16.mxu0 0
        %1580 = vmatpush1.bf16.msra.mxu0 0
        %1581 = vmatprep.subr.bf16.mxu0 0
        %1582 = vmatpush1.bf16.msra.mxu0 0
        %1583 = vmatprep.subr.bf16.mxu0 0
        %1584 = vmatpush1.bf16.msra.mxu0 0
        %1585 = vmatprep.subr.bf16.mxu0 0
        %1586 = vmatpush1.bf16.msra.mxu0 0
        %1587 = vmatprep.subr.bf16.mxu0 0
        %1588 = vmatpush1.bf16.msra.mxu0 0
        %1589 = vmatprep.subr.bf16.mxu0 0
        %1590 = vmatpush1.bf16.msra.mxu0 0
        %1591 = vmatprep.subr.bf16.mxu0 0
        %1592 = vmatpush1.bf16.msra.mxu0 0
        %1593 = vmatprep.subr.bf16.mxu0 0
        %1594 = vmatpush1.bf16.msra.mxu0 0
        %1595 = vmatprep.subr.bf16.mxu0 0
        %1596 = vmatpush1.bf16.msra.mxu0 0
        %1597 = vmatprep.subr.bf16.mxu0 0
        %1598 = vmatpush1.bf16.msra.mxu0 0
        %1599 = vmatprep.subr.bf16.mxu0 0
        %1600 = vmatpush1.bf16.msra.mxu0 0
        %1601 = vmatprep.subr.bf16.mxu0 0
        %1602 = vmatpush1.bf16.msra.mxu0 0
        %1603 = vmatprep.mubr.bf16.mxu0 0
        %1604 = vmatmul.mubr.bf16.gmra.mrb[0].mxu0 %v1566
        %v1605 = vpop.f32.mrb[0].mxu0
        %v1606 = vadd.f32 0.0, %v1605
        %v1607 = vpop.f32.mrb[0].mxu0
        %v1608 = vpop.f32.mrb[0].mxu0
        %v1609 = vpop.f32.mrb[0].mxu0
        %1610 = vdwg.mxu0
        %1612 = vrot.lane.b32.xlu0 %v1386, 32
        %v1613 = vpop.permute.xlu0 %1612
        %1616 = vrot.lane.b32.xlu0 %v1496, 64
        %v1617 = vpop.permute.xlu0 %1616
        %1620 = vrot.lane.b32.xlu0 %v1606, 96
        %v1621 = vpop.permute.xlu0 %1620
        %v1623 = vsel %vm1171, %v1273, %v1613
        %vm1624 = vcmask 523264
        %v1625 = vsel %vm1624, %v1623, %v1617
        %vm1626 = vcmask 785408
        %v1627 = vsel %vm1626, %v1625, %v1621
        %v1628 = vpack.c.bf16 %v1627, %v1627
        %v1630 = vlaneseq
        %v1631 = vshrl.u32 %v1630, 7
        %v1632 = vsub.s32 0, %v1631
        %v1633 = vrot.slane %v877, %v1632
        %v1651 = vunpack.c.l.b16 %v858
        %v1652 = vunpack.c.l.b16 %v859
        %v1653 = vunpack.c.l.b16 %v860
        %v1654 = vunpack.c.l.b16 %v861
        %v1655 = vunpack.c.l.b16 %v862
        %v1656 = vunpack.c.l.b16 %v863
        %v1657 = vunpack.c.l.b16 %v864
        %v1658 = vunpack.c.l.b16 %v865
        %v1659 = vunpack.c.l.b16 %v866
        %v1660 = vunpack.c.l.b16 %v867
        %v1661 = vunpack.c.l.b16 %v868
        %v1662 = vunpack.c.l.b16 %v869
        %v1663 = vunpack.c.l.b16 %v870
        %v1664 = vunpack.c.l.b16 %v871
        %v1665 = vunpack.c.l.b16 %v872
        %v1666 = vunpack.c.l.b16 %v873
        %v1667 = vpack.c.b16 %v1652, %v1651
        %v1668 = vpack.c.b16 %v1654, %v1653
        %v1669 = vpack.c.b16 %v1656, %v1655
        %v1670 = vpack.c.b16 %v1658, %v1657
        %v1671 = vpack.c.b16 %v1660, %v1659
        %v1672 = vpack.c.b16 %v1662, %v1661
        %v1673 = vpack.c.b16 %v1664, %v1663
        %v1674 = vpack.c.b16 %v1666, %v1665
        %1683 = vmatprep.subr.bf16.mxu0 0
        %1684 = vmatpush1.bf16.msra.mxu0 %v1667
        %1685 = vmatprep.subr.bf16.mxu0 0
        %1686 = vmatpush1.bf16.msra.mxu0 %v1668
        %1687 = vmatprep.subr.bf16.mxu0 0
        %1688 = vmatpush1.bf16.msra.mxu0 %v1669
        %1689 = vmatprep.subr.bf16.mxu0 0
        %1690 = vmatpush1.bf16.msra.mxu0 %v1670
        %1691 = vmatprep.subr.bf16.mxu0 0
        %1692 = vmatpush1.bf16.msra.mxu0 %v1671
        %1693 = vmatprep.subr.bf16.mxu0 0
        %1694 = vmatpush1.bf16.msra.mxu0 %v1672
        %1695 = vmatprep.subr.bf16.mxu0 0
        %1696 = vmatpush1.bf16.msra.mxu0 %v1673
        %1697 = vmatprep.subr.bf16.mxu0 0
        %1698 = vmatpush1.bf16.msra.mxu0 %v1674
        %1699 = vmatprep.subr.bf16.mxu0 0
        %1700 = vmatpush1.bf16.msra.mxu0 0
        %1701 = vmatprep.subr.bf16.mxu0 0
        %1702 = vmatpush1.bf16.msra.mxu0 0
        %1703 = vmatprep.subr.bf16.mxu0 0
        %1704 = vmatpush1.bf16.msra.mxu0 0
        %1705 = vmatprep.subr.bf16.mxu0 0
        %1706 = vmatpush1.bf16.msra.mxu0 0
        %1707 = vmatprep.subr.bf16.mxu0 0
        %1708 = vmatpush1.bf16.msra.mxu0 0
        %1709 = vmatprep.subr.bf16.mxu0 0
        %1710 = vmatpush1.bf16.msra.mxu0 0
        %1711 = vmatprep.subr.bf16.mxu0 0
        %1712 = vmatpush1.bf16.msra.mxu0 0
        %1713 = vmatprep.subr.bf16.mxu0 0
        %1714 = vmatpush1.bf16.msra.mxu0 0
        %1715 = vmatprep.mubr.bf16.mxu0 0
        %1716 = vmatmul.mubr.bf16.gmra.mrb[0].mxu0 %v1628
        %v1717 = vpop.f32.mrb[0].mxu0
        %v1718 = vadd.f32 %v1633, %v1717
        %v1719 = vpop.f32.mrb[0].mxu0
        %v1720 = vpop.f32.mrb[0].mxu0
        %v1721 = vpop.f32.mrb[0].mxu0
        %1722 = vdwg.mxu0
        %v1723 = vadd.f32 %v806, %v1718
        %v1724 = vld [vmem:[%s14] sm:$0x1]
        %v1725 = vld [vmem:[%s15] sm:$0x1]
        %1726 = vadd.xlane.f32.xlu0 %v1723
        %v1727 = vpop.xlane.xlu0 %1726
        %v1728 = vmul.f32 %v1727, %v781
        %v1729 = vmul.f32 %v1723, %v1723
        %1730 = vadd.xlane.f32.xlu0 %v1729
        %v1731 = vpop.xlane.xlu0 %1730
        %v1732 = vmul.f32 %v1731, %v781
        %v1733 = vmul.f32 %v1728, %v1728
        %v1734 = vsub.f32 %v1732, %v1733
        %v1735 = vsub.f32 %v1723, %v1728
        %v1736 = vadd.f32 %v1734, 1e-12
        %v1737 = vrsqrt.pop %v1736
        %v1738 = vmul.f32 %v1735, %v1737
        %v1740 = vlaneseq
        %v1741 = vshrl.u32 %v1740, 7
        %v1742 = vsub.s32 0, %v1741
        %v1743 = vrot.slane %v1724, %v1742
        %v1745 = vmul.f32 %v1738, %v1743
        %v1747 = vlaneseq
        %v1748 = vshrl.u32 %v1747, 7
        %v1749 = vsub.s32 0, %v1748
        %v1750 = vrot.slane %v1725, %v1749
        %v1752 = vadd.f32 %v1745, %v1750
        %v1753 = vpack.c.bf16 %v1752, %v1752
        %v1754 = vld [vmem:[#allocation8] sm:$0xff]
        %v1755 = vld [vmem:[#allocation8 + $0x8] sm:$0xff]
        %v1756 = vld [vmem:[#allocation8 + $0x10] sm:$0xff]
        %v1757 = vld [vmem:[#allocation8 + $0x18] sm:$0xff]
        %v1758 = vld [vmem:[#allocation8 + $0x20] sm:$0xff]
        %v1759 = vld [vmem:[#allocation8 + $0x28] sm:$0xff]
        %v1760 = vld [vmem:[#allocation8 + $0x30] sm:$0xff]
        %v1761 = vld [vmem:[#allocation8 + $0x38] sm:$0xff]
        %v1762 = vld [vmem:[#allocation8 + $0x40] sm:$0xff]
        %v1763 = vld [vmem:[#allocation8 + $0x48] sm:$0xff]
        %v1764 = vld [vmem:[#allocation8 + $0x50] sm:$0xff]
        %v1765 = vld [vmem:[#allocation8 + $0x58] sm:$0xff]
        %v1766 = vld [vmem:[#allocation8 + $0x60] sm:$0xff]
        %v1767 = vld [vmem:[#allocation8 + $0x68] sm:$0xff]
        %v1768 = vld [vmem:[#allocation8 + $0x70] sm:$0xff]
        %v1769 = vld [vmem:[#allocation8 + $0x78] sm:$0xff]
        %v1770 = vld [vmem:[%s17] sm:$0x3]
        %v1772 = vlaneseq
        %v1773 = vshrl.u32 %v1772, 7
        %v1774 = vsub.s32 0, %v1773
        %v1775 = vrot.slane %v1770, %v1774
        %v1776 = vlaneseq
        %v1777 = vshrl.u32 %v1776, 7
        %v1778 = vsub.s32 1, %v1777
        %v1779 = vrot.slane %v1770, %v1778
        %v1798 = vunpack.c.l.b16 %v1754
        %v1799 = vunpack.c.h.b16 %v1754
        %v1800 = vunpack.c.l.b16 %v1755
        %v1801 = vunpack.c.h.b16 %v1755
        %v1802 = vunpack.c.l.b16 %v1756
        %v1803 = vunpack.c.h.b16 %v1756
        %v1804 = vunpack.c.l.b16 %v1757
        %v1805 = vunpack.c.h.b16 %v1757
        %v1806 = vunpack.c.l.b16 %v1758
        %v1807 = vunpack.c.h.b16 %v1758
        %v1808 = vunpack.c.l.b16 %v1759
        %v1809 = vunpack.c.h.b16 %v1759
        %v1810 = vunpack.c.l.b16 %v1760
        %v1811 = vunpack.c.h.b16 %v1760
        %v1812 = vunpack.c.l.b16 %v1761
        %v1813 = vunpack.c.h.b16 %v1761
        %v1814 = vunpack.c.l.b16 %v1762
        %v1815 = vunpack.c.h.b16 %v1762
        %v1816 = vunpack.c.l.b16 %v1763
        %v1817 = vunpack.c.h.b16 %v1763
        %v1818 = vunpack.c.l.b16 %v1764
        %v1819 = vunpack.c.h.b16 %v1764
        %v1820 = vunpack.c.l.b16 %v1765
        %v1821 = vunpack.c.h.b16 %v1765
        %v1822 = vunpack.c.l.b16 %v1766
        %v1823 = vunpack.c.h.b16 %v1766
        %v1824 = vunpack.c.l.b16 %v1767
        %v1825 = vunpack.c.h.b16 %v1767
        %v1826 = vunpack.c.l.b16 %v1768
        %v1827 = vunpack.c.h.b16 %v1768
        %v1828 = vunpack.c.l.b16 %v1769
        %v1829 = vunpack.c.h.b16 %v1769
        %v1830 = vpack.c.b16 %v1800, %v1798
        %v1831 = vpack.c.b16 %v1801, %v1799
        %v1832 = vpack.c.b16 %v1804, %v1802
        %v1833 = vpack.c.b16 %v1805, %v1803
        %v1834 = vpack.c.b16 %v1808, %v1806
        %v1835 = vpack.c.b16 %v1809, %v1807
        %v1836 = vpack.c.b16 %v1812, %v1810
        %v1837 = vpack.c.b16 %v1813, %v1811
        %v1838 = vpack.c.b16 %v1816, %v1814
        %v1839 = vpack.c.b16 %v1817, %v1815
        %v1840 = vpack.c.b16 %v1820, %v1818
        %v1841 = vpack.c.b16 %v1821, %v1819
        %v1842 = vpack.c.b16 %v1824, %v1822
        %v1843 = vpack.c.b16 %v1825, %v1823
        %v1844 = vpack.c.b16 %v1828, %v1826
        %v1845 = vpack.c.b16 %v1829, %v1827
        %1862 = vmatprep.subr.bf16.mxu0 %v1831
        %1863 = vmatpush1.bf16.msra.mxu0 %v1830
        %1864 = vmatprep.subr.bf16.mxu0 %v1833
        %1865 = vmatpush1.bf16.msra.mxu0 %v1832
        %1866 = vmatprep.subr.bf16.mxu0 %v1835
        %1867 = vmatpush1.bf16.msra.mxu0 %v1834
        %1868 = vmatprep.subr.bf16.mxu0 %v1837
        %1869 = vmatpush1.bf16.msra.mxu0 %v1836
        %1870 = vmatprep.subr.bf16.mxu0 %v1839
        %1871 = vmatpush1.bf16.msra.mxu0 %v1838
        %1872 = vmatprep.subr.bf16.mxu0 %v1841
        %1873 = vmatpush1.bf16.msra.mxu0 %v1840
        %1874 = vmatprep.subr.bf16.mxu0 %v1843
        %1875 = vmatpush1.bf16.msra.mxu0 %v1842
        %1876 = vmatprep.subr.bf16.mxu0 %v1845
        %1877 = vmatpush1.bf16.msra.mxu0 %v1844
        %1878 = vmatprep.subr.bf16.mxu0 0
        %1879 = vmatpush1.bf16.msra.mxu0 0
        %1880 = vmatprep.subr.bf16.mxu0 0
        %1881 = vmatpush1.bf16.msra.mxu0 0
        %1882 = vmatprep.subr.bf16.mxu0 0
        %1883 = vmatpush1.bf16.msra.mxu0 0
        %1884 = vmatprep.subr.bf16.mxu0 0
        %1885 = vmatpush1.bf16.msra.mxu0 0
        %1886 = vmatprep.subr.bf16.mxu0 0
        %1887 = vmatpush1.bf16.msra.mxu0 0
        %1888 = vmatprep.subr.bf16.mxu0 0
        %1889 = vmatpush1.bf16.msra.mxu0 0
        %1890 = vmatprep.subr.bf16.mxu0 0
        %1891 = vmatpush1.bf16.msra.mxu0 0
        %1892 = vmatprep.subr.bf16.mxu0 0
        %1893 = vmatpush1.bf16.msra.mxu0 0
        %1894 = vmatprep.mubr.bf16.mxu0 0
        %1895 = vmatmul.mubr.bf16.gmra.mrb[0].mxu0 %v1753
        %v1896 = vpop.f32.mrb[0].mxu0
        %v1897 = vadd.f32 %v1775, %v1896
        %v1898 = vpop.f32.mrb[0].mxu0
        %v1899 = vadd.f32 %v1779, %v1898
        %v1900 = vpop.f32.mrb[0].mxu0
        %v1901 = vpop.f32.mrb[0].mxu0
        %1902 = vdwg.mxu0
        %v1903 = vmul.f32 %v1897, 0.5
        %v1904 = vmul.f32 %v1899, 0.5
        %v1905 = vmul.f32 %v1897, 0.044715
        %v1906 = vmul.f32 %v1899, 0.044715
        %v1907 = vmul.f32 %v1905, %v1897
        %v1908 = vmul.f32 %v1906, %v1899
        %v1909 = vmul.f32 %v1907, %v1897
        %v1910 = vmul.f32 %v1908, %v1899
        %v1911 = vadd.f32 %v1897, %v1909
        %v1912 = vadd.f32 %v1899, %v1910
        %v1913 = vmul.f32 %v1911, 0.7978846
        %v1914 = vmul.f32 %v1912, 0.7978846
        %v1915 = vtanh.pop %v1913
        %v1916 = vtanh.pop %v1914
        %v1917 = vadd.f32 %v1915, 1.0
        %v1918 = vadd.f32 %v1916, 1.0
        %v1919 = vmul.f32 %v1903, %v1917
        %v1920 = vmul.f32 %v1904, %v1918
        %v1921 = vpack.c.bf16 %v1919, %v1919
        %v1922 = vpack.c.bf16 %v1920, %v1920
        %v1923 = vld [vmem:[#allocation10] sm:$0xf]
        %v1924 = vld [vmem:[#allocation10 + $0x4] sm:$0xf]
        %v1925 = vld [vmem:[#allocation10 + $0x8] sm:$0xf]
        %v1926 = vld [vmem:[#allocation10 + $0xc] sm:$0xf]
        %v1927 = vld [vmem:[#allocation10 + $0x10] sm:$0xf]
        %v1928 = vld [vmem:[#allocation10 + $0x14] sm:$0xf]
        %v1929 = vld [vmem:[#allocation10 + $0x18] sm:$0xf]
        %v1930 = vld [vmem:[#allocation10 + $0x1c] sm:$0xf]
        %v1931 = vld [vmem:[#allocation10 + $0x20] sm:$0xf]
        %v1932 = vld [vmem:[#allocation10 + $0x24] sm:$0xf]
        %v1933 = vld [vmem:[#allocation10 + $0x28] sm:$0xf]
        %v1934 = vld [vmem:[#allocation10 + $0x2c] sm:$0xf]
        %v1935 = vld [vmem:[#allocation10 + $0x30] sm:$0xf]
        %v1936 = vld [vmem:[#allocation10 + $0x34] sm:$0xf]
        %v1937 = vld [vmem:[#allocation10 + $0x38] sm:$0xf]
        %v1938 = vld [vmem:[#allocation10 + $0x3c] sm:$0xf]
        %v1939 = vld [vmem:[#allocation10 + $0x40] sm:$0xf]
        %v1940 = vld [vmem:[#allocation10 + $0x44] sm:$0xf]
        %v1941 = vld [vmem:[#allocation10 + $0x48] sm:$0xf]
        %v1942 = vld [vmem:[#allocation10 + $0x4c] sm:$0xf]
        %v1943 = vld [vmem:[#allocation10 + $0x50] sm:$0xf]
        %v1944 = vld [vmem:[#allocation10 + $0x54] sm:$0xf]
        %v1945 = vld [vmem:[#allocation10 + $0x58] sm:$0xf]
        %v1946 = vld [vmem:[#allocation10 + $0x5c] sm:$0xf]
        %v1947 = vld [vmem:[#allocation10 + $0x60] sm:$0xf]
        %v1948 = vld [vmem:[#allocation10 + $0x64] sm:$0xf]
        %v1949 = vld [vmem:[#allocation10 + $0x68] sm:$0xf]
        %v1950 = vld [vmem:[#allocation10 + $0x6c] sm:$0xf]
        %v1951 = vld [vmem:[#allocation10 + $0x70] sm:$0xf]
        %v1952 = vld [vmem:[#allocation10 + $0x74] sm:$0xf]
        %v1953 = vld [vmem:[#allocation10 + $0x78] sm:$0xf]
        %v1954 = vld [vmem:[#allocation10 + $0x7c] sm:$0xf]
        %v1955 = vld [vmem:[%s19] sm:$0x1]
        %v1957 = vlaneseq
        %v1958 = vshrl.u32 %v1957, 7
        %v1959 = vsub.s32 0, %v1958
        %v1960 = vrot.slane %v1955, %v1959
        %v1994 = vunpack.c.l.b16 %v1923
        %v1995 = vunpack.c.l.b16 %v1924
        %v1996 = vunpack.c.l.b16 %v1925
        %v1997 = vunpack.c.l.b16 %v1926
        %v1998 = vunpack.c.l.b16 %v1927
        %v1999 = vunpack.c.l.b16 %v1928
        %v2000 = vunpack.c.l.b16 %v1929
        %v2001 = vunpack.c.l.b16 %v1930
        %v2002 = vunpack.c.l.b16 %v1931
        %v2003 = vunpack.c.l.b16 %v1932
        %v2004 = vunpack.c.l.b16 %v1933
        %v2005 = vunpack.c.l.b16 %v1934
        %v2006 = vunpack.c.l.b16 %v1935
        %v2007 = vunpack.c.l.b16 %v1936
        %v2008 = vunpack.c.l.b16 %v1937
        %v2009 = vunpack.c.l.b16 %v1938
        %v2010 = vunpack.c.l.b16 %v1939
        %v2011 = vunpack.c.l.b16 %v1940
        %v2012 = vunpack.c.l.b16 %v1941
        %v2013 = vunpack.c.l.b16 %v1942
        %v2014 = vunpack.c.l.b16 %v1943
        %v2015 = vunpack.c.l.b16 %v1944
        %v2016 = vunpack.c.l.b16 %v1945
        %v2017 = vunpack.c.l.b16 %v1946
        %v2018 = vunpack.c.l.b16 %v1947
        %v2019 = vunpack.c.l.b16 %v1948
        %v2020 = vunpack.c.l.b16 %v1949
        %v2021 = vunpack.c.l.b16 %v1950
        %v2022 = vunpack.c.l.b16 %v1951
        %v2023 = vunpack.c.l.b16 %v1952
        %v2024 = vunpack.c.l.b16 %v1953
        %v2025 = vunpack.c.l.b16 %v1954
        %v2026 = vpack.c.b16 %v1995, %v1994
        %v2027 = vpack.c.b16 %v1997, %v1996
        %v2028 = vpack.c.b16 %v1999, %v1998
        %v2029 = vpack.c.b16 %v2001, %v2000
        %v2030 = vpack.c.b16 %v2003, %v2002
        %v2031 = vpack.c.b16 %v2005, %v2004
        %v2032 = vpack.c.b16 %v2007, %v2006
        %v2033 = vpack.c.b16 %v2009, %v2008
        %v2034 = vpack.c.b16 %v2011, %v2010
        %v2035 = vpack.c.b16 %v2013, %v2012
        %v2036 = vpack.c.b16 %v2015, %v2014
        %v2037 = vpack.c.b16 %v2017, %v2016
        %v2038 = vpack.c.b16 %v2019, %v2018
        %v2039 = vpack.c.b16 %v2021, %v2020
        %v2040 = vpack.c.b16 %v2023, %v2022
        %v2041 = vpack.c.b16 %v2025, %v2024
        %2058 = vmatprep.subr.bf16.mxu0 0
        %2059 = vmatpush1.bf16.msra.mxu0 %v2026
        %2060 = vmatprep.subr.bf16.mxu0 0
        %2061 = vmatpush1.bf16.msra.mxu0 %v2027
        %2062 = vmatprep.subr.bf16.mxu0 0
        %2063 = vmatpush1.bf16.msra.mxu0 %v2028
        %2064 = vmatprep.subr.bf16.mxu0 0
        %2065 = vmatpush1.bf16.msra.mxu0 %v2029
        %2066 = vmatprep.subr.bf16.mxu0 0
        %2067 = vmatpush1.bf16.msra.mxu0 %v2030
        %2068 = vmatprep.subr.bf16.mxu0 0
        %2069 = vmatpush1.bf16.msra.mxu0 %v2031
        %2070 = vmatprep.subr.bf16.mxu0 0
        %2071 = vmatpush1.bf16.msra.mxu0 %v2032
        %2072 = vmatprep.subr.bf16.mxu0 0
        %2073 = vmatpush1.bf16.msra.mxu0 %v2033
        %2074 = vmatprep.subr.bf16.mxu0 0
        %2075 = vmatpush1.bf16.msra.mxu0 %v2034
        %2076 = vmatprep.subr.bf16.mxu0 0
        %2077 = vmatpush1.bf16.msra.mxu0 %v2035
        %2078 = vmatprep.subr.bf16.mxu0 0
        %2079 = vmatpush1.bf16.msra.mxu0 %v2036
        %2080 = vmatprep.subr.bf16.mxu0 0
        %2081 = vmatpush1.bf16.msra.mxu0 %v2037
        %2082 = vmatprep.subr.bf16.mxu0 0
        %2083 = vmatpush1.bf16.msra.mxu0 %v2038
        %2084 = vmatprep.subr.bf16.mxu0 0
        %2085 = vmatpush1.bf16.msra.mxu0 %v2039
        %2086 = vmatprep.subr.bf16.mxu0 0
        %2087 = vmatpush1.bf16.msra.mxu0 %v2040
        %2088 = vmatprep.subr.bf16.mxu0 0
        %2089 = vmatpush1.bf16.msra.mxu0 %v2041
        %2090 = vmatprep.mubr.bf16.mxu0 %v1922
        %2091 = vmatmul.mubr.bf16.gmra.mrb[0].mxu0 %v1921
        %v2092 = vpop.f32.mrb[0].mxu0
        %v2093 = vadd.f32 %v1960, %v2092
        %v2094 = vpop.f32.mrb[0].mxu0
        %v2095 = vpop.f32.mrb[0].mxu0
        %v2096 = vpop.f32.mrb[0].mxu0
        %2097 = vdwg.mxu0
        %v2098 = vadd.f32 %v1752, %v2093
        %v2099 = vld [vmem:[%s20] sm:$0x1]
        %v2100 = vld [vmem:[%s21] sm:$0x1]
        %2101 = vadd.xlane.f32.xlu0 %v2098
        %v2102 = vpop.xlane.xlu0 %2101
        %v2103 = vmul.f32 %v2102, %v781
        %v2104 = vmul.f32 %v2098, %v2098
        %2105 = vadd.xlane.f32.xlu0 %v2104
        %v2106 = vpop.xlane.xlu0 %2105
        %v2107 = vmul.f32 %v2106, %v781
        %v2108 = vmul.f32 %v2103, %v2103
        %v2109 = vsub.f32 %v2107, %v2108
        %v2110 = vsub.f32 %v2098, %v2103
        %v2111 = vadd.f32 %v2109, 1e-12
        %v2112 = vrsqrt.pop %v2111
        %v2113 = vmul.f32 %v2110, %v2112
        %v2115 = vlaneseq
        %v2116 = vshrl.u32 %v2115, 7
        %v2117 = vsub.s32 0, %v2116
        %v2118 = vrot.slane %v2099, %v2117
        %v2120 = vmul.f32 %v2113, %v2118
        %v2122 = vlaneseq
        %v2123 = vshrl.u32 %v2122, 7
        %v2124 = vsub.s32 0, %v2123
        %v2125 = vrot.slane %v2100, %v2124
        %v2127 = vadd.f32 %v2120, %v2125
        %s2128 = scalar_lea.vmem %s6, 64
        %v2129 = vld [vmem:[%s2128] sm:$0xf]
        %v2130 = vld [vmem:[%s2128 + $0x4] sm:$0xf]
        %v2131 = vld [vmem:[%s2128 + $0x8] sm:$0xf]
        %v2132 = vld [vmem:[%s2128 + $0xc] sm:$0xf]
        %v2133 = vld [vmem:[%s2128 + $0x10] sm:$0xf]
        %v2134 = vld [vmem:[%s2128 + $0x14] sm:$0xf]
        %v2135 = vld [vmem:[%s2128 + $0x18] sm:$0xf]
        %v2136 = vld [vmem:[%s2128 + $0x1c] sm:$0xf]
        %v2137 = vld [vmem:[%s2128 + $0x20] sm:$0xf]
        %v2138 = vld [vmem:[%s2128 + $0x24] sm:$0xf]
        %v2139 = vld [vmem:[%s2128 + $0x28] sm:$0xf]
        %v2140 = vld [vmem:[%s2128 + $0x2c] sm:$0xf]
        %v2141 = vld [vmem:[%s2128 + $0x30] sm:$0xf]
        %v2142 = vld [vmem:[%s2128 + $0x34] sm:$0xf]
        %v2143 = vld [vmem:[%s2128 + $0x38] sm:$0xf]
        %v2144 = vld [vmem:[%s2128 + $0x3c] sm:$0xf]
        %s2145 = scalar_lea.vmem [#allocation2], 64
        %v2146 = vld [vmem:[%s2145] sm:$0xf]
        %v2147 = vld [vmem:[%s2145 + $0x4] sm:$0xf]
        %v2148 = vld [vmem:[%s2145 + $0x8] sm:$0xf]
        %v2149 = vld [vmem:[%s2145 + $0xc] sm:$0xf]
        %v2150 = vld [vmem:[%s2145 + $0x10] sm:$0xf]
        %v2151 = vld [vmem:[%s2145 + $0x14] sm:$0xf]
        %v2152 = vld [vmem:[%s2145 + $0x18] sm:$0xf]
        %v2153 = vld [vmem:[%s2145 + $0x1c] sm:$0xf]
        %v2154 = vld [vmem:[%s2145 + $0x20] sm:$0xf]
        %v2155 = vld [vmem:[%s2145 + $0x24] sm:$0xf]
        %v2156 = vld [vmem:[%s2145 + $0x28] sm:$0xf]
        %v2157 = vld [vmem:[%s2145 + $0x2c] sm:$0xf]
        %v2158 = vld [vmem:[%s2145 + $0x30] sm:$0xf]
        %v2159 = vld [vmem:[%s2145 + $0x34] sm:$0xf]
        %v2160 = vld [vmem:[%s2145 + $0x38] sm:$0xf]
        %v2161 = vld [vmem:[%s2145 + $0x3c] sm:$0xf]
        %s2162 = scalar_lea.vmem [#allocation5], 64
        %v2163 = vld [vmem:[%s2162] sm:$0xf]
        %v2164 = vld [vmem:[%s2162 + $0x4] sm:$0xf]
        %v2165 = vld [vmem:[%s2162 + $0x8] sm:$0xf]
        %v2166 = vld [vmem:[%s2162 + $0xc] sm:$0xf]
        %v2167 = vld [vmem:[%s2162 + $0x10] sm:$0xf]
        %v2168 = vld [vmem:[%s2162 + $0x14] sm:$0xf]
        %v2169 = vld [vmem:[%s2162 + $0x18] sm:$0xf]
        %v2170 = vld [vmem:[%s2162 + $0x1c] sm:$0xf]
        %v2171 = vld [vmem:[%s2162 + $0x20] sm:$0xf]
        %v2172 = vld [vmem:[%s2162 + $0x24] sm:$0xf]
        %v2173 = vld [vmem:[%s2162 + $0x28] sm:$0xf]
        %v2174 = vld [vmem:[%s2162 + $0x2c] sm:$0xf]
        %v2175 = vld [vmem:[%s2162 + $0x30] sm:$0xf]
        %v2176 = vld [vmem:[%s2162 + $0x34] sm:$0xf]
        %v2177 = vld [vmem:[%s2162 + $0x38] sm:$0xf]
        %v2178 = vld [vmem:[%s2162 + $0x3c] sm:$0xf]
        %s2179 = scalar_lea.vmem [#allocation7], 64
        %v2180 = vld [vmem:[%s2179] sm:$0xf]
        %v2181 = vld [vmem:[%s2179 + $0x4] sm:$0xf]
        %v2182 = vld [vmem:[%s2179 + $0x8] sm:$0xf]
        %v2183 = vld [vmem:[%s2179 + $0xc] sm:$0xf]
        %v2184 = vld [vmem:[%s2179 + $0x10] sm:$0xf]
        %v2185 = vld [vmem:[%s2179 + $0x14] sm:$0xf]
        %v2186 = vld [vmem:[%s2179 + $0x18] sm:$0xf]
        %v2187 = vld [vmem:[%s2179 + $0x1c] sm:$0xf]
        %v2188 = vld [vmem:[%s2179 + $0x20] sm:$0xf]
        %v2189 = vld [vmem:[%s2179 + $0x24] sm:$0xf]
        %v2190 = vld [vmem:[%s2179 + $0x28] sm:$0xf]
        %v2191 = vld [vmem:[%s2179 + $0x2c] sm:$0xf]
        %v2192 = vld [vmem:[%s2179 + $0x30] sm:$0xf]
        %v2193 = vld [vmem:[%s2179 + $0x34] sm:$0xf]
        %v2194 = vld [vmem:[%s2179 + $0x38] sm:$0xf]
        %v2195 = vld [vmem:[%s2179 + $0x3c] sm:$0xf]
        %s2196 = scalar_lea.vmem %s7, 1
        %v2197 = vld [vmem:[%s2196] sm:$0x1]
        %s2198 = scalar_lea.vmem %s9, 1
        %v2199 = vld [vmem:[%s2198] sm:$0x1]
        %s2200 = scalar_lea.vmem %s11, 1
        %v2201 = vld [vmem:[%s2200] sm:$0x1]
        %s2202 = scalar_lea.vmem %s13, 1
        %v2203 = vld [vmem:[%s2202] sm:$0x1]
        %v2204 = vpack.c.bf16 %v2127, %v2127
        %v2206 = vlaneseq
        %v2207 = vshrl.u32 %v2206, 7
        %v2208 = vsub.s32 0, %v2207
        %v2209 = vrot.slane %v2197, %v2208
        %v2227 = vunpack.c.l.b16 %v2129
        %v2228 = vunpack.c.l.b16 %v2130
        %v2229 = vunpack.c.l.b16 %v2131
        %v2230 = vunpack.c.l.b16 %v2132
        %v2231 = vunpack.c.l.b16 %v2133
        %v2232 = vunpack.c.l.b16 %v2134
        %v2233 = vunpack.c.l.b16 %v2135
        %v2234 = vunpack.c.l.b16 %v2136
        %v2235 = vunpack.c.l.b16 %v2137
        %v2236 = vunpack.c.l.b16 %v2138
        %v2237 = vunpack.c.l.b16 %v2139
        %v2238 = vunpack.c.l.b16 %v2140
        %v2239 = vunpack.c.l.b16 %v2141
        %v2240 = vunpack.c.l.b16 %v2142
        %v2241 = vunpack.c.l.b16 %v2143
        %v2242 = vunpack.c.l.b16 %v2144
        %v2243 = vpack.c.b16 %v2228, %v2227
        %v2244 = vpack.c.b16 %v2230, %v2229
        %v2245 = vpack.c.b16 %v2232, %v2231
        %v2246 = vpack.c.b16 %v2234, %v2233
        %v2247 = vpack.c.b16 %v2236, %v2235
        %v2248 = vpack.c.b16 %v2238, %v2237
        %v2249 = vpack.c.b16 %v2240, %v2239
        %v2250 = vpack.c.b16 %v2242, %v2241
        %2259 = vmatprep.subr.bf16.mxu0 0
        %2260 = vmatpush1.bf16.msra.mxu0 %v2243
        %2261 = vmatprep.subr.bf16.mxu0 0
        %2262 = vmatpush1.bf16.msra.mxu0 %v2244
        %2263 = vmatprep.subr.bf16.mxu0 0
        %2264 = vmatpush1.bf16.msra.mxu0 %v2245
        %2265 = vmatprep.subr.bf16.mxu0 0
        %2266 = vmatpush1.bf16.msra.mxu0 %v2246
        %2267 = vmatprep.subr.bf16.mxu0 0
        %2268 = vmatpush1.bf16.msra.mxu0 %v2247
        %2269 = vmatprep.subr.bf16.mxu0 0
        %2270 = vmatpush1.bf16.msra.mxu0 %v2248
        %2271 = vmatprep.subr.bf16.mxu0 0
        %2272 = vmatpush1.bf16.msra.mxu0 %v2249
        %2273 = vmatprep.subr.bf16.mxu0 0
        %2274 = vmatpush1.bf16.msra.mxu0 %v2250
        %2275 = vmatprep.subr.bf16.mxu0 0
        %2276 = vmatpush1.bf16.msra.mxu0 0
        %2277 = vmatprep.subr.bf16.mxu0 0
        %2278 = vmatpush1.bf16.msra.mxu0 0
        %2279 = vmatprep.subr.bf16.mxu0 0
        %2280 = vmatpush1.bf16.msra.mxu0 0
        %2281 = vmatprep.subr.bf16.mxu0 0
        %2282 = vmatpush1.bf16.msra.mxu0 0
        %2283 = vmatprep.subr.bf16.mxu0 0
        %2284 = vmatpush1.bf16.msra.mxu0 0
        %2285 = vmatprep.subr.bf16.mxu0 0
        %2286 = vmatpush1.bf16.msra.mxu0 0
        %2287 = vmatprep.subr.bf16.mxu0 0
        %2288 = vmatpush1.bf16.msra.mxu0 0
        %2289 = vmatprep.subr.bf16.mxu0 0
        %2290 = vmatpush1.bf16.msra.mxu0 0
        %2291 = vmatprep.mubr.bf16.mxu0 0
        %2292 = vmatmul.mubr.bf16.gmra.mrb[0].mxu0 %v2204
        %v2293 = vpop.f32.mrb[0].mxu0
        %v2294 = vadd.f32 %v2209, %v2293
        %v2295 = vpop.f32.mrb[0].mxu0
        %v2296 = vpop.f32.mrb[0].mxu0
        %v2297 = vpop.f32.mrb[0].mxu0
        %2298 = vdwg.mxu0
        %v2300 = vlaneseq
        %v2301 = vshrl.u32 %v2300, 7
        %v2302 = vsub.s32 0, %v2301
        %v2303 = vrot.slane %v2199, %v2302
        %v2321 = vunpack.c.l.b16 %v2146
        %v2322 = vunpack.c.l.b16 %v2147
        %v2323 = vunpack.c.l.b16 %v2148
        %v2324 = vunpack.c.l.b16 %v2149
        %v2325 = vunpack.c.l.b16 %v2150
        %v2326 = vunpack.c.l.b16 %v2151
        %v2327 = vunpack.c.l.b16 %v2152
        %v2328 = vunpack.c.l.b16 %v2153
        %v2329 = vunpack.c.l.b16 %v2154
        %v2330 = vunpack.c.l.b16 %v2155
        %v2331 = vunpack.c.l.b16 %v2156
        %v2332 = vunpack.c.l.b16 %v2157
        %v2333 = vunpack.c.l.b16 %v2158
        %v2334 = vunpack.c.l.b16 %v2159
        %v2335 = vunpack.c.l.b16 %v2160
        %v2336 = vunpack.c.l.b16 %v2161
        %v2337 = vpack.c.b16 %v2322, %v2321
        %v2338 = vpack.c.b16 %v2324, %v2323
        %v2339 = vpack.c.b16 %v2326, %v2325
        %v2340 = vpack.c.b16 %v2328, %v2327
        %v2341 = vpack.c.b16 %v2330, %v2329
        %v2342 = vpack.c.b16 %v2332, %v2331
        %v2343 = vpack.c.b16 %v2334, %v2333
        %v2344 = vpack.c.b16 %v2336, %v2335
        %2353 = vmatprep.subr.bf16.mxu0 0
        %2354 = vmatpush1.bf16.msra.mxu0 %v2337
        %2355 = vmatprep.subr.bf16.mxu0 0
        %2356 = vmatpush1.bf16.msra.mxu0 %v2338
        %2357 = vmatprep.subr.bf16.mxu0 0
        %2358 = vmatpush1.bf16.msra.mxu0 %v2339
        %2359 = vmatprep.subr.bf16.mxu0 0
        %2360 = vmatpush1.bf16.msra.mxu0 %v2340
        %2361 = vmatprep.subr.bf16.mxu0 0
        %2362 = vmatpush1.bf16.msra.mxu0 %v2341
        %2363 = vmatprep.subr.bf16.mxu0 0
        %2364 = vmatpush1.bf16.msra.mxu0 %v2342
        %2365 = vmatprep.subr.bf16.mxu0 0
        %2366 = vmatpush1.bf16.msra.mxu0 %v2343
        %2367 = vmatprep.subr.bf16.mxu0 0
        %2368 = vmatpush1.bf16.msra.mxu0 %v2344
        %2369 = vmatprep.subr.bf16.mxu0 0
        %2370 = vmatpush1.bf16.msra.mxu0 0
        %2371 = vmatprep.subr.bf16.mxu0 0
        %2372 = vmatpush1.bf16.msra.mxu0 0
        %2373 = vmatprep.subr.bf16.mxu0 0
        %2374 = vmatpush1.bf16.msra.mxu0 0
        %2375 = vmatprep.subr.bf16.mxu0 0
        %2376 = vmatpush1.bf16.msra.mxu0 0
        %2377 = vmatprep.subr.bf16.mxu0 0
        %2378 = vmatpush1.bf16.msra.mxu0 0
        %2379 = vmatprep.subr.bf16.mxu0 0
        %2380 = vmatpush1.bf16.msra.mxu0 0
        %2381 = vmatprep.subr.bf16.mxu0 0
        %2382 = vmatpush1.bf16.msra.mxu0 0
        %2383 = vmatprep.subr.bf16.mxu0 0
        %2384 = vmatpush1.bf16.msra.mxu0 0
        %2385 = vmatprep.mubr.bf16.mxu0 0
        %2386 = vmatmul.mubr.bf16.gmra.mrb[0].mxu0 %v2204
        %v2387 = vpop.f32.mrb[0].mxu0
        %v2388 = vadd.f32 %v2303, %v2387
        %v2389 = vpop.f32.mrb[0].mxu0
        %v2390 = vpop.f32.mrb[0].mxu0
        %v2391 = vpop.f32.mrb[0].mxu0
        %2392 = vdwg.mxu0
        %v2394 = vlaneseq
        %v2395 = vshrl.u32 %v2394, 7
        %v2396 = vsub.s32 0, %v2395
        %v2397 = vrot.slane %v2201, %v2396
        %v2415 = vunpack.c.l.b16 %v2163
        %v2416 = vunpack.c.l.b16 %v2164
        %v2417 = vunpack.c.l.b16 %v2165
        %v2418 = vunpack.c.l.b16 %v2166
        %v2419 = vunpack.c.l.b16 %v2167
        %v2420 = vunpack.c.l.b16 %v2168
        %v2421 = vunpack.c.l.b16 %v2169
        %v2422 = vunpack.c.l.b16 %v2170
        %v2423 = vunpack.c.l.b16 %v2171
        %v2424 = vunpack.c.l.b16 %v2172
        %v2425 = vunpack.c.l.b16 %v2173
        %v2426 = vunpack.c.l.b16 %v2174
        %v2427 = vunpack.c.l.b16 %v2175
        %v2428 = vunpack.c.l.b16 %v2176
        %v2429 = vunpack.c.l.b16 %v2177
        %v2430 = vunpack.c.l.b16 %v2178
        %v2431 = vpack.c.b16 %v2416, %v2415
        %v2432 = vpack.c.b16 %v2418, %v2417
        %v2433 = vpack.c.b16 %v2420, %v2419
        %v2434 = vpack.c.b16 %v2422, %v2421
        %v2435 = vpack.c.b16 %v2424, %v2423
        %v2436 = vpack.c.b16 %v2426, %v2425
        %v2437 = vpack.c.b16 %v2428, %v2427
        %v2438 = vpack.c.b16 %v2430, %v2429
        %2447 = vmatprep.subr.bf16.mxu0 0
        %2448 = vmatpush1.bf16.msra.mxu0 %v2431
        %2449 = vmatprep.subr.bf16.mxu0 0
        %2450 = vmatpush1.bf16.msra.mxu0 %v2432
        %2451 = vmatprep.subr.bf16.mxu0 0
        %2452 = vmatpush1.bf16.msra.mxu0 %v2433
        %2453 = vmatprep.subr.bf16.mxu0 0
        %2454 = vmatpush1.bf16.msra.mxu0 %v2434
        %2455 = vmatprep.subr.bf16.mxu0 0
        %2456 = vmatpush1.bf16.msra.mxu0 %v2435
        %2457 = vmatprep.subr.bf16.mxu0 0
        %2458 = vmatpush1.bf16.msra.mxu0 %v2436
        %2459 = vmatprep.subr.bf16.mxu0 0
        %2460 = vmatpush1.bf16.msra.mxu0 %v2437
        %2461 = vmatprep.subr.bf16.mxu0 0
        %2462 = vmatpush1.bf16.msra.mxu0 %v2438
        %2463 = vmatprep.subr.bf16.mxu0 0
        %2464 = vmatpush1.bf16.msra.mxu0 0
        %2465 = vmatprep.subr.bf16.mxu0 0
        %2466 = vmatpush1.bf16.msra.mxu0 0
        %2467 = vmatprep.subr.bf16.mxu0 0
        %2468 = vmatpush1.bf16.msra.mxu0 0
        %2469 = vmatprep.subr.bf16.mxu0 0
        %2470 = vmatpush1.bf16.msra.mxu0 0
        %2471 = vmatprep.subr.bf16.mxu0 0
        %2472 = vmatpush1.bf16.msra.mxu0 0
        %2473 = vmatprep.subr.bf16.mxu0 0
        %2474 = vmatpush1.bf16.msra.mxu0 0
        %2475 = vmatprep.subr.bf16.mxu0 0
        %2476 = vmatpush1.bf16.msra.mxu0 0
        %2477 = vmatprep.subr.bf16.mxu0 0
        %2478 = vmatpush1.bf16.msra.mxu0 0
        %2479 = vmatprep.mubr.bf16.mxu0 0
        %2480 = vmatmul.mubr.bf16.gmra.mrb[0].mxu0 %v2204
        %v2481 = vpop.f32.mrb[0].mxu0
        %v2482 = vadd.f32 %v2397, %v2481
        %v2483 = vpop.f32.mrb[0].mxu0
        %v2484 = vpop.f32.mrb[0].mxu0
        %v2485 = vpop.f32.mrb[0].mxu0
        %2486 = vdwg.mxu0
        %v2487 = vmul.f32 %v2294, 0.17677669
        %v2488 = vpack.c.bf16 %v2487, %v2487
        %v2489 = vpack.c.bf16 %v2388, %v2388
        %v2490 = vpack.c.bf16 %v2482, %v2482
        %v2492 = vsel %vm1171, %v2488, 0
        %v2495 = vsel %vm1171, %v2489, 0
        %2497 = vmatprep.subr.bf16.mxu0 0
        %2498 = vmatpush1.bf16.xpose.msra.mxu0 %v2495
        %2499 = vmatprep.subr.bf16.mxu0 0
        %2500 = vmatpush1.bf16.xpose.msra.mxu0 0
        %2501 = vmatprep.subr.bf16.mxu0 0
        %2502 = vmatpush1.bf16.xpose.msra.mxu0 0
        %2503 = vmatprep.subr.bf16.mxu0 0
        %2504 = vmatpush1.bf16.xpose.msra.mxu0 0
        %2505 = vmatprep.subr.bf16.mxu0 0
        %2506 = vmatpush1.bf16.xpose.msra.mxu0 0
        %2507 = vmatprep.subr.bf16.mxu0 0
        %2508 = vmatpush1.bf16.xpose.msra.mxu0 0
        %2509 = vmatprep.subr.bf16.mxu0 0
        %2510 = vmatpush1.bf16.xpose.msra.mxu0 0
        %2511 = vmatprep.subr.bf16.mxu0 0
        %2512 = vmatpush1.bf16.xpose.msra.mxu0 0
        %2513 = vmatprep.subr.bf16.mxu0 0
        %2514 = vmatpush1.bf16.xpose.msra.mxu0 0
        %2515 = vmatprep.subr.bf16.mxu0 0
        %2516 = vmatpush1.bf16.xpose.msra.mxu0 0
        %2517 = vmatprep.subr.bf16.mxu0 0
        %2518 = vmatpush1.bf16.xpose.msra.mxu0 0
        %2519 = vmatprep.subr.bf16.mxu0 0
        %2520 = vmatpush1.bf16.xpose.msra.mxu0 0
        %2521 = vmatprep.subr.bf16.mxu0 0
        %2522 = vmatpush1.bf16.xpose.msra.mxu0 0
        %2523 = vmatprep.subr.bf16.mxu0 0
        %2524 = vmatpush1.bf16.xpose.msra.mxu0 0
        %2525 = vmatprep.subr.bf16.mxu0 0
        %2526 = vmatpush1.bf16.xpose.msra.mxu0 0
        %2527 = vmatprep.subr.bf16.mxu0 0
        %2528 = vmatpush1.bf16.xpose.msra.mxu0 0
        %2529 = vmatprep.mubr.bf16.mxu0 0
        %2530 = vmatmul.mubr.bf16.gmra.mrb[0].mxu0 %v2492
        %v2531 = vpop.f32.mrb[0].mxu0
        %v2532 = vadd.f32 %v1169, %v2531
        %v2533 = vpop.f32.mrb[0].mxu0
        %v2534 = vpop.f32.mrb[0].mxu0
        %v2535 = vpop.f32.mrb[0].mxu0
        %2536 = vdwg.mxu0
        %v2537 = vsel %vm1218, %v2532, -inf
        %2538 = vmax.xlane.f32.xlu0 %v2537
        %v2539 = vpop.xlane.xlu0 %2538
        %v2540 = vsub.f32 %v2532, %v2539
        %v2541 = vmul.f32 %v2540, 1.442695
        %v2542 = vpow.pop %v2541
        %v2543 = vsel %vm1218, %v2542, 0.0
        %2544 = vadd.xlane.f32.xlu0 %v2543
        %v2545 = vpop.xlane.xlu0 %2544
        %v2546 = vrcp.pop %v2545
        %v2547 = vmul.f32 %v2542, %v2546
        %v2548 = vpack.c.bf16 %v2547, %v2547
        %v2550 = vsel %vm1218, %v2548, 0
        %v2553 = vsel %vm1234, %v2490, 0
        %2555 = vmatprep.subr.bf16.mxu0 0
        %2556 = vmatpush1.bf16.msra.mxu0 %v2553
        %2557 = vmatprep.subr.bf16.mxu0 0
        %2558 = vmatpush1.bf16.msra.mxu0 0
        %2559 = vmatprep.subr.bf16.mxu0 0
        %2560 = vmatpush1.bf16.msra.mxu0 0
        %2561 = vmatprep.subr.bf16.mxu0 0
        %2562 = vmatpush1.bf16.msra.mxu0 0
        %2563 = vmatprep.subr.bf16.mxu0 0
        %2564 = vmatpush1.bf16.msra.mxu0 0
        %2565 = vmatprep.subr.bf16.mxu0 0
        %2566 = vmatpush1.bf16.msra.mxu0 0
        %2567 = vmatprep.subr.bf16.mxu0 0
        %2568 = vmatpush1.bf16.msra.mxu0 0
        %2569 = vmatprep.subr.bf16.mxu0 0
        %2570 = vmatpush1.bf16.msra.mxu0 0
        %2571 = vmatprep.subr.bf16.mxu0 0
        %2572 = vmatpush1.bf16.msra.mxu0 0
        %2573 = vmatprep.subr.bf16.mxu0 0
        %2574 = vmatpush1.bf16.msra.mxu0 0
        %2575 = vmatprep.subr.bf16.mxu0 0
        %2576 = vmatpush1.bf16.msra.mxu0 0
        %2577 = vmatprep.subr.bf16.mxu0 0
        %2578 = vmatpush1.bf16.msra.mxu0 0
        %2579 = vmatprep.subr.bf16.mxu0 0
        %2580 = vmatpush1.bf16.msra.mxu0 0
        %2581 = vmatprep.subr.bf16.mxu0 0
        %2582 = vmatpush1.bf16.msra.mxu0 0
        %2583 = vmatprep.subr.bf16.mxu0 0
        %2584 = vmatpush1.bf16.msra.mxu0 0
        %2585 = vmatprep.subr.bf16.mxu0 0
        %2586 = vmatpush1.bf16.msra.mxu0 0
        %2587 = vmatprep.mubr.bf16.mxu0 0
        %2588 = vmatmul.mubr.bf16.gmra.mrb[0].mxu0 %v2550
        %v2589 = vpop.f32.mrb[0].mxu0
        %v2590 = vadd.f32 0.0, %v2589
        %v2591 = vpop.f32.mrb[0].mxu0
        %v2592 = vpop.f32.mrb[0].mxu0
        %v2593 = vpop.f32.mrb[0].mxu0
        %2594 = vdwg.mxu0
        %2596 = vrot.lane.b32.xlu0 %v2488, 96
        %v2597 = vpop.permute.xlu0 %2596
        %2599 = vrot.lane.b32.xlu0 %v2489, 96
        %v2600 = vpop.permute.xlu0 %2599
        %v2602 = vsel %vm1171, %v2597, 0
        %v2605 = vsel %vm1171, %v2600, 0
        %2607 = vmatprep.subr.bf16.mxu0 0
        %2608 = vmatpush1.bf16.xpose.msra.mxu0 %v2605
        %2609 = vmatprep.subr.bf16.mxu0 0
        %2610 = vmatpush1.bf16.xpose.msra.mxu0 0
        %2611 = vmatprep.subr.bf16.mxu0 0
        %2612 = vmatpush1.bf16.xpose.msra.mxu0 0
        %2613 = vmatprep.subr.bf16.mxu0 0
        %2614 = vmatpush1.bf16.xpose.msra.mxu0 0
        %2615 = vmatprep.subr.bf16.mxu0 0
        %2616 = vmatpush1.bf16.xpose.msra.mxu0 0
        %2617 = vmatprep.subr.bf16.mxu0 0
        %2618 = vmatpush1.bf16.xpose.msra.mxu0 0
        %2619 = vmatprep.subr.bf16.mxu0 0
        %2620 = vmatpush1.bf16.xpose.msra.mxu0 0
        %2621 = vmatprep.subr.bf16.mxu0 0
        %2622 = vmatpush1.bf16.xpose.msra.mxu0 0
        %2623 = vmatprep.subr.bf16.mxu0 0
        %2624 = vmatpush1.bf16.xpose.msra.mxu0 0
        %2625 = vmatprep.subr.bf16.mxu0 0
        %2626 = vmatpush1.bf16.xpose.msra.mxu0 0
        %2627 = vmatprep.subr.bf16.mxu0 0
        %2628 = vmatpush1.bf16.xpose.msra.mxu0 0
        %2629 = vmatprep.subr.bf16.mxu0 0
        %2630 = vmatpush1.bf16.xpose.msra.mxu0 0
        %2631 = vmatprep.subr.bf16.mxu0 0
        %2632 = vmatpush1.bf16.xpose.msra.mxu0 0
        %2633 = vmatprep.subr.bf16.mxu0 0
        %2634 = vmatpush1.bf16.xpose.msra.mxu0 0
        %2635 = vmatprep.subr.bf16.mxu0 0
        %2636 = vmatpush1.bf16.xpose.msra.mxu0 0
        %2637 = vmatprep.subr.bf16.mxu0 0
        %2638 = vmatpush1.bf16.xpose.msra.mxu0 0
        %2639 = vmatprep.mubr.bf16.mxu0 0
        %2640 = vmatmul.mubr.bf16.gmra.mrb[0].mxu0 %v2602
        %v2641 = vpop.f32.mrb[0].mxu0
        %v2642 = vadd.f32 %v1169, %v2641
        %v2643 = vpop.f32.mrb[0].mxu0
        %v2644 = vpop.f32.mrb[0].mxu0
        %v2645 = vpop.f32.mrb[0].mxu0
        %2646 = vdwg.mxu0
        %v2647 = vsel %vm1218, %v2642, -inf
        %2648 = vmax.xlane.f32.xlu0 %v2647
        %v2649 = vpop.xlane.xlu0 %2648
        %v2650 = vsub.f32 %v2642, %v2649
        %v2651 = vmul.f32 %v2650, 1.442695
        %v2652 = vpow.pop %v2651
        %v2653 = vsel %vm1218, %v2652, 0.0
        %2654 = vadd.xlane.f32.xlu0 %v2653
        %v2655 = vpop.xlane.xlu0 %2654
        %v2656 = vrcp.pop %v2655
        %v2657 = vmul.f32 %v2652, %v2656
        %v2658 = vpack.c.bf16 %v2657, %v2657
        %2660 = vrot.lane.b32.xlu0 %v2490, 96
        %v2661 = vpop.permute.xlu0 %2660
        %v2663 = vsel %vm1218, %v2658, 0
        %v2666 = vsel %vm1234, %v2661, 0
        %2668 = vmatprep.subr.bf16.mxu0 0
        %2669 = vmatpush1.bf16.msra.mxu0 %v2666
        %2670 = vmatprep.subr.bf16.mxu0 0
        %2671 = vmatpush1.bf16.msra.mxu0 0
        %2672 = vmatprep.subr.bf16.mxu0 0
        %2673 = vmatpush1.bf16.msra.mxu0 0
        %2674 = vmatprep.subr.bf16.mxu0 0
        %2675 = vmatpush1.bf16.msra.mxu0 0
        %2676 = vmatprep.subr.bf16.mxu0 0
        %2677 = vmatpush1.bf16.msra.mxu0 0
        %2678 = vmatprep.subr.bf16.mxu0 0
        %2679 = vmatpush1.bf16.msra.mxu0 0
        %2680 = vmatprep.subr.bf16.mxu0 0
        %2681 = vmatpush1.bf16.msra.mxu0 0
        %2682 = vmatprep.subr.bf16.mxu0 0
        %2683 = vmatpush1.bf16.msra.mxu0 0
        %2684 = vmatprep.subr.bf16.mxu0 0
        %2685 = vmatpush1.bf16.msra.mxu0 0
        %2686 = vmatprep.subr.bf16.mxu0 0
        %2687 = vmatpush1.bf16.msra.mxu0 0
        %2688 = vmatprep.subr.bf16.mxu0 0
        %2689 = vmatpush1.bf16.msra.mxu0 0
        %2690 = vmatprep.subr.bf16.mxu0 0
        %2691 = vmatpush1.bf16.msra.mxu0 0
        %2692 = vmatprep.subr.bf16.mxu0 0
        %2693 = vmatpush1.bf16.msra.mxu0 0
        %2694 = vmatprep.subr.bf16.mxu0 0
        %2695 = vmatpush1.bf16.msra.mxu0 0
        %2696 = vmatprep.subr.bf16.mxu0 0
        %2697 = vmatpush1.bf16.msra.mxu0 0
        %2698 = vmatprep.subr.bf16.mxu0 0
        %2699 = vmatpush1.bf16.msra.mxu0 0
        %2700 = vmatprep.mubr.bf16.mxu0 0
        %2701 = vmatmul.mubr.bf16.gmra.mrb[0].mxu0 %v2663
        %v2702 = vpop.f32.mrb[0].mxu0
        %v2703 = vadd.f32 0.0, %v2702
        %v2704 = vpop.f32.mrb[0].mxu0
        %v2705 = vpop.f32.mrb[0].mxu0
        %v2706 = vpop.f32.mrb[0].mxu0
        %2707 = vdwg.mxu0
        %2708 = vrot.lane.b32.xlu0 %v2488, 64
        %v2709 = vpop.permute.xlu0 %2708
        %2710 = vrot.lane.b32.xlu0 %v2489, 64
        %v2711 = vpop.permute.xlu0 %2710
        %v2713 = vsel %vm1171, %v2709, 0
        %v2716 = vsel %vm1171, %v2711, 0
        %2718 = vmatprep.subr.bf16.mxu0 0
        %2719 = vmatpush1.bf16.xpose.msra.mxu0 %v2716
        %2720 = vmatprep.subr.bf16.mxu0 0
        %2721 = vmatpush1.bf16.xpose.msra.mxu0 0
        %2722 = vmatprep.subr.bf16.mxu0 0
        %2723 = vmatpush1.bf16.xpose.msra.mxu0 0
        %2724 = vmatprep.subr.bf16.mxu0 0
        %2725 = vmatpush1.bf16.xpose.msra.mxu0 0
        %2726 = vmatprep.subr.bf16.mxu0 0
        %2727 = vmatpush1.bf16.xpose.msra.mxu0 0
        %2728 = vmatprep.subr.bf16.mxu0 0
        %2729 = vmatpush1.bf16.xpose.msra.mxu0 0
        %2730 = vmatprep.subr.bf16.mxu0 0
        %2731 = vmatpush1.bf16.xpose.msra.mxu0 0
        %2732 = vmatprep.subr.bf16.mxu0 0
        %2733 = vmatpush1.bf16.xpose.msra.mxu0 0
        %2734 = vmatprep.subr.bf16.mxu0 0
        %2735 = vmatpush1.bf16.xpose.msra.mxu0 0
        %2736 = vmatprep.subr.bf16.mxu0 0
        %2737 = vmatpush1.bf16.xpose.msra.mxu0 0
        %2738 = vmatprep.subr.bf16.mxu0 0
        %2739 = vmatpush1.bf16.xpose.msra.mxu0 0
        %2740 = vmatprep.subr.bf16.mxu0 0
        %2741 = vmatpush1.bf16.xpose.msra.mxu0 0
        %2742 = vmatprep.subr.bf16.mxu0 0
        %2743 = vmatpush1.bf16.xpose.msra.mxu0 0
        %2744 = vmatprep.subr.bf16.mxu0 0
        %2745 = vmatpush1.bf16.xpose.msra.mxu0 0
        %2746 = vmatprep.subr.bf16.mxu0 0
        %2747 = vmatpush1.bf16.xpose.msra.mxu0 0
        %2748 = vmatprep.subr.bf16.mxu0 0
        %2749 = vmatpush1.bf16.xpose.msra.mxu0 0
        %2750 = vmatprep.mubr.bf16.mxu0 0
        %2751 = vmatmul.mubr.bf16.gmra.mrb[0].mxu0 %v2713
        %v2752 = vpop.f32.mrb[0].mxu0
        %v2753 = vadd.f32 %v1169, %v2752
        %v2754 = vpop.f32.mrb[0].mxu0
        %v2755 = vpop.f32.mrb[0].mxu0
        %v2756 = vpop.f32.mrb[0].mxu0
        %2757 = vdwg.mxu0
        %v2758 = vsel %vm1218, %v2753, -inf
        %2759 = vmax.xlane.f32.xlu0 %v2758
        %v2760 = vpop.xlane.xlu0 %2759
        %v2761 = vsub.f32 %v2753, %v2760
        %v2762 = vmul.f32 %v2761, 1.442695
        %v2763 = vpow.pop %v2762
        %v2764 = vsel %vm1218, %v2763, 0.0
        %2765 = vadd.xlane.f32.xlu0 %v2764
        %v2766 = vpop.xlane.xlu0 %2765
        %v2767 = vrcp.pop %v2766
        %v2768 = vmul.f32 %v2763, %v2767
        %v2769 = vpack.c.bf16 %v2768, %v2768
        %2770 = vrot.lane.b32.xlu0 %v2490, 64
        %v2771 = vpop.permute.xlu0 %2770
        %v2773 = vsel %vm1218, %v2769, 0
        %v2776 = vsel %vm1234, %v2771, 0
        %2778 = vmatprep.subr.bf16.mxu0 0
        %2779 = vmatpush1.bf16.msra.mxu0 %v2776
        %2780 = vmatprep.subr.bf16.mxu0 0
        %2781 = vmatpush1.bf16.msra.mxu0 0
        %2782 = vmatprep.subr.bf16.mxu0 0
        %2783 = vmatpush1.bf16.msra.mxu0 0
        %2784 = vmatprep.subr.bf16.mxu0 0
        %2785 = vmatpush1.bf16.msra.mxu0 0
        %2786 = vmatprep.subr.bf16.mxu0 0
        %2787 = vmatpush1.bf16.msra.mxu0 0
        %2788 = vmatprep.subr.bf16.mxu0 0
        %2789 = vmatpush1.bf16.msra.mxu0 0
        %2790 = vmatprep.subr.bf16.mxu0 0
        %2791 = vmatpush1.bf16.msra.mxu0 0
        %2792 = vmatprep.subr.bf16.mxu0 0
        %2793 = vmatpush1.bf16.msra.mxu0 0
        %2794 = vmatprep.subr.bf16.mxu0 0
        %2795 = vmatpush1.bf16.msra.mxu0 0
        %2796 = vmatprep.subr.bf16.mxu0 0
        %2797 = vmatpush1.bf16.msra.mxu0 0
        %2798 = vmatprep.subr.bf16.mxu0 0
        %2799 = vmatpush1.bf16.msra.mxu0 0
        %2800 = vmatprep.subr.bf16.mxu0 0
        %2801 = vmatpush1.bf16.msra.mxu0 0
        %2802 = vmatprep.subr.bf16.mxu0 0
        %2803 = vmatpush1.bf16.msra.mxu0 0
        %2804 = vmatprep.subr.bf16.mxu0 0
        %2805 = vmatpush1.bf16.msra.mxu0 0
        %2806 = vmatprep.subr.bf16.mxu0 0
        %2807 = vmatpush1.bf16.msra.mxu0 0
        %2808 = vmatprep.subr.bf16.mxu0 0
        %2809 = vmatpush1.bf16.msra.mxu0 0
        %2810 = vmatprep.mubr.bf16.mxu0 0
        %2811 = vmatmul.mubr.bf16.gmra.mrb[0].mxu0 %v2773
        %v2812 = vpop.f32.mrb[0].mxu0
        %v2813 = vadd.f32 0.0, %v2812
        %v2814 = vpop.f32.mrb[0].mxu0
        %v2815 = vpop.f32.mrb[0].mxu0
        %v2816 = vpop.f32.mrb[0].mxu0
        %2817 = vdwg.mxu0
        %2818 = vrot.lane.b32.xlu0 %v2488, 32
        %v2819 = vpop.permute.xlu0 %2818
        %2820 = vrot.lane.b32.xlu0 %v2489, 32
        %v2821 = vpop.permute.xlu0 %2820
        %v2823 = vsel %vm1171, %v2819, 0
        %v2826 = vsel %vm1171, %v2821, 0
        %2828 = vmatprep.subr.bf16.mxu0 0
        %2829 = vmatpush1.bf16.xpose.msra.mxu0 %v2826
        %2830 = vmatprep.subr.bf16.mxu0 0
        %2831 = vmatpush1.bf16.xpose.msra.mxu0 0
        %2832 = vmatprep.subr.bf16.mxu0 0
        %2833 = vmatpush1.bf16.xpose.msra.mxu0 0
        %2834 = vmatprep.subr.bf16.mxu0 0
        %2835 = vmatpush1.bf16.xpose.msra.mxu0 0
        %2836 = vmatprep.subr.bf16.mxu0 0
        %2837 = vmatpush1.bf16.xpose.msra.mxu0 0
        %2838 = vmatprep.subr.bf16.mxu0 0
        %2839 = vmatpush1.bf16.xpose.msra.mxu0 0
        %2840 = vmatprep.subr.bf16.mxu0 0
        %2841 = vmatpush1.bf16.xpose.msra.mxu0 0
        %2842 = vmatprep.subr.bf16.mxu0 0
        %2843 = vmatpush1.bf16.xpose.msra.mxu0 0
        %2844 = vmatprep.subr.bf16.mxu0 0
        %2845 = vmatpush1.bf16.xpose.msra.mxu0 0
        %2846 = vmatprep.subr.bf16.mxu0 0
        %2847 = vmatpush1.bf16.xpose.msra.mxu0 0
        %2848 = vmatprep.subr.bf16.mxu0 0
        %2849 = vmatpush1.bf16.xpose.msra.mxu0 0
        %2850 = vmatprep.subr.bf16.mxu0 0
        %2851 = vmatpush1.bf16.xpose.msra.mxu0 0
        %2852 = vmatprep.subr.bf16.mxu0 0
        %2853 = vmatpush1.bf16.xpose.msra.mxu0 0
        %2854 = vmatprep.subr.bf16.mxu0 0
        %2855 = vmatpush1.bf16.xpose.msra.mxu0 0
        %2856 = vmatprep.subr.bf16.mxu0 0
        %2857 = vmatpush1.bf16.xpose.msra.mxu0 0
        %2858 = vmatprep.subr.bf16.mxu0 0
        %2859 = vmatpush1.bf16.xpose.msra.mxu0 0
        %2860 = vmatprep.mubr.bf16.mxu0 0
        %2861 = vmatmul.mubr.bf16.gmra.mrb[0].mxu0 %v2823
        %v2862 = vpop.f32.mrb[0].mxu0
        %v2863 = vadd.f32 %v1169, %v2862
        %v2864 = vpop.f32.mrb[0].mxu0
        %v2865 = vpop.f32.mrb[0].mxu0
        %v2866 = vpop.f32.mrb[0].mxu0
        %2867 = vdwg.mxu0
        %v2868 = vsel %vm1218, %v2863, -inf
        %2869 = vmax.xlane.f32.xlu0 %v2868
        %v2870 = vpop.xlane.xlu0 %2869
        %v2871 = vsub.f32 %v2863, %v2870
        %v2872 = vmul.f32 %v2871, 1.442695
        %v2873 = vpow.pop %v2872
        %v2874 = vsel %vm1218, %v2873, 0.0
        %2875 = vadd.xlane.f32.xlu0 %v2874
        %v2876 = vpop.xlane.xlu0 %2875
        %v2877 = vrcp.pop %v2876
        %v2878 = vmul.f32 %v2873, %v2877
        %v2879 = vpack.c.bf16 %v2878, %v2878
        %2880 = vrot.lane.b32.xlu0 %v2490, 32
        %v2881 = vpop.permute.xlu0 %2880
        %v2883 = vsel %vm1218, %v2879, 0
        %v2886 = vsel %vm1234, %v2881, 0
        %2888 = vmatprep.subr.bf16.mxu0 0
        %2889 = vmatpush1.bf16.msra.mxu0 %v2886
        %2890 = vmatprep.subr.bf16.mxu0 0
        %2891 = vmatpush1.bf16.msra.mxu0 0
        %2892 = vmatprep.subr.bf16.mxu0 0
        %2893 = vmatpush1.bf16.msra.mxu0 0
        %2894 = vmatprep.subr.bf16.mxu0 0
        %2895 = vmatpush1.bf16.msra.mxu0 0
        %2896 = vmatprep.subr.bf16.mxu0 0
        %2897 = vmatpush1.bf16.msra.mxu0 0
        %2898 = vmatprep.subr.bf16.mxu0 0
        %2899 = vmatpush1.bf16.msra.mxu0 0
        %2900 = vmatprep.subr.bf16.mxu0 0
        %2901 = vmatpush1.bf16.msra.mxu0 0
        %2902 = vmatprep.subr.bf16.mxu0 0
        %2903 = vmatpush1.bf16.msra.mxu0 0
        %2904 = vmatprep.subr.bf16.mxu0 0
        %2905 = vmatpush1.bf16.msra.mxu0 0
        %2906 = vmatprep.subr.bf16.mxu0 0
        %2907 = vmatpush1.bf16.msra.mxu0 0
        %2908 = vmatprep.subr.bf16.mxu0 0
        %2909 = vmatpush1.bf16.msra.mxu0 0
        %2910 = vmatprep.subr.bf16.mxu0 0
        %2911 = vmatpush1.bf16.msra.mxu0 0
        %2912 = vmatprep.subr.bf16.mxu0 0
        %2913 = vmatpush1.bf16.msra.mxu0 0
        %2914 = vmatprep.subr.bf16.mxu0 0
        %2915 = vmatpush1.bf16.msra.mxu0 0
        %2916 = vmatprep.subr.bf16.mxu0 0
        %2917 = vmatpush1.bf16.msra.mxu0 0
        %2918 = vmatprep.subr.bf16.mxu0 0
        %2919 = vmatpush1.bf16.msra.mxu0 0
        %2920 = vmatprep.mubr.bf16.mxu0 0
        %2921 = vmatmul.mubr.bf16.gmra.mrb[0].mxu0 %v2883
        %v2922 = vpop.f32.mrb[0].mxu0
        %v2923 = vadd.f32 0.0, %v2922
        %v2924 = vpop.f32.mrb[0].mxu0
        %v2925 = vpop.f32.mrb[0].mxu0
        %v2926 = vpop.f32.mrb[0].mxu0
        %2927 = vdwg.mxu0
        %2929 = vrot.lane.b32.xlu0 %v2703, 32
        %v2930 = vpop.permute.xlu0 %2929
        %2933 = vrot.lane.b32.xlu0 %v2813, 64
        %v2934 = vpop.permute.xlu0 %2933
        %2937 = vrot.lane.b32.xlu0 %v2923, 96
        %v2938 = vpop.permute.xlu0 %2937
        %v2940 = vsel %vm1171, %v2590, %v2930
        %v2941 = vsel %vm1624, %v2940, %v2934
        %v2942 = vsel %vm1626, %v2941, %v2938
        %v2943 = vpack.c.bf16 %v2942, %v2942
        %v2945 = vlaneseq
        %v2946 = vshrl.u32 %v2945, 7
        %v2947 = vsub.s32 0, %v2946
        %v2948 = vrot.slane %v2203, %v2947
        %v2966 = vunpack.c.l.b16 %v2180
        %v2967 = vunpack.c.l.b16 %v2181
        %v2968 = vunpack.c.l.b16 %v2182
        %v2969 = vunpack.c.l.b16 %v2183
        %v2970 = vunpack.c.l.b16 %v2184
        %v2971 = vunpack.c.l.b16 %v2185
        %v2972 = vunpack.c.l.b16 %v2186
        %v2973 = vunpack.c.l.b16 %v2187
        %v2974 = vunpack.c.l.b16 %v2188
        %v2975 = vunpack.c.l.b16 %v2189
        %v2976 = vunpack.c.l.b16 %v2190
        %v2977 = vunpack.c.l.b16 %v2191
        %v2978 = vunpack.c.l.b16 %v2192
        %v2979 = vunpack.c.l.b16 %v2193
        %v2980 = vunpack.c.l.b16 %v2194
        %v2981 = vunpack.c.l.b16 %v2195
        %v2982 = vpack.c.b16 %v2967, %v2966
        %v2983 = vpack.c.b16 %v2969, %v2968
        %v2984 = vpack.c.b16 %v2971, %v2970
        %v2985 = vpack.c.b16 %v2973, %v2972
        %v2986 = vpack.c.b16 %v2975, %v2974
        %v2987 = vpack.c.b16 %v2977, %v2976
        %v2988 = vpack.c.b16 %v2979, %v2978
        %v2989 = vpack.c.b16 %v2981, %v2980
        %2998 = vmatprep.subr.bf16.mxu0 0
        %2999 = vmatpush1.bf16.msra.mxu0 %v2982
        %3000 = vmatprep.subr.bf16.mxu0 0
        %3001 = vmatpush1.bf16.msra.mxu0 %v2983
        %3002 = vmatprep.subr.bf16.mxu0 0
        %3003 = vmatpush1.bf16.msra.mxu0 %v2984
        %3004 = vmatprep.subr.bf16.mxu0 0
        %3005 = vmatpush1.bf16.msra.mxu0 %v2985
        %3006 = vmatprep.subr.bf16.mxu0 0
        %3007 = vmatpush1.bf16.msra.mxu0 %v2986
        %3008 = vmatprep.subr.bf16.mxu0 0
        %3009 = vmatpush1.bf16.msra.mxu0 %v2987
        %3010 = vmatprep.subr.bf16.mxu0 0
        %3011 = vmatpush1.bf16.msra.mxu0 %v2988
        %3012 = vmatprep.subr.bf16.mxu0 0
        %3013 = vmatpush1.bf16.msra.mxu0 %v2989
        %3014 = vmatprep.subr.bf16.mxu0 0
        %3015 = vmatpush1.bf16.msra.mxu0 0
        %3016 = vmatprep.subr.bf16.mxu0 0
        %3017 = vmatpush1.bf16.msra.mxu0 0
        %3018 = vmatprep.subr.bf16.mxu0 0
        %3019 = vmatpush1.bf16.msra.mxu0 0
        %3020 = vmatprep.subr.bf16.mxu0 0
        %3021 = vmatpush1.bf16.msra.mxu0 0
        %3022 = vmatprep.subr.bf16.mxu0 0
        %3023 = vmatpush1.bf16.msra.mxu0 0
        %3024 = vmatprep.subr.bf16.mxu0 0
        %3025 = vmatpush1.bf16.msra.mxu0 0
        %3026 = vmatprep.subr.bf16.mxu0 0
        %3027 = vmatpush1.bf16.msra.mxu0 0
        %3028 = vmatprep.subr.bf16.mxu0 0
        %3029 = vmatpush1.bf16.msra.mxu0 0
        %3030 = vmatprep.mubr.bf16.mxu0 0
        %3031 = vmatmul.mubr.bf16.gmra.mrb[0].mxu0 %v2943
        %v3032 = vpop.f32.mrb[0].mxu0
        %v3033 = vadd.f32 %v2948, %v3032
        %v3034 = vpop.f32.mrb[0].mxu0
        %v3035 = vpop.f32.mrb[0].mxu0
        %v3036 = vpop.f32.mrb[0].mxu0
        %3037 = vdwg.mxu0
        %v3038 = vadd.f32 %v2127, %v3033
        %s3039 = scalar_lea.vmem %s14, 1
        %v3040 = vld [vmem:[%s3039] sm:$0x1]
        %s3041 = scalar_lea.vmem %s15, 1
        %v3042 = vld [vmem:[%s3041] sm:$0x1]
        %3043 = vadd.xlane.f32.xlu0 %v3038
        %v3044 = vpop.xlane.xlu0 %3043
        %v3045 = vmul.f32 %v3044, %v781
        %v3046 = vmul.f32 %v3038, %v3038
        %3047 = vadd.xlane.f32.xlu0 %v3046
        %v3048 = vpop.xlane.xlu0 %3047
        %v3049 = vmul.f32 %v3048, %v781
        %v3050 = vmul.f32 %v3045, %v3045
        %v3051 = vsub.f32 %v3049, %v3050
        %v3052 = vsub.f32 %v3038, %v3045
        %v3053 = vadd.f32 %v3051, 1e-12
        %v3054 = vrsqrt.pop %v3053
        %v3055 = vmul.f32 %v3052, %v3054
        %v3057 = vlaneseq
        %v3058 = vshrl.u32 %v3057, 7
        %v3059 = vsub.s32 0, %v3058
        %v3060 = vrot.slane %v3040, %v3059
        %v3062 = vmul.f32 %v3055, %v3060
        %v3064 = vlaneseq
        %v3065 = vshrl.u32 %v3064, 7
        %v3066 = vsub.s32 0, %v3065
        %v3067 = vrot.slane %v3042, %v3066
        %v3069 = vadd.f32 %v3062, %v3067
        %v3070 = vpack.c.bf16 %v3069, %v3069
        %s3071 = scalar_lea.vmem [#allocation8], 128
        %v3072 = vld [vmem:[%s3071] sm:$0xff]
        %v3073 = vld [vmem:[%s3071 + $0x8] sm:$0xff]
        %v3074 = vld [vmem:[%s3071 + $0x10] sm:$0xff]
        %v3075 = vld [vmem:[%s3071 + $0x18] sm:$0xff]
        %v3076 = vld [vmem:[%s3071 + $0x20] sm:$0xff]
        %v3077 = vld [vmem:[%s3071 + $0x28] sm:$0xff]
        %v3078 = vld [vmem:[%s3071 + $0x30] sm:$0xff]
        %v3079 = vld [vmem:[%s3071 + $0x38] sm:$0xff]
        %v3080 = vld [vmem:[%s3071 + $0x40] sm:$0xff]
        %v3081 = vld [vmem:[%s3071 + $0x48] sm:$0xff]
        %v3082 = vld [vmem:[%s3071 + $0x50] sm:$0xff]
        %v3083 = vld [vmem:[%s3071 + $0x58] sm:$0xff]
        %v3084 = vld [vmem:[%s3071 + $0x60] sm:$0xff]
        %v3085 = vld [vmem:[%s3071 + $0x68] sm:$0xff]
        %v3086 = vld [vmem:[%s3071 + $0x70] sm:$0xff]
        %v3087 = vld [vmem:[%s3071 + $0x78] sm:$0xff]
        %s3088 = scalar_lea.vmem %s17, 2
        %v3089 = vld [vmem:[%s3088] sm:$0x3]
        %v3091 = vlaneseq
        %v3092 = vshrl.u32 %v3091, 7
        %v3093 = vsub.s32 0, %v3092
        %v3094 = vrot.slane %v3089, %v3093
        %v3095 = vlaneseq
        %v3096 = vshrl.u32 %v3095, 7
        %v3097 = vsub.s32 1, %v3096
        %v3098 = vrot.slane %v3089, %v3097
        %v3117 = vunpack.c.l.b16 %v3072
        %v3118 = vunpack.c.h.b16 %v3072
        %v3119 = vunpack.c.l.b16 %v3073
        %v3120 = vunpack.c.h.b16 %v3073
        %v3121 = vunpack.c.l.b16 %v3074
        %v3122 = vunpack.c.h.b16 %v3074
        %v3123 = vunpack.c.l.b16 %v3075
        %v3124 = vunpack.c.h.b16 %v3075
        %v3125 = vunpack.c.l.b16 %v3076
        %v3126 = vunpack.c.h.b16 %v3076
        %v3127 = vunpack.c.l.b16 %v3077
        %v3128 = vunpack.c.h.b16 %v3077
        %v3129 = vunpack.c.l.b16 %v3078
        %v3130 = vunpack.c.h.b16 %v3078
        %v3131 = vunpack.c.l.b16 %v3079
        %v3132 = vunpack.c.h.b16 %v3079
        %v3133 = vunpack.c.l.b16 %v3080
        %v3134 = vunpack.c.h.b16 %v3080
        %v3135 = vunpack.c.l.b16 %v3081
        %v3136 = vunpack.c.h.b16 %v3081
        %v3137 = vunpack.c.l.b16 %v3082
        %v3138 = vunpack.c.h.b16 %v3082
        %v3139 = vunpack.c.l.b16 %v3083
        %v3140 = vunpack.c.h.b16 %v3083
        %v3141 = vunpack.c.l.b16 %v3084
        %v3142 = vunpack.c.h.b16 %v3084
        %v3143 = vunpack.c.l.b16 %v3085
        %v3144 = vunpack.c.h.b16 %v3085
        %v3145 = vunpack.c.l.b16 %v3086
        %v3146 = vunpack.c.h.b16 %v3086
        %v3147 = vunpack.c.l.b16 %v3087
        %v3148 = vunpack.c.h.b16 %v3087
        %v3149 = vpack.c.b16 %v3119, %v3117
        %v3150 = vpack.c.b16 %v3120, %v3118
        %v3151 = vpack.c.b16 %v3123, %v3121
        %v3152 = vpack.c.b16 %v3124, %v3122
        %v3153 = vpack.c.b16 %v3127, %v3125
        %v3154 = vpack.c.b16 %v3128, %v3126
        %v3155 = vpack.c.b16 %v3131, %v3129
        %v3156 = vpack.c.b16 %v3132, %v3130
        %v3157 = vpack.c.b16 %v3135, %v3133
        %v3158 = vpack.c.b16 %v3136, %v3134
        %v3159 = vpack.c.b16 %v3139, %v3137
        %v3160 = vpack.c.b16 %v3140, %v3138
        %v3161 = vpack.c.b16 %v3143, %v3141
        %v3162 = vpack.c.b16 %v3144, %v3142
        %v3163 = vpack.c.b16 %v3147, %v3145
        %v3164 = vpack.c.b16 %v3148, %v3146
        %3181 = vmatprep.subr.bf16.mxu0 %v3150
        %3182 = vmatpush1.bf16.msra.mxu0 %v3149
        %3183 = vmatprep.subr.bf16.mxu0 %v3152
        %3184 = vmatpush1.bf16.msra.mxu0 %v3151
        %3185 = vmatprep.subr.bf16.mxu0 %v3154
        %3186 = vmatpush1.bf16.msra.mxu0 %v3153
        %3187 = vmatprep.subr.bf16.mxu0 %v3156
        %3188 = vmatpush1.bf16.msra.mxu0 %v3155
        %3189 = vmatprep.subr.bf16.mxu0 %v3158
        %3190 = vmatpush1.bf16.msra.mxu0 %v3157
        %3191 = vmatprep.subr.bf16.mxu0 %v3160
        %3192 = vmatpush1.bf16.msra.mxu0 %v3159
        %3193 = vmatprep.subr.bf16.mxu0 %v3162
        %3194 = vmatpush1.bf16.msra.mxu0 %v3161
        %3195 = vmatprep.subr.bf16.mxu0 %v3164
        %3196 = vmatpush1.bf16.msra.mxu0 %v3163
        %3197 = vmatprep.subr.bf16.mxu0 0
        %3198 = vmatpush1.bf16.msra.mxu0 0
        %3199 = vmatprep.subr.bf16.mxu0 0
        %3200 = vmatpush1.bf16.msra.mxu0 0
        %3201 = vmatprep.subr.bf16.mxu0 0
        %3202 = vmatpush1.bf16.msra.mxu0 0
        %3203 = vmatprep.subr.bf16.mxu0 0
        %3204 = vmatpush1.bf16.msra.mxu0 0
        %3205 = vmatprep.subr.bf16.mxu0 0
        %3206 = vmatpush1.bf16.msra.mxu0 0
        %3207 = vmatprep.subr.bf16.mxu0 0
        %3208 = vmatpush1.bf16.msra.mxu0 0
        %3209 = vmatprep.subr.bf16.mxu0 0
        %3210 = vmatpush1.bf16.msra.mxu0 0
        %3211 = vmatprep.subr.bf16.mxu0 0
        %3212 = vmatpush1.bf16.msra.mxu0 0
        %3213 = vmatprep.mubr.bf16.mxu0 0
        %3214 = vmatmul.mubr.bf16.gmra.mrb[0].mxu0 %v3070
        %v3215 = vpop.f32.mrb[0].mxu0
        %v3216 = vadd.f32 %v3094, %v3215
        %v3217 = vpop.f32.mrb[0].mxu0
        %v3218 = vadd.f32 %v3098, %v3217
        %v3219 = vpop.f32.mrb[0].mxu0
        %v3220 = vpop.f32.mrb[0].mxu0
        %3221 = vdwg.mxu0
        %v3222 = vmul.f32 %v3216, 0.5
        %v3223 = vmul.f32 %v3218, 0.5
        %v3224 = vmul.f32 %v3216, 0.044715
        %v3225 = vmul.f32 %v3218, 0.044715
        %v3226 = vmul.f32 %v3224, %v3216
        %v3227 = vmul.f32 %v3225, %v3218
        %v3228 = vmul.f32 %v3226, %v3216
        %v3229 = vmul.f32 %v3227, %v3218
        %v3230 = vadd.f32 %v3216, %v3228
        %v3231 = vadd.f32 %v3218, %v3229
        %v3232 = vmul.f32 %v3230, 0.7978846
        %v3233 = vmul.f32 %v3231, 0.7978846
        %v3234 = vtanh.pop %v3232
        %v3235 = vtanh.pop %v3233
        %v3236 = vadd.f32 %v3234, 1.0
        %v3237 = vadd.f32 %v3235, 1.0
        %v3238 = vmul.f32 %v3222, %v3236
        %v3239 = vmul.f32 %v3223, %v3237
        %v3240 = vpack.c.bf16 %v3238, %v3238
        %v3241 = vpack.c.bf16 %v3239, %v3239
        %s3242 = scalar_lea.vmem [#allocation10], 128
        %v3243 = vld [vmem:[%s3242] sm:$0xf]
        %v3244 = vld [vmem:[%s3242 + $0x4] sm:$0xf]
        %v3245 = vld [vmem:[%s3242 + $0x8] sm:$0xf]
        %v3246 = vld [vmem:[%s3242 + $0xc] sm:$0xf]
        %v3247 = vld [vmem:[%s3242 + $0x10] sm:$0xf]
        %v3248 = vld [vmem:[%s3242 + $0x14] sm:$0xf]
        %v3249 = vld [vmem:[%s3242 + $0x18] sm:$0xf]
        %v3250 = vld [vmem:[%s3242 + $0x1c] sm:$0xf]
        %v3251 = vld [vmem:[%s3242 + $0x20] sm:$0xf]
        %v3252 = vld [vmem:[%s3242 + $0x24] sm:$0xf]
        %v3253 = vld [vmem:[%s3242 + $0x28] sm:$0xf]
        %v3254 = vld [vmem:[%s3242 + $0x2c] sm:$0xf]
        %v3255 = vld [vmem:[%s3242 + $0x30] sm:$0xf]
        %v3256 = vld [vmem:[%s3242 + $0x34] sm:$0xf]
        %v3257 = vld [vmem:[%s3242 + $0x38] sm:$0xf]
        %v3258 = vld [vmem:[%s3242 + $0x3c] sm:$0xf]
        %v3259 = vld [vmem:[%s3242 + $0x40] sm:$0xf]
        %v3260 = vld [vmem:[%s3242 + $0x44] sm:$0xf]
        %v3261 = vld [vmem:[%s3242 + $0x48] sm:$0xf]
        %v3262 = vld [vmem:[%s3242 + $0x4c] sm:$0xf]
        %v3263 = vld [vmem:[%s3242 + $0x50] sm:$0xf]
        %v3264 = vld [vmem:[%s3242 + $0x54] sm:$0xf]
        %v3265 = vld [vmem:[%s3242 + $0x58] sm:$0xf]
        %v3266 = vld [vmem:[%s3242 + $0x5c] sm:$0xf]
        %v3267 = vld [vmem:[%s3242 + $0x60] sm:$0xf]
        %v3268 = vld [vmem:[%s3242 + $0x64] sm:$0xf]
        %v3269 = vld [vmem:[%s3242 + $0x68] sm:$0xf]
        %v3270 = vld [vmem:[%s3242 + $0x6c] sm:$0xf]
        %v3271 = vld [vmem:[%s3242 + $0x70] sm:$0xf]
        %v3272 = vld [vmem:[%s3242 + $0x74] sm:$0xf]
        %v3273 = vld [vmem:[%s3242 + $0x78] sm:$0xf]
        %v3274 = vld [vmem:[%s3242 + $0x7c] sm:$0xf]
        %s3275 = scalar_lea.vmem %s19, 1
        %v3276 = vld [vmem:[%s3275] sm:$0x1]
        %v3278 = vlaneseq
        %v3279 = vshrl.u32 %v3278, 7
        %v3280 = vsub.s32 0, %v3279
        %v3281 = vrot.slane %v3276, %v3280
        %v3315 = vunpack.c.l.b16 %v3243
        %v3316 = vunpack.c.l.b16 %v3244
        %v3317 = vunpack.c.l.b16 %v3245
        %v3318 = vunpack.c.l.b16 %v3246
        %v3319 = vunpack.c.l.b16 %v3247
        %v3320 = vunpack.c.l.b16 %v3248
        %v3321 = vunpack.c.l.b16 %v3249
        %v3322 = vunpack.c.l.b16 %v3250
        %v3323 = vunpack.c.l.b16 %v3251
        %v3324 = vunpack.c.l.b16 %v3252
        %v3325 = vunpack.c.l.b16 %v3253
        %v3326 = vunpack.c.l.b16 %v3254
        %v3327 = vunpack.c.l.b16 %v3255
        %v3328 = vunpack.c.l.b16 %v3256
        %v3329 = vunpack.c.l.b16 %v3257
        %v3330 = vunpack.c.l.b16 %v3258
        %v3331 = vunpack.c.l.b16 %v3259
        %v3332 = vunpack.c.l.b16 %v3260
        %v3333 = vunpack.c.l.b16 %v3261
        %v3334 = vunpack.c.l.b16 %v3262
        %v3335 = vunpack.c.l.b16 %v3263
        %v3336 = vunpack.c.l.b16 %v3264
        %v3337 = vunpack.c.l.b16 %v3265
        %v3338 = vunpack.c.l.b16 %v3266
        %v3339 = vunpack.c.l.b16 %v3267
        %v3340 = vunpack.c.l.b16 %v3268
        %v3341 = vunpack.c.l.b16 %v3269
        %v3342 = vunpack.c.l.b16 %v3270
        %v3343 = vunpack.c.l.b16 %v3271
        %v3344 = vunpack.c.l.b16 %v3272
        %v3345 = vunpack.c.l.b16 %v3273
        %v3346 = vunpack.c.l.b16 %v3274
        %v3347 = vpack.c.b16 %v3316, %v3315
        %v3348 = vpack.c.b16 %v3318, %v3317
        %v3349 = vpack.c.b16 %v3320, %v3319
        %v3350 = vpack.c.b16 %v3322, %v3321
        %v3351 = vpack.c.b16 %v3324, %v3323
        %v3352 = vpack.c.b16 %v3326, %v3325
        %v3353 = vpack.c.b16 %v3328, %v3327
        %v3354 = vpack.c.b16 %v3330, %v3329
        %v3355 = vpack.c.b16 %v3332, %v3331
        %v3356 = vpack.c.b16 %v3334, %v3333
        %v3357 = vpack.c.b16 %v3336, %v3335
        %v3358 = vpack.c.b16 %v3338, %v3337
        %v3359 = vpack.c.b16 %v3340, %v3339
        %v3360 = vpack.c.b16 %v3342, %v3341
        %v3361 = vpack.c.b16 %v3344, %v3343
        %v3362 = vpack.c.b16 %v3346, %v3345
        %3379 = vmatprep.subr.bf16.mxu0 0
        %3380 = vmatpush1.bf16.msra.mxu0 %v3347
        %3381 = vmatprep.subr.bf16.mxu0 0
        %3382 = vmatpush1.bf16.msra.mxu0 %v3348
        %3383 = vmatprep.subr.bf16.mxu0 0
        %3384 = vmatpush1.bf16.msra.mxu0 %v3349
        %3385 = vmatprep.subr.bf16.mxu0 0
        %3386 = vmatpush1.bf16.msra.mxu0 %v3350
        %3387 = vmatprep.subr.bf16.mxu0 0
        %3388 = vmatpush1.bf16.msra.mxu0 %v3351
        %3389 = vmatprep.subr.bf16.mxu0 0
        %3390 = vmatpush1.bf16.msra.mxu0 %v3352
        %3391 = vmatprep.subr.bf16.mxu0 0
        %3392 = vmatpush1.bf16.msra.mxu0 %v3353
        %3393 = vmatprep.subr.bf16.mxu0 0
        %3394 = vmatpush1.bf16.msra.mxu0 %v3354
        %3395 = vmatprep.subr.bf16.mxu0 0
        %3396 = vmatpush1.bf16.msra.mxu0 %v3355
        %3397 = vmatprep.subr.bf16.mxu0 0
        %3398 = vmatpush1.bf16.msra.mxu0 %v3356
        %3399 = vmatprep.subr.bf16.mxu0 0
        %3400 = vmatpush1.bf16.msra.mxu0 %v3357
        %3401 = vmatprep.subr.bf16.mxu0 0
        %3402 = vmatpush1.bf16.msra.mxu0 %v3358
        %3403 = vmatprep.subr.bf16.mxu0 0
        %3404 = vmatpush1.bf16.msra.mxu0 %v3359
        %3405 = vmatprep.subr.bf16.mxu0 0
        %3406 = vmatpush1.bf16.msra.mxu0 %v3360
        %3407 = vmatprep.subr.bf16.mxu0 0
        %3408 = vmatpush1.bf16.msra.mxu0 %v3361
        %3409 = vmatprep.subr.bf16.mxu0 0
        %3410 = vmatpush1.bf16.msra.mxu0 %v3362
        %3411 = vmatprep.mubr.bf16.mxu0 %v3241
        %3412 = vmatmul.mubr.bf16.gmra.mrb[0].mxu0 %v3240
        %v3413 = vpop.f32.mrb[0].mxu0
        %v3414 = vadd.f32 %v3281, %v3413
        %v3415 = vpop.f32.mrb[0].mxu0
        %v3416 = vpop.f32.mrb[0].mxu0
        %v3417 = vpop.f32.mrb[0].mxu0
        %3418 = vdwg.mxu0
        %v3419 = vadd.f32 %v3069, %v3414
        %s3420 = scalar_lea.vmem %s20, 1
        %v3421 = vld [vmem:[%s3420] sm:$0x1]
        %s3422 = scalar_lea.vmem %s21, 1
        %v3423 = vld [vmem:[%s3422] sm:$0x1]
        %3424 = vadd.xlane.f32.xlu0 %v3419
        %v3425 = vpop.xlane.xlu0 %3424
        %v3426 = vmul.f32 %v3425, %v781
        %v3427 = vmul.f32 %v3419, %v3419
        %3428 = vadd.xlane.f32.xlu0 %v3427
        %v3429 = vpop.xlane.xlu0 %3428
        %v3430 = vmul.f32 %v3429, %v781
        %v3431 = vmul.f32 %v3426, %v3426
        %v3432 = vsub.f32 %v3430, %v3431
        %v3433 = vsub.f32 %v3419, %v3426
        %v3434 = vadd.f32 %v3432, 1e-12
        %v3435 = vrsqrt.pop %v3434
        %v3436 = vmul.f32 %v3433, %v3435
        %v3438 = vlaneseq
        %v3439 = vshrl.u32 %v3438, 7
        %v3440 = vsub.s32 0, %v3439
        %v3441 = vrot.slane %v3421, %v3440
        %v3443 = vmul.f32 %v3436, %v3441
        %v3445 = vlaneseq
        %v3446 = vshrl.u32 %v3445, 7
        %v3447 = vsub.s32 0, %v3446
        %v3448 = vrot.slane %v3423, %v3447
        %v3450 = vadd.f32 %v3443, %v3448
        %3451 = vst [vmem:[%s757] sm:$0x1] %v3450
        %s3452 = sand.u32 %s519, 1
        %s3453 = scalar_lea.sflag [#allocation4], %s3452
        %s3454 = sand.u32 %s519, 1
        %s3455 = scalar_lea.vmem [#allocation11], %s3454
        // Predicated region
        $region129: #{bioclinical_bert_ft_forward.1} parent=107 // pred_check
          %p3456 = pneg %p529
        $region130: #{bioclinical_bert_ft_forward.1} parent=107 // pred_check_branch
          %3458 = sbr.rel (%p3456) target = $region132
        $region131: #{bioclinical_bert_ft_forward.1} parent=107 // pred_region
          %s3460 = ssub.s32 16, 16
          %3461 = vsyncadd %s3453, %s3460
          %s3462 = smul.addr %s39, 16
          %s3463 = scalar_lea.hbm %s22, %s3462
          %s3465 = sshll.u32 %s3455, 4
          %s3466 = int_to_ptr.vmem [resolvable:$true] %s3465
          %3468 = dma.vmem_to_hbm [thread:$0]  %s3466, 16, %s3463, %s3453
        $region132: #{bioclinical_bert_ft_forward.1} parent=107 // pred_fallthru
          _
      $region108: #{bioclinical_bert_ft_forward.1} parent=5 // pred_fallthru
        _
      %p3469 = scmp.le.s32.totalorder 2, %s34
      // Predicated region
      $region133: #{bioclinical_bert_ft_forward.1} parent=5 // pred_check
        %p3470 = pneg %p3469
      $region134: #{bioclinical_bert_ft_forward.1} parent=5 // pred_check_branch
        %3472 = sbr.rel (%p3470) target = $region136
      $region135: #{bioclinical_bert_ft_forward.1} parent=5 // pred_region
        %s3473 = ssub.s32 %s34, 2
        // Predicated region
        $region137: #{bioclinical_bert_ft_forward.1} parent=135 // pred_check
          %p3474 = pneg %p535
        $region138: #{bioclinical_bert_ft_forward.1} parent=135 // pred_check_branch
          %3476 = sbr.rel (%p3474) target = $region140
        $region139: #{bioclinical_bert_ft_forward.1} parent=135 // pred_region
          %s3477 = sand.u32 %s520, 1
          %s3478 = scalar_lea.sflag [#allocation4], %s3477
          %s3479 = sand.u32 %s520, 1
          %s3480 = scalar_lea.vmem [#allocation11], %s3479
          %3481 = dma.done %s3478, 16
        $region140: #{bioclinical_bert_ft_forward.1} parent=135 // pred_fallthru
          _
      $region136: #{bioclinical_bert_ft_forward.1} parent=5 // pred_fallthru
        _
    $region6: #{bioclinical_bert_ft_forward.1} parent=1 // loop_footer
      %s38 = sadd.s32 1, %s34
    $region7: #{bioclinical_bert_ft_forward.1} parent=1 // loop_footer_branch
      %33 = sbr.rel target = $region3
    $region8: #{bioclinical_bert_ft_forward.1} parent=1 // loop_exit
      _
    %3482 = vsyncpa [#allocation3], 1
    %s3483 = scalar_lea.sflag [#allocation3], 1
    %3484 = vsyncpa %s3483, 1
    %3485 = vsyncpa [#allocation6], 1
    %3486 = vsyncpa [#allocation9], 1
    %3487 = vsyncpa [#allocation4], 1
    %s3488 = scalar_lea.sflag [#allocation4], 1
    %3489 = vsyncpa %s3488, 1

</llo_original>
